<compile_context>
chip_gen: v7x
topology: tpu7x:2x2x1
jax: 0.10.0
libtpu: 0.0.40
codegen_flags: <defaults>
</compile_context>

<pallas_src>
import functools

import jax
import jax.numpy as jnp
from jax.experimental import pallas as pl
from jax.experimental.pallas import tpu as pltpu


def _round_up(n, m):
    return ((n + m - 1) // m) * m


def _device_kind():
    try:
        return jax.devices()[0].device_kind.lower()
    except Exception:
        return ""


def _default_gate_dtype(kind):
    # v5e and older have no bf16 VPU/EUP -> keep gate math in f32 there.
    if any(tag in kind for tag in ("v2", "v3", "v4", "v5")):
        return jnp.float32
    return jnp.bfloat16  # v6e / v7x: bf16 EUP ~2x transcendental throughput


def _default_row_tile(kind):
    # v7x has 64 MiB VMEM per TensorCore (half of v5e/v6e) -> smaller row tiles.
    if "v7" in kind or "tpu7" in kind:
        return 256
    return 512


def _cell_update(gates_f32, c, *, H, gate_dtype):
    """One LSTMCell state update from f32 pre-activations (PyTorch i,f,g,o order).

    Gate nonlinearities run in `gate_dtype` (bf16 on v6e/v7x, f32 on v5e); the cell
    state c, the f*c + i*g update and tanh(c) stay in f32. Returns (h_f32, c_f32).
    """
    g = gates_f32.astype(gate_dtype)
    i_g = jax.nn.sigmoid(g[:, 0 * H:1 * H])
    f_g = jax.nn.sigmoid(g[:, 1 * H:2 * H])
    g_g = jnp.tanh(g[:, 2 * H:3 * H])
    o_g = jax.nn.sigmoid(g[:, 3 * H:4 * H])
    c_new = f_g.astype(jnp.float32) * c + (i_g * g_g).astype(jnp.float32)
    h_new = o_g.astype(jnp.float32) * jnp.tanh(c_new)
    return h_new, c_new


def _encoder_kernel_resident(x_ref, wih_ref, whh_ref, b_ref, o_ref,
                             *, H, L, gate_dtype, mm_dtype):
    """One row tile through the L-layer cell stack; all weights VMEM-resident.

    x_ref   : (TM, I)        f32    rows = flattened (t, b) pairs
    wih_ref : (I, L*4H)      bf16   all layers' input weights fused along N
    whh_ref : (L, H, 4H)     bf16   recurrent weights
    b_ref   : (1, L*4H)      f32    fused b_ih + b_hh
    o_ref   : (TM, H)        f32    relu(h of last layer)
    """
    H4 = 4 * H
    x = x_ref[...].astype(mm_dtype)               # f32 -> bf16 on the VPU, in-kernel
    TM = x.shape[0]

    # One MXU pass for ALL layers' input-path pre-activations, fused bias folded in.
    # Stored in bf16: largest live intermediate (TM, L*4H) at half the VMEM cost.
    xg = (jnp.dot(x, wih_ref[...], preferred_element_type=jnp.float32)
          + b_ref[...]).astype(mm_dtype)

    h_mm = None                                   # bf16 recurrent-matmul operand
    c = jnp.zeros((TM, H), jnp.float32)
    h_f32 = None

    for l in range(L):                            # static unroll (L is small)
        gates = xg[:, l * H4:(l + 1) * H4].astype(jnp.float32)
        if l > 0:                                 # layer 0 sees h == 0: skip zero matmul
            gates = gates + jnp.dot(h_mm, whh_ref[l],
                                    preferred_element_type=jnp.float32)
        h_f32, c = _cell_update(gates, c, H=H, gate_dtype=gate_dtype)
        if l + 1 < L:
            h_mm = h_f32.astype(mm_dtype)         # keep h bf16 between layers

    o_ref[...] = jnp.maximum(h_f32, 0.0).astype(o_ref.dtype)   # ReLU, lane-dense store


def _encoder_kernel_stream(x_ref, wih_ref, whh_ref, b_ref, o_ref, h_sc, c_sc,
                           *, H, L, gate_dtype, mm_dtype):
    """Streaming variant: grid = (row_tiles, L); per-layer weight blocks are streamed
    over the 'arbitrary' L axis while h/c are carried in VMEM scratch.

    x_ref   : (TM, I)      f32   (resident across l)
    wih_ref : (I, 4H)      bf16  layer-l input weights
    whh_ref : (1, H, 4H)   bf16  layer-l recurrent weights
    b_ref   : (1, 4H)      f32   layer-l fused bias
    o_ref   : (TM, H)      f32   written at l == L-1
    h_sc    : (TM, H)      bf16  scratch (matmul operand dtype)
    c_sc    : (TM, H)      f32   scratch
    """
    l = pl.program_id(1)

    @pl.when(l == 0)
    def _():
        h_sc[...] = jnp.zeros_like(h_sc)
        c_sc[...] = jnp.zeros_like(c_sc)

    x = x_ref[...].astype(mm_dtype)
    gates = (jnp.dot(x, wih_ref[...], preferred_element_type=jnp.float32)
             + jnp.dot(h_sc[...], whh_ref[0], preferred_element_type=jnp.float32)
             + b_ref[...])
    h_f32, c_new = _cell_update(gates, c_sc[...], H=H, gate_dtype=gate_dtype)
    c_sc[...] = c_new
    h_sc[...] = h_f32.astype(h_sc.dtype)

    @pl.when(l == L - 1)
    def _():
        o_ref[...] = jnp.maximum(h_f32, 0.0).astype(o_ref.dtype)


def encoder_rnn_forward(x, w_ih, w_hh, b_ih, b_hh, *,
                        matmul_dtype=jnp.bfloat16, gate_dtype=None,
                        row_tile=None, force_stream=None):
    """EncoderRNN forward.

    x    : (T, B, I)  float32
    w_ih : (L, 4H, I) PyTorch LSTMCell layout, gate order i, f, g, o
    w_hh : (L, 4H, H)
    b_ih : (L, 4H)
    b_hh : (L, 4H)
    returns (T, B, H) float32  ==  relu(h of last LSTMCell), per time step
    """
    T, B, I = x.shape
    L, H4, _ = w_ih.shape
    H = H4 // 4

    kind = _device_kind()
    if gate_dtype is None:
        gate_dtype = _default_gate_dtype(kind)
    if row_tile is None:
        row_tile = _default_row_tile(kind)

    # --- pad H up to a lane-aligned multiple of 128 (zero-pad every i/f/g/o gate
    #     block). Padded hidden units get zero pre-activations -> c = 0, h = 0 forever,
    #     and are sliced off at the end, so results are unchanged. ---
    Hk = _round_up(H, 128)
    if Hk != H:
        ph = Hk - H
        w_ih = jnp.pad(w_ih.reshape(L, 4, H, I),
                       ((0, 0), (0, 0), (0, ph), (0, 0))).reshape(L, 4 * Hk, I)
        w_hh = jnp.pad(w_hh.reshape(L, 4, H, H),
                       ((0, 0), (0, 0), (0, ph), (0, ph))).reshape(L, 4 * Hk, Hk)
        b_ih = jnp.pad(b_ih.reshape(L, 4, H),
                       ((0, 0), (0, 0), (0, ph))).reshape(L, 4 * Hk)
        b_hh = jnp.pad(b_hh.reshape(L, 4, H),
                       ((0, 0), (0, 0), (0, ph))).reshape(L, 4 * Hk)
    H4k = 4 * Hk
    # TODO(synk): optionally zero-pad I up to 128 as well if profiling shows masked
    # vector loads ahead of the fused input matmul (minor; MXU has plenty of slack).

    # --- one-time parameter prep (glue, outside the kernel) ---
    wih_all = jnp.transpose(w_ih, (2, 0, 1)).reshape(I, L * H4k).astype(matmul_dtype)
    whh = jnp.transpose(w_hh, (0, 2, 1)).astype(matmul_dtype)            # (L, Hk, 4Hk)
    b_all = (b_ih + b_hh).reshape(1, L * H4k).astype(jnp.float32)        # fused bias

    # --- every (time step, batch) pair is an independent row ---
    M = T * B
    x2d = x.reshape(M, I)                       # stays f32; cast to bf16 inside kernel
    grid_rows = pl.cdiv(M, row_tile)
    if grid_rows < 2 and M >= 16:
        grid_rows = 2                           # give both v7x TensorCores a tile
    TM = _round_up(pl.cdiv(M, grid_rows), 8)    # balanced tiles, 8-sublane aligned
    M_pad = grid_rows * TM
    if M_pad != M:
        x2d = jnp.pad(x2d, ((0, M_pad - M), (0, 0)))

    # --- VMEM budgeting: resident weights vs streamed W_hh / W_ih per layer ---
    bpe = jnp.dtype(matmul_dtype).itemsize
    param_bytes = (I * L * H4k + L * Hk * H4k) * bpe + L * H4k * 4
    io_bytes = 2 * TM * I * 4 + 2 * TM * Hk * 4               # double-buffered x / out
    gate_tmp = 3 * TM * H4k * 4                               # rough live-temporary bound
    resident_est = param_bytes + TM * L * H4k * bpe + io_bytes + gate_tmp
    stream_est = (2 * (I * H4k + Hk * H4k) * bpe + 2 * H4k * 4    # per-layer blocks, dbuf
                  + io_bytes + TM * Hk * (bpe + 4) + gate_tmp)    # + h/c scratch

    if force_stream is None:
        use_stream = resident_est > (24 << 20)   # conservative for v7x's 64 MiB VMEM
    else:
        use_stream = bool(force_stream)
    est = stream_est if use_stream else resident_est
    vmem_limit = int(min(max(est * 5 // 4, 32 << 20), 48 << 20))

    cost = pl.CostEstimate(
        flops=2 * M_pad * L * (I + Hk) * H4k,
        transcendentals=5 * M_pad * Hk * L,
        bytes_accessed=M_pad * I * 4 + M_pad * Hk * 4 + param_bytes,
    )
    out_shape = jax.ShapeDtypeStruct((M_pad, Hk), jnp.float32)

    if use_stream:
        out2d = pl.pallas_call(
            functools.partial(_encoder_kernel_stream, H=Hk, L=L,
                              gate_dtype=gate_dtype, mm_dtype=matmul_dtype),
            out_shape=out_shape,
            grid=(grid_rows, L),
            in_specs=[
                pl.BlockSpec((TM, I), lambda r, l: (r, 0)),          # row tile (resident over l)
                pl.BlockSpec((I, H4k), lambda r, l: (0, l)),         # layer-l input weights
                pl.BlockSpec((1, Hk, H4k), lambda r, l: (l, 0, 0)),  # layer-l recurrent weights
                pl.BlockSpec((1, H4k), lambda r, l: (0, l)),         # layer-l fused bias
            ],
            out_specs=pl.BlockSpec((TM, Hk), lambda r, l: (r, 0)),   # resident over l
            scratch_shapes=[
                pltpu.VMEM((TM, Hk), matmul_dtype),                  # h (matmul-operand dtype)
                pltpu.VMEM((TM, Hk), jnp.float32),                   # c
            ],
            compiler_params=pltpu.CompilerParams(
                dimension_semantics=("parallel", "arbitrary"),
                vmem_limit_bytes=vmem_limit,
            ),
            cost_estimate=cost,
        )(x2d, wih_all, whh, b_all)
    else:
        def _resident_call(single_buffer_params):
            # Constant-index parameter inputs: single-buffer them (halves weight VMEM).
            pkw = dict(pipeline_mode=pl.Buffered(1)) if single_buffer_params else {}
            in_specs = [
                pl.BlockSpec((TM, I), lambda r: (r, 0)),                    # row tile of inputs
                pl.BlockSpec((I, L * H4k), lambda r: (0, 0), **pkw),        # fused W_ih (resident)
                pl.BlockSpec((L, Hk, H4k), lambda r: (0, 0, 0), **pkw),     # W_hh (resident)
                pl.BlockSpec((1, L * H4k), lambda r: (0, 0), **pkw),        # fused bias
            ]
            return pl.pallas_call(
                functools.partial(_encoder_kernel_resident, H=Hk, L=L,
                                  gate_dtype=gate_dtype, mm_dtype=matmul_dtype),
                out_shape=out_shape,
                grid=(grid_rows,),
                in_specs=in_specs,
                out_specs=pl.BlockSpec((TM, Hk), lambda r: (r, 0)),
                compiler_params=pltpu.CompilerParams(
                    dimension_semantics=("parallel",),   # row tiles shard across v7x's 2 TCs
                    vmem_limit_bytes=vmem_limit,
                ),
                cost_estimate=cost,
            )(x2d, wih_all, whh, b_all)

        try:
            out2d = _resident_call(True)
        except Exception:
            # Fallback for runtimes that reject single-buffered (Buffered(1)) inputs.
            out2d = _resident_call(False)

    return out2d[:M, :H].reshape(T, B, H)


def _reference(x, w_ih, w_hh, b_ih, b_hh, matmul_dtype):
    """Pure-JAX replica of the PyTorch forward (bf16 matmul operands, f32 gates)."""
    T, B, _ = x.shape
    L, H4, _ = w_ih.shape
    H = H4 // 4
    outs = []
    for t in range(T):
        h = jnp.zeros((B, H), jnp.float32)
        c = jnp.zeros((B, H), jnp.float32)
        for l in range(L):
            g = (jnp.dot(x[t].astype(matmul_dtype), w_ih[l].T.astype(matmul_dtype),
                         preferred_element_type=jnp.float32)
                 + jnp.dot(h.astype(matmul_dtype), w_hh[l].T.astype(matmul_dtype),
                           preferred_element_type=jnp.float32)
                 + b_ih[l] + b_hh[l])
            i_g = jax.nn.sigmoid(g[:, :H])
            f_g = jax.nn.sigmoid(g[:, H:2 * H])
            g_g = jnp.tanh(g[:, 2 * H:3 * H])
            o_g = jax.nn.sigmoid(g[:, 3 * H:])
            c = f_g * c + i_g * g_g
            h = o_g * jnp.tanh(c)
        outs.append(h)
    return jnp.maximum(jnp.stack(outs), 0.0)


if __name__ == "__main__":
    # Small shapes consistent with the module: seq=8, batch=1 (initHidden hardcodes
    # batch 1), input_size=64, hidden_size=128 (lane-aligned), num_layers=4.
    T, B, I, H, L = 8, 1, 64, 128, 4

    key = jax.random.PRNGKey(0)
    kx, k1, k2, k3, k4 = jax.random.split(key, 5)
    bound = 1.0 / (H ** 0.5)          # PyTorch LSTMCell default init range

    x = jax.random.normal(kx, (T, B, I), jnp.float32)
    w_ih = jax.random.uniform(k1, (L, 4 * H, I), jnp.float32, -bound, bound)
    w_hh = jax.random.uniform(k2, (L, 4 * H, H), jnp.float32, -bound, bound)
    b_ih = jax.random.uniform(k3, (L, 4 * H), jnp.float32, -bound, bound)
    b_hh = jax.random.uniform(k4, (L, 4 * H), jnp.float32, -bound, bound)

    ref = _reference(x, w_ih, w_hh, b_ih, b_hh, jnp.bfloat16)
    # Reference keeps gate math in f32; allow extra slack when the kernel takes the
    # bf16 EUP path (v6e / v7x).
    gd = _default_gate_dtype(_device_kind())
    tol = 1e-2 if gd == jnp.float32 else 4e-2

    # Default path (weights VMEM-resident at these shapes).
    out = jax.block_until_ready(encoder_rnn_forward(x, w_ih, w_hh, b_ih, b_hh))
    assert out.shape == (T, B, H)
    err = float(jnp.max(jnp.abs(out - ref)))
    assert err < tol, f"resident path mismatch vs reference: max abs err {err}"

    # Streaming-W_hh fallback path (what large H / v7x would select automatically).
    out_s = jax.block_until_ready(
        encoder_rnn_forward(x, w_ih, w_hh, b_ih, b_hh, force_stream=True))
    err_s = float(jnp.max(jnp.abs(out_s - ref)))
    assert err_s < tol, f"streaming path mismatch vs reference: max abs err {err_s}"

    print("KERNEL_OK")
</pallas_src>

<mosaic_0001>
module attributes {stable_mosaic.version = 11 : i64} {
  func.func @_encoder_kernel_resident(%arg0: i32, %arg1: memref<8x64xf32, #tpu.memory_space<vmem>>, %arg2: memref<64x2048xbf16, #tpu.memory_space<vmem>>, %arg3: memref<4x128x512xbf16, #tpu.memory_space<vmem>>, %arg4: memref<1x2048xf32, #tpu.memory_space<vmem>>, %arg5: memref<8x128xf32, #tpu.memory_space<vmem>>) attributes {dimension_semantics = [#tpu.dimension_semantics<parallel>], iteration_bounds = array<i64: 1>, scalar_prefetch = 0 : i64, scratch_operands = 0 : i64, tpu.core_type = #tpu.core_type<tc>, window_params = [{transform_indices = @transform_0, window_bounds = array<i64: 8, 64>}, {pipeline_mode = #tpu.pipeline_mode<synchronous>, transform_indices = @transform_1, window_bounds = array<i64: 64, 2048>}, {pipeline_mode = #tpu.pipeline_mode<synchronous>, transform_indices = @transform_2, window_bounds = array<i64: 4, 128, 512>}, {pipeline_mode = #tpu.pipeline_mode<synchronous>, transform_indices = @transform_3, window_bounds = array<i64: 1, 2048>}, {transform_indices = @transform_4, window_bounds = array<i64: 8, 128>}]} {
    %c0 = arith.constant 0 : index
    %c0_0 = arith.constant 0 : index
    %0 = vector.load %arg1[%c0, %c0_0] : memref<8x64xf32, #tpu.memory_space<vmem>>, vector<8x64xf32>
    %1 = arith.truncf %0 : vector<8x64xf32> to vector<8x64xbf16>
    %c0_1 = arith.constant 0 : index
    %c0_2 = arith.constant 0 : index
    %2 = vector.load %arg2[%c0_1, %c0_2] : memref<64x2048xbf16, #tpu.memory_space<vmem>>, vector<64x2048xbf16>
    %cst = arith.constant dense<0.000000e+00> : vector<8x2048xf32>
    %3 = tpu.matmul %1, %2, %cst {dimension_numbers = #tpu.dot_dimension_numbers<[1], [0], [0], [1], [0, 0, 1, 1], [], []>} : vector<8x64xbf16>, vector<64x2048xbf16>, vector<8x2048xf32> -> vector<8x2048xf32>
    %c0_3 = arith.constant 0 : index
    %c0_4 = arith.constant 0 : index
    %4 = vector.load %arg4[%c0_3, %c0_4] : memref<1x2048xf32, #tpu.memory_space<vmem>>, vector<1x2048xf32>
    %5 = vector.broadcast %4 : vector<1x2048xf32> to vector<8x2048xf32>
    %6 = arith.addf %3, %5 : vector<8x2048xf32>
    %7 = arith.truncf %6 : vector<8x2048xf32> to vector<8x2048xbf16>
    %cst_5 = arith.constant 0.000000e+00 : f32
    %8 = vector.broadcast %cst_5 : f32 to vector<8x128xf32>
    %9 = vector.extract_strided_slice %7 {offsets = [0, 0], sizes = [8, 512], strides = [1, 1]} : vector<8x2048xbf16> to vector<8x512xbf16>
    %10 = arith.extf %9 : vector<8x512xbf16> to vector<8x512xf32>
    %11 = arith.truncf %10 : vector<8x512xf32> to vector<8x512xbf16>
    %12 = vector.extract_strided_slice %11 {offsets = [0, 0], sizes = [8, 128], strides = [1, 1]} : vector<8x512xbf16> to vector<8x128xbf16>
    %13 = arith.negf %12 : vector<8x128xbf16>
    %14 = math.exp %13 : vector<8x128xbf16>
    %cst_6 = arith.constant 1.000000e+00 : bf16
    %15 = vector.broadcast %cst_6 : bf16 to vector<8x128xbf16>
    %16 = arith.addf %15, %14 : vector<8x128xbf16>
    %17 = arith.divf %15, %16 : vector<8x128xbf16>
    %18 = vector.extract_strided_slice %11 {offsets = [0, 128], sizes = [8, 128], strides = [1, 1]} : vector<8x512xbf16> to vector<8x128xbf16>
    %19 = arith.negf %18 : vector<8x128xbf16>
    %20 = math.exp %19 : vector<8x128xbf16>
    %cst_7 = arith.constant 1.000000e+00 : bf16
    %21 = vector.broadcast %cst_7 : bf16 to vector<8x128xbf16>
    %22 = arith.addf %21, %20 : vector<8x128xbf16>
    %23 = arith.divf %21, %22 : vector<8x128xbf16>
    %24 = vector.extract_strided_slice %11 {offsets = [0, 256], sizes = [8, 128], strides = [1, 1]} : vector<8x512xbf16> to vector<8x128xbf16>
    %25 = math.tanh %24 : vector<8x128xbf16>
    %26 = vector.extract_strided_slice %11 {offsets = [0, 384], sizes = [8, 128], strides = [1, 1]} : vector<8x512xbf16> to vector<8x128xbf16>
    %27 = arith.negf %26 : vector<8x128xbf16>
    %28 = math.exp %27 : vector<8x128xbf16>
    %cst_8 = arith.constant 1.000000e+00 : bf16
    %29 = vector.broadcast %cst_8 : bf16 to vector<8x128xbf16>
    %30 = arith.addf %29, %28 : vector<8x128xbf16>
    %31 = arith.divf %29, %30 : vector<8x128xbf16>
    %32 = arith.extf %23 : vector<8x128xbf16> to vector<8x128xf32>
    %33 = arith.mulf %32, %8 : vector<8x128xf32>
    %34 = arith.mulf %17, %25 : vector<8x128xbf16>
    %35 = arith.extf %34 : vector<8x128xbf16> to vector<8x128xf32>
    %36 = arith.addf %33, %35 : vector<8x128xf32>
    %37 = arith.extf %31 : vector<8x128xbf16> to vector<8x128xf32>
    %38 = math.tanh %36 : vector<8x128xf32>
    %39 = arith.mulf %37, %38 : vector<8x128xf32>
    %40 = arith.truncf %39 : vector<8x128xf32> to vector<8x128xbf16>
    %41 = vector.extract_strided_slice %7 {offsets = [0, 512], sizes = [8, 512], strides = [1, 1]} : vector<8x2048xbf16> to vector<8x512xbf16>
    %42 = arith.extf %41 : vector<8x512xbf16> to vector<8x512xf32>
    %c1 = arith.constant 1 : index
    %c0_9 = arith.constant 0 : index
    %c0_10 = arith.constant 0 : index
    %43 = vector.load %arg3[%c1, %c0_9, %c0_10] : memref<4x128x512xbf16, #tpu.memory_space<vmem>>, vector<1x128x512xbf16>
    %44 = vector.shape_cast %43 : vector<1x128x512xbf16> to vector<128x512xbf16>
    %cst_11 = arith.constant dense<0.000000e+00> : vector<8x512xf32>
    %45 = tpu.matmul %40, %44, %cst_11 {dimension_numbers = #tpu.dot_dimension_numbers<[1], [0], [0], [1], [0, 0, 1, 1], [], []>} : vector<8x128xbf16>, vector<128x512xbf16>, vector<8x512xf32> -> vector<8x512xf32>
    %46 = arith.addf %42, %45 : vector<8x512xf32>
    %47 = arith.truncf %46 : vector<8x512xf32> to vector<8x512xbf16>
    %48 = vector.extract_strided_slice %47 {offsets = [0, 0], sizes = [8, 128], strides = [1, 1]} : vector<8x512xbf16> to vector<8x128xbf16>
    %49 = arith.negf %48 : vector<8x128xbf16>
    %50 = math.exp %49 : vector<8x128xbf16>
    %cst_12 = arith.constant 1.000000e+00 : bf16
    %51 = vector.broadcast %cst_12 : bf16 to vector<8x128xbf16>
    %52 = arith.addf %51, %50 : vector<8x128xbf16>
    %53 = arith.divf %51, %52 : vector<8x128xbf16>
    %54 = vector.extract_strided_slice %47 {offsets = [0, 128], sizes = [8, 128], strides = [1, 1]} : vector<8x512xbf16> to vector<8x128xbf16>
    %55 = arith.negf %54 : vector<8x128xbf16>
    %56 = math.exp %55 : vector<8x128xbf16>
    %cst_13 = arith.constant 1.000000e+00 : bf16
    %57 = vector.broadcast %cst_13 : bf16 to vector<8x128xbf16>
    %58 = arith.addf %57, %56 : vector<8x128xbf16>
    %59 = arith.divf %57, %58 : vector<8x128xbf16>
    %60 = vector.extract_strided_slice %47 {offsets = [0, 256], sizes = [8, 128], strides = [1, 1]} : vector<8x512xbf16> to vector<8x128xbf16>
    %61 = math.tanh %60 : vector<8x128xbf16>
    %62 = vector.extract_strided_slice %47 {offsets = [0, 384], sizes = [8, 128], strides = [1, 1]} : vector<8x512xbf16> to vector<8x128xbf16>
    %63 = arith.negf %62 : vector<8x128xbf16>
    %64 = math.exp %63 : vector<8x128xbf16>
    %cst_14 = arith.constant 1.000000e+00 : bf16
    %65 = vector.broadcast %cst_14 : bf16 to vector<8x128xbf16>
    %66 = arith.addf %65, %64 : vector<8x128xbf16>
    %67 = arith.divf %65, %66 : vector<8x128xbf16>
    %68 = arith.extf %59 : vector<8x128xbf16> to vector<8x128xf32>
    %69 = arith.mulf %68, %36 : vector<8x128xf32>
    %70 = arith.mulf %53, %61 : vector<8x128xbf16>
    %71 = arith.extf %70 : vector<8x128xbf16> to vector<8x128xf32>
    %72 = arith.addf %69, %71 : vector<8x128xf32>
    %73 = arith.extf %67 : vector<8x128xbf16> to vector<8x128xf32>
    %74 = math.tanh %72 : vector<8x128xf32>
    %75 = arith.mulf %73, %74 : vector<8x128xf32>
    %76 = arith.truncf %75 : vector<8x128xf32> to vector<8x128xbf16>
    %77 = vector.extract_strided_slice %7 {offsets = [0, 1024], sizes = [8, 512], strides = [1, 1]} : vector<8x2048xbf16> to vector<8x512xbf16>
    %78 = arith.extf %77 : vector<8x512xbf16> to vector<8x512xf32>
    %c2 = arith.constant 2 : index
    %c0_15 = arith.constant 0 : index
    %c0_16 = arith.constant 0 : index
    %79 = vector.load %arg3[%c2, %c0_15, %c0_16] : memref<4x128x512xbf16, #tpu.memory_space<vmem>>, vector<1x128x512xbf16>
    %80 = vector.shape_cast %79 : vector<1x128x512xbf16> to vector<128x512xbf16>
    %cst_17 = arith.constant dense<0.000000e+00> : vector<8x512xf32>
    %81 = tpu.matmul %76, %80, %cst_17 {dimension_numbers = #tpu.dot_dimension_numbers<[1], [0], [0], [1], [0, 0, 1, 1], [], []>} : vector<8x128xbf16>, vector<128x512xbf16>, vector<8x512xf32> -> vector<8x512xf32>
    %82 = arith.addf %78, %81 : vector<8x512xf32>
    %83 = arith.truncf %82 : vector<8x512xf32> to vector<8x512xbf16>
    %84 = vector.extract_strided_slice %83 {offsets = [0, 0], sizes = [8, 128], strides = [1, 1]} : vector<8x512xbf16> to vector<8x128xbf16>
    %85 = arith.negf %84 : vector<8x128xbf16>
    %86 = math.exp %85 : vector<8x128xbf16>
    %cst_18 = arith.constant 1.000000e+00 : bf16
    %87 = vector.broadcast %cst_18 : bf16 to vector<8x128xbf16>
    %88 = arith.addf %87, %86 : vector<8x128xbf16>
    %89 = arith.divf %87, %88 : vector<8x128xbf16>
    %90 = vector.extract_strided_slice %83 {offsets = [0, 128], sizes = [8, 128], strides = [1, 1]} : vector<8x512xbf16> to vector<8x128xbf16>
    %91 = arith.negf %90 : vector<8x128xbf16>
    %92 = math.exp %91 : vector<8x128xbf16>
    %cst_19 = arith.constant 1.000000e+00 : bf16
    %93 = vector.broadcast %cst_19 : bf16 to vector<8x128xbf16>
    %94 = arith.addf %93, %92 : vector<8x128xbf16>
    %95 = arith.divf %93, %94 : vector<8x128xbf16>
    %96 = vector.extract_strided_slice %83 {offsets = [0, 256], sizes = [8, 128], strides = [1, 1]} : vector<8x512xbf16> to vector<8x128xbf16>
    %97 = math.tanh %96 : vector<8x128xbf16>
    %98 = vector.extract_strided_slice %83 {offsets = [0, 384], sizes = [8, 128], strides = [1, 1]} : vector<8x512xbf16> to vector<8x128xbf16>
    %99 = arith.negf %98 : vector<8x128xbf16>
    %100 = math.exp %99 : vector<8x128xbf16>
    %cst_20 = arith.constant 1.000000e+00 : bf16
    %101 = vector.broadcast %cst_20 : bf16 to vector<8x128xbf16>
    %102 = arith.addf %101, %100 : vector<8x128xbf16>
    %103 = arith.divf %101, %102 : vector<8x128xbf16>
    %104 = arith.extf %95 : vector<8x128xbf16> to vector<8x128xf32>
    %105 = arith.mulf %104, %72 : vector<8x128xf32>
    %106 = arith.mulf %89, %97 : vector<8x128xbf16>
    %107 = arith.extf %106 : vector<8x128xbf16> to vector<8x128xf32>
    %108 = arith.addf %105, %107 : vector<8x128xf32>
    %109 = arith.extf %103 : vector<8x128xbf16> to vector<8x128xf32>
    %110 = math.tanh %108 : vector<8x128xf32>
    %111 = arith.mulf %109, %110 : vector<8x128xf32>
    %112 = arith.truncf %111 : vector<8x128xf32> to vector<8x128xbf16>
    %113 = vector.extract_strided_slice %7 {offsets = [0, 1536], sizes = [8, 512], strides = [1, 1]} : vector<8x2048xbf16> to vector<8x512xbf16>
    %114 = arith.extf %113 : vector<8x512xbf16> to vector<8x512xf32>
    %c3 = arith.constant 3 : index
    %c0_21 = arith.constant 0 : index
    %c0_22 = arith.constant 0 : index
    %115 = vector.load %arg3[%c3, %c0_21, %c0_22] : memref<4x128x512xbf16, #tpu.memory_space<vmem>>, vector<1x128x512xbf16>
    %116 = vector.shape_cast %115 : vector<1x128x512xbf16> to vector<128x512xbf16>
    %cst_23 = arith.constant dense<0.000000e+00> : vector<8x512xf32>
    %117 = tpu.matmul %112, %116, %cst_23 {dimension_numbers = #tpu.dot_dimension_numbers<[1], [0], [0], [1], [0, 0, 1, 1], [], []>} : vector<8x128xbf16>, vector<128x512xbf16>, vector<8x512xf32> -> vector<8x512xf32>
    %118 = arith.addf %114, %117 : vector<8x512xf32>
    %119 = arith.truncf %118 : vector<8x512xf32> to vector<8x512xbf16>
    %120 = vector.extract_strided_slice %119 {offsets = [0, 0], sizes = [8, 128], strides = [1, 1]} : vector<8x512xbf16> to vector<8x128xbf16>
    %121 = arith.negf %120 : vector<8x128xbf16>
    %122 = math.exp %121 : vector<8x128xbf16>
    %cst_24 = arith.constant 1.000000e+00 : bf16
    %123 = vector.broadcast %cst_24 : bf16 to vector<8x128xbf16>
    %124 = arith.addf %123, %122 : vector<8x128xbf16>
    %125 = arith.divf %123, %124 : vector<8x128xbf16>
    %126 = vector.extract_strided_slice %119 {offsets = [0, 128], sizes = [8, 128], strides = [1, 1]} : vector<8x512xbf16> to vector<8x128xbf16>
    %127 = arith.negf %126 : vector<8x128xbf16>
    %128 = math.exp %127 : vector<8x128xbf16>
    %cst_25 = arith.constant 1.000000e+00 : bf16
    %129 = vector.broadcast %cst_25 : bf16 to vector<8x128xbf16>
    %130 = arith.addf %129, %128 : vector<8x128xbf16>
    %131 = arith.divf %129, %130 : vector<8x128xbf16>
    %132 = vector.extract_strided_slice %119 {offsets = [0, 256], sizes = [8, 128], strides = [1, 1]} : vector<8x512xbf16> to vector<8x128xbf16>
    %133 = math.tanh %132 : vector<8x128xbf16>
    %134 = vector.extract_strided_slice %119 {offsets = [0, 384], sizes = [8, 128], strides = [1, 1]} : vector<8x512xbf16> to vector<8x128xbf16>
    %135 = arith.negf %134 : vector<8x128xbf16>
    %136 = math.exp %135 : vector<8x128xbf16>
    %cst_26 = arith.constant 1.000000e+00 : bf16
    %137 = vector.broadcast %cst_26 : bf16 to vector<8x128xbf16>
    %138 = arith.addf %137, %136 : vector<8x128xbf16>
    %139 = arith.divf %137, %138 : vector<8x128xbf16>
    %140 = arith.extf %131 : vector<8x128xbf16> to vector<8x128xf32>
    %141 = arith.mulf %140, %108 : vector<8x128xf32>
    %142 = arith.mulf %125, %133 : vector<8x128xbf16>
    %143 = arith.extf %142 : vector<8x128xbf16> to vector<8x128xf32>
    %144 = arith.addf %141, %143 : vector<8x128xf32>
    %145 = arith.extf %139 : vector<8x128xbf16> to vector<8x128xf32>
    %146 = math.tanh %144 : vector<8x128xf32>
    %147 = arith.mulf %145, %146 : vector<8x128xf32>
    %cst_27 = arith.constant 0.000000e+00 : f32
    %148 = vector.broadcast %cst_27 : f32 to vector<8x128xf32>
    %149 = arith.maximumf %147, %148 : vector<8x128xf32>
    %c0_28 = arith.constant 0 : index
    %c0_29 = arith.constant 0 : index
    %150 = vector.load %arg5[%c0_28, %c0_29] : memref<8x128xf32, #tpu.memory_space<vmem>>, vector<8x128xf32>
    tpu.vector_store %arg5[%c0_28, %c0_29], %149 {strides = array<i32>} : memref<8x128xf32, #tpu.memory_space<vmem>>, vector<8x128xf32>,
    return
  }
  func.func @transform_0(%arg0: i32) -> (i32, i32) {
    %c0_i32 = arith.constant 0 : i32
    %c0_i32_0 = arith.constant 0 : i32
    return %arg0, %c0_i32 : i32, i32
  }
  func.func @transform_1(%arg0: i32) -> (i32, i32) {
    %c0_i32 = arith.constant 0 : i32
    %c0_i32_0 = arith.constant 0 : i32
    %c0_i32_1 = arith.constant 0 : i32
    return %c0_i32, %c0_i32_0 : i32, i32
  }
  func.func @transform_2(%arg0: i32) -> (i32, i32, i32) {
    %c0_i32 = arith.constant 0 : i32
    %c0_i32_0 = arith.constant 0 : i32
    %c0_i32_1 = arith.constant 0 : i32
    %c0_i32_2 = arith.constant 0 : i32
    return %c0_i32, %c0_i32_0, %c0_i32_1 : i32, i32, i32
  }
  func.func @transform_3(%arg0: i32) -> (i32, i32) {
    %c0_i32 = arith.constant 0 : i32
    %c0_i32_0 = arith.constant 0 : i32
    %c0_i32_1 = arith.constant 0 : i32
    return %c0_i32, %c0_i32_0 : i32, i32
  }
  func.func @transform_4(%arg0: i32) -> (i32, i32) {
    %c0_i32 = arith.constant 0 : i32
    %c0_i32_0 = arith.constant 0 : i32
    return %arg0, %c0_i32 : i32, i32
  }
}

module attributes {stable_mosaic.version = 11 : i64} {
  func.func @_encoder_kernel_resident(%arg0: i32, %arg1: memref<8x64xf32, #tpu.memory_space<vmem>>, %arg2: memref<64x2048xbf16, #tpu.memory_space<vmem>>, %arg3: memref<4x128x512xbf16, #tpu.memory_space<vmem>>, %arg4: memref<1x2048xf32, #tpu.memory_space<vmem>>, %arg5: memref<8x128xf32, #tpu.memory_space<vmem>>) attributes {dimension_semantics = [#tpu.dimension_semantics<parallel>], iteration_bounds = array<i64: 1>, scalar_prefetch = 0 : i64, scratch_operands = 0 : i64, tpu.core_type = #tpu.core_type<tc>, window_params = [{transform_indices = @transform_0, window_bounds = array<i64: 8, 64>}, {pipeline_mode = #tpu.pipeline_mode<synchronous>, transform_indices = @transform_1, window_bounds = array<i64: 64, 2048>}, {pipeline_mode = #tpu.pipeline_mode<synchronous>, transform_indices = @transform_2, window_bounds = array<i64: 4, 128, 512>}, {pipeline_mode = #tpu.pipeline_mode<synchronous>, transform_indices = @transform_3, window_bounds = array<i64: 1, 2048>}, {transform_indices = @transform_4, window_bounds = array<i64: 8, 128>}]} {
    %c0 = arith.constant 0 : index
    %c0_0 = arith.constant 0 : index
    %0 = vector.load %arg1[%c0, %c0_0] : memref<8x64xf32, #tpu.memory_space<vmem>>, vector<8x64xf32>
    %1 = arith.truncf %0 : vector<8x64xf32> to vector<8x64xbf16>
    %c0_1 = arith.constant 0 : index
    %c0_2 = arith.constant 0 : index
    %2 = vector.load %arg2[%c0_1, %c0_2] : memref<64x2048xbf16, #tpu.memory_space<vmem>>, vector<64x2048xbf16>
    %cst = arith.constant dense<0.000000e+00> : vector<8x2048xf32>
    %3 = tpu.matmul %1, %2, %cst {dimension_numbers = #tpu.dot_dimension_numbers<[1], [0], [0], [1], [0, 0, 1, 1], [], []>} : vector<8x64xbf16>, vector<64x2048xbf16>, vector<8x2048xf32> -> vector<8x2048xf32>
    %c0_3 = arith.constant 0 : index
    %c0_4 = arith.constant 0 : index
    %4 = vector.load %arg4[%c0_3, %c0_4] : memref<1x2048xf32, #tpu.memory_space<vmem>>, vector<1x2048xf32>
    %5 = vector.broadcast %4 : vector<1x2048xf32> to vector<8x2048xf32>
    %6 = arith.addf %3, %5 : vector<8x2048xf32>
    %7 = arith.truncf %6 : vector<8x2048xf32> to vector<8x2048xbf16>
    %cst_5 = arith.constant 0.000000e+00 : f32
    %8 = vector.broadcast %cst_5 : f32 to vector<8x128xf32>
    %9 = vector.extract_strided_slice %7 {offsets = [0, 0], sizes = [8, 512], strides = [1, 1]} : vector<8x2048xbf16> to vector<8x512xbf16>
    %10 = arith.extf %9 : vector<8x512xbf16> to vector<8x512xf32>
    %11 = arith.truncf %10 : vector<8x512xf32> to vector<8x512xbf16>
    %12 = vector.extract_strided_slice %11 {offsets = [0, 0], sizes = [8, 128], strides = [1, 1]} : vector<8x512xbf16> to vector<8x128xbf16>
    %13 = arith.negf %12 : vector<8x128xbf16>
    %14 = math.exp %13 : vector<8x128xbf16>
    %cst_6 = arith.constant 1.000000e+00 : bf16
    %15 = vector.broadcast %cst_6 : bf16 to vector<8x128xbf16>
    %16 = arith.addf %15, %14 : vector<8x128xbf16>
    %17 = arith.divf %15, %16 : vector<8x128xbf16>
    %18 = vector.extract_strided_slice %11 {offsets = [0, 128], sizes = [8, 128], strides = [1, 1]} : vector<8x512xbf16> to vector<8x128xbf16>
    %19 = arith.negf %18 : vector<8x128xbf16>
    %20 = math.exp %19 : vector<8x128xbf16>
    %cst_7 = arith.constant 1.000000e+00 : bf16
    %21 = vector.broadcast %cst_7 : bf16 to vector<8x128xbf16>
    %22 = arith.addf %21, %20 : vector<8x128xbf16>
    %23 = arith.divf %21, %22 : vector<8x128xbf16>
    %24 = vector.extract_strided_slice %11 {offsets = [0, 256], sizes = [8, 128], strides = [1, 1]} : vector<8x512xbf16> to vector<8x128xbf16>
    %25 = math.tanh %24 : vector<8x128xbf16>
    %26 = vector.extract_strided_slice %11 {offsets = [0, 384], sizes = [8, 128], strides = [1, 1]} : vector<8x512xbf16> to vector<8x128xbf16>
    %27 = arith.negf %26 : vector<8x128xbf16>
    %28 = math.exp %27 : vector<8x128xbf16>
    %cst_8 = arith.constant 1.000000e+00 : bf16
    %29 = vector.broadcast %cst_8 : bf16 to vector<8x128xbf16>
    %30 = arith.addf %29, %28 : vector<8x128xbf16>
    %31 = arith.divf %29, %30 : vector<8x128xbf16>
    %32 = arith.extf %23 : vector<8x128xbf16> to vector<8x128xf32>
    %33 = arith.mulf %32, %8 : vector<8x128xf32>
    %34 = arith.mulf %17, %25 : vector<8x128xbf16>
    %35 = arith.extf %34 : vector<8x128xbf16> to vector<8x128xf32>
    %36 = arith.addf %33, %35 : vector<8x128xf32>
    %37 = arith.extf %31 : vector<8x128xbf16> to vector<8x128xf32>
    %38 = math.tanh %36 : vector<8x128xf32>
    %39 = arith.mulf %37, %38 : vector<8x128xf32>
    %40 = arith.truncf %39 : vector<8x128xf32> to vector<8x128xbf16>
    %41 = vector.extract_strided_slice %7 {offsets = [0, 512], sizes = [8, 512], strides = [1, 1]} : vector<8x2048xbf16> to vector<8x512xbf16>
    %42 = arith.extf %41 : vector<8x512xbf16> to vector<8x512xf32>
    %c1 = arith.constant 1 : index
    %c0_9 = arith.constant 0 : index
    %c0_10 = arith.constant 0 : index
    %43 = vector.load %arg3[%c1, %c0_9, %c0_10] : memref<4x128x512xbf16, #tpu.memory_space<vmem>>, vector<1x128x512xbf16>
    %44 = vector.shape_cast %43 : vector<1x128x512xbf16> to vector<128x512xbf16>
    %cst_11 = arith.constant dense<0.000000e+00> : vector<8x512xf32>
    %45 = tpu.matmul %40, %44, %cst_11 {dimension_numbers = #tpu.dot_dimension_numbers<[1], [0], [0], [1], [0, 0, 1, 1], [], []>} : vector<8x128xbf16>, vector<128x512xbf16>, vector<8x512xf32> -> vector<8x512xf32>
    %46 = arith.addf %42, %45 : vector<8x512xf32>
    %47 = arith.truncf %46 : vector<8x512xf32> to vector<8x512xbf16>
    %48 = vector.extract_strided_slice %47 {offsets = [0, 0], sizes = [8, 128], strides = [1, 1]} : vector<8x512xbf16> to vector<8x128xbf16>
    %49 = arith.negf %48 : vector<8x128xbf16>
    %50 = math.exp %49 : vector<8x128xbf16>
    %cst_12 = arith.constant 1.000000e+00 : bf16
    %51 = vector.broadcast %cst_12 : bf16 to vector<8x128xbf16>
    %52 = arith.addf %51, %50 : vector<8x128xbf16>
    %53 = arith.divf %51, %52 : vector<8x128xbf16>
    %54 = vector.extract_strided_slice %47 {offsets = [0, 128], sizes = [8, 128], strides = [1, 1]} : vector<8x512xbf16> to vector<8x128xbf16>
    %55 = arith.negf %54 : vector<8x128xbf16>
    %56 = math.exp %55 : vector<8x128xbf16>
    %cst_13 = arith.constant 1.000000e+00 : bf16
    %57 = vector.broadcast %cst_13 : bf16 to vector<8x128xbf16>
    %58 = arith.addf %57, %56 : vector<8x128xbf16>
    %59 = arith.divf %57, %58 : vector<8x128xbf16>
    %60 = vector.extract_strided_slice %47 {offsets = [0, 256], sizes = [8, 128], strides = [1, 1]} : vector<8x512xbf16> to vector<8x128xbf16>
    %61 = math.tanh %60 : vector<8x128xbf16>
    %62 = vector.extract_strided_slice %47 {offsets = [0, 384], sizes = [8, 128], strides = [1, 1]} : vector<8x512xbf16> to vector<8x128xbf16>
    %63 = arith.negf %62 : vector<8x128xbf16>
    %64 = math.exp %63 : vector<8x128xbf16>
    %cst_14 = arith.constant 1.000000e+00 : bf16
    %65 = vector.broadcast %cst_14 : bf16 to vector<8x128xbf16>
    %66 = arith.addf %65, %64 : vector<8x128xbf16>
    %67 = arith.divf %65, %66 : vector<8x128xbf16>
    %68 = arith.extf %59 : vector<8x128xbf16> to vector<8x128xf32>
    %69 = arith.mulf %68, %36 : vector<8x128xf32>
    %70 = arith.mulf %53, %61 : vector<8x128xbf16>
    %71 = arith.extf %70 : vector<8x128xbf16> to vector<8x128xf32>
    %72 = arith.addf %69, %71 : vector<8x128xf32>
    %73 = arith.extf %67 : vector<8x128xbf16> to vector<8x128xf32>
    %74 = math.tanh %72 : vector<8x128xf32>
    %75 = arith.mulf %73, %74 : vector<8x128xf32>
    %76 = arith.truncf %75 : vector<8x128xf32> to vector<8x128xbf16>
    %77 = vector.extract_strided_slice %7 {offsets = [0, 1024], sizes = [8, 512], strides = [1, 1]} : vector<8x2048xbf16> to vector<8x512xbf16>
    %78 = arith.extf %77 : vector<8x512xbf16> to vector<8x512xf32>
    %c2 = arith.constant 2 : index
    %c0_15 = arith.constant 0 : index
    %c0_16 = arith.constant 0 : index
    %79 = vector.load %arg3[%c2, %c0_15, %c0_16] : memref<4x128x512xbf16, #tpu.memory_space<vmem>>, vector<1x128x512xbf16>
    %80 = vector.shape_cast %79 : vector<1x128x512xbf16> to vector<128x512xbf16>
    %cst_17 = arith.constant dense<0.000000e+00> : vector<8x512xf32>
    %81 = tpu.matmul %76, %80, %cst_17 {dimension_numbers = #tpu.dot_dimension_numbers<[1], [0], [0], [1], [0, 0, 1, 1], [], []>} : vector<8x128xbf16>, vector<128x512xbf16>, vector<8x512xf32> -> vector<8x512xf32>
    %82 = arith.addf %78, %81 : vector<8x512xf32>
    %83 = arith.truncf %82 : vector<8x512xf32> to vector<8x512xbf16>
    %84 = vector.extract_strided_slice %83 {offsets = [0, 0], sizes = [8, 128], strides = [1, 1]} : vector<8x512xbf16> to vector<8x128xbf16>
    %85 = arith.negf %84 : vector<8x128xbf16>
    %86 = math.exp %85 : vector<8x128xbf16>
    %cst_18 = arith.constant 1.000000e+00 : bf16
    %87 = vector.broadcast %cst_18 : bf16 to vector<8x128xbf16>
    %88 = arith.addf %87, %86 : vector<8x128xbf16>
    %89 = arith.divf %87, %88 : vector<8x128xbf16>
    %90 = vector.extract_strided_slice %83 {offsets = [0, 128], sizes = [8, 128], strides = [1, 1]} : vector<8x512xbf16> to vector<8x128xbf16>
    %91 = arith.negf %90 : vector<8x128xbf16>
    %92 = math.exp %91 : vector<8x128xbf16>
    %cst_19 = arith.constant 1.000000e+00 : bf16
    %93 = vector.broadcast %cst_19 : bf16 to vector<8x128xbf16>
    %94 = arith.addf %93, %92 : vector<8x128xbf16>
    %95 = arith.divf %93, %94 : vector<8x128xbf16>
    %96 = vector.extract_strided_slice %83 {offsets = [0, 256], sizes = [8, 128], strides = [1, 1]} : vector<8x512xbf16> to vector<8x128xbf16>
    %97 = math.tanh %96 : vector<8x128xbf16>
    %98 = vector.extract_strided_slice %83 {offsets = [0, 384], sizes = [8, 128], strides = [1, 1]} : vector<8x512xbf16> to vector<8x128xbf16>
    %99 = arith.negf %98 : vector<8x128xbf16>
    %100 = math.exp %99 : vector<8x128xbf16>
    %cst_20 = arith.constant 1.000000e+00 : bf16
    %101 = vector.broadcast %cst_20 : bf16 to vector<8x128xbf16>
    %102 = arith.addf %101, %100 : vector<8x128xbf16>
    %103 = arith.divf %101, %102 : vector<8x128xbf16>
    %104 = arith.extf %95 : vector<8x128xbf16> to vector<8x128xf32>
    %105 = arith.mulf %104, %72 : vector<8x128xf32>
    %106 = arith.mulf %89, %97 : vector<8x128xbf16>
    %107 = arith.extf %106 : vector<8x128xbf16> to vector<8x128xf32>
    %108 = arith.addf %105, %107 : vector<8x128xf32>
    %109 = arith.extf %103 : vector<8x128xbf16> to vector<8x128xf32>
    %110 = math.tanh %108 : vector<8x128xf32>
    %111 = arith.mulf %109, %110 : vector<8x128xf32>
    %112 = arith.truncf %111 : vector<8x128xf32> to vector<8x128xbf16>
    %113 = vector.extract_strided_slice %7 {offsets = [0, 1536], sizes = [8, 512], strides = [1, 1]} : vector<8x2048xbf16> to vector<8x512xbf16>
    %114 = arith.extf %113 : vector<8x512xbf16> to vector<8x512xf32>
    %c3 = arith.constant 3 : index
    %c0_21 = arith.constant 0 : index
    %c0_22 = arith.constant 0 : index
    %115 = vector.load %arg3[%c3, %c0_21, %c0_22] : memref<4x128x512xbf16, #tpu.memory_space<vmem>>, vector<1x128x512xbf16>
    %116 = vector.shape_cast %115 : vector<1x128x512xbf16> to vector<128x512xbf16>
    %cst_23 = arith.constant dense<0.000000e+00> : vector<8x512xf32>
    %117 = tpu.matmul %112, %116, %cst_23 {dimension_numbers = #tpu.dot_dimension_numbers<[1], [0], [0], [1], [0, 0, 1, 1], [], []>} : vector<8x128xbf16>, vector<128x512xbf16>, vector<8x512xf32> -> vector<8x512xf32>
    %118 = arith.addf %114, %117 : vector<8x512xf32>
    %119 = arith.truncf %118 : vector<8x512xf32> to vector<8x512xbf16>
    %120 = vector.extract_strided_slice %119 {offsets = [0, 0], sizes = [8, 128], strides = [1, 1]} : vector<8x512xbf16> to vector<8x128xbf16>
    %121 = arith.negf %120 : vector<8x128xbf16>
    %122 = math.exp %121 : vector<8x128xbf16>
    %cst_24 = arith.constant 1.000000e+00 : bf16
    %123 = vector.broadcast %cst_24 : bf16 to vector<8x128xbf16>
    %124 = arith.addf %123, %122 : vector<8x128xbf16>
    %125 = arith.divf %123, %124 : vector<8x128xbf16>
    %126 = vector.extract_strided_slice %119 {offsets = [0, 128], sizes = [8, 128], strides = [1, 1]} : vector<8x512xbf16> to vector<8x128xbf16>
    %127 = arith.negf %126 : vector<8x128xbf16>
    %128 = math.exp %127 : vector<8x128xbf16>
    %cst_25 = arith.constant 1.000000e+00 : bf16
    %129 = vector.broadcast %cst_25 : bf16 to vector<8x128xbf16>
    %130 = arith.addf %129, %128 : vector<8x128xbf16>
    %131 = arith.divf %129, %130 : vector<8x128xbf16>
    %132 = vector.extract_strided_slice %119 {offsets = [0, 256], sizes = [8, 128], strides = [1, 1]} : vector<8x512xbf16> to vector<8x128xbf16>
    %133 = math.tanh %132 : vector<8x128xbf16>
    %134 = vector.extract_strided_slice %119 {offsets = [0, 384], sizes = [8, 128], strides = [1, 1]} : vector<8x512xbf16> to vector<8x128xbf16>
    %135 = arith.negf %134 : vector<8x128xbf16>
    %136 = math.exp %135 : vector<8x128xbf16>
    %cst_26 = arith.constant 1.000000e+00 : bf16
    %137 = vector.broadcast %cst_26 : bf16 to vector<8x128xbf16>
    %138 = arith.addf %137, %136 : vector<8x128xbf16>
    %139 = arith.divf %137, %138 : vector<8x128xbf16>
    %140 = arith.extf %131 : vector<8x128xbf16> to vector<8x128xf32>
    %141 = arith.mulf %140, %108 : vector<8x128xf32>
    %142 = arith.mulf %125, %133 : vector<8x128xbf16>
    %143 = arith.extf %142 : vector<8x128xbf16> to vector<8x128xf32>
    %144 = arith.addf %141, %143 : vector<8x128xf32>
    %145 = arith.extf %139 : vector<8x128xbf16> to vector<8x128xf32>
    %146 = math.tanh %144 : vector<8x128xf32>
    %147 = arith.mulf %145, %146 : vector<8x128xf32>
    %cst_27 = arith.constant 0.000000e+00 : f32
    %148 = vector.broadcast %cst_27 : f32 to vector<8x128xf32>
    %149 = arith.maximumf %147, %148 : vector<8x128xf32>
    %c0_28 = arith.constant 0 : index
    %c0_29 = arith.constant 0 : index
    %150 = vector.load %arg5[%c0_28, %c0_29] : memref<8x128xf32, #tpu.memory_space<vmem>>, vector<8x128xf32>
    tpu.vector_store %arg5[%c0_28, %c0_29], %149 {strides = array<i32>} : memref<8x128xf32, #tpu.memory_space<vmem>>, vector<8x128xf32>,
    return
  }
  func.func @transform_0(%arg0: i32) -> (i32, i32) {
    %c0_i32 = arith.constant 0 : i32
    %c0_i32_0 = arith.constant 0 : i32
    return %arg0, %c0_i32 : i32, i32
  }
  func.func @transform_1(%arg0: i32) -> (i32, i32) {
    %c0_i32 = arith.constant 0 : i32
    %c0_i32_0 = arith.constant 0 : i32
    %c0_i32_1 = arith.constant 0 : i32
    return %c0_i32, %c0_i32_0 : i32, i32
  }
  func.func @transform_2(%arg0: i32) -> (i32, i32, i32) {
    %c0_i32 = arith.constant 0 : i32
    %c0_i32_0 = arith.constant 0 : i32
    %c0_i32_1 = arith.constant 0 : i32
    %c0_i32_2 = arith.constant 0 : i32
    return %c0_i32, %c0_i32_0, %c0_i32_1 : i32, i32, i32
  }
  func.func @transform_3(%arg0: i32) -> (i32, i32) {
    %c0_i32 = arith.constant 0 : i32
    %c0_i32_0 = arith.constant 0 : i32
    %c0_i32_1 = arith.constant 0 : i32
    return %c0_i32, %c0_i32_0 : i32, i32
  }
  func.func @transform_4(%arg0: i32) -> (i32, i32) {
    %c0_i32 = arith.constant 0 : i32
    %c0_i32_0 = arith.constant 0 : i32
    return %arg0, %c0_i32 : i32, i32
  }
}

</mosaic_0001>

<llo_original>
// kernel: tpu_custom_call.1
$region0: #{tpu_custom_call.1}
  #allocation0 [shape = 'u32[]', space=smem, size = 0x4, offset = 0x4, fixed_abs, tag = 'smem constant byte address 0x4 - core index']
  #allocation1 [shape = 'u32[144,128]{1,0:T(1,128)}', space=vmem, size = 0x12000, scoped, tag = 'internal scratch']
  %s0 = inlined_call_operand.hbm [shape: f32[8,64], index: 0, kind: input, shape index: {}]
  %s1 = inlined_call_operand.hbm [shape: bf16[64,2048], index: 1, kind: input, shape index: {}]
  %s2 = inlined_call_operand.hbm [shape: bf16[4,128,512], index: 2, kind: input, shape index: {}]
  %s3 = inlined_call_operand.hbm [shape: f32[1,2048], index: 3, kind: input, shape index: {}]
  %s4 = inlined_call_operand.hbm [shape: f32[8,128], index: 4, kind: output, shape index: {}]
  %s5 = sld [smem:[#allocation0]]
  $region42: #{tpu_custom_call.1} parent=0
    _
  %s7 = ssub.s32 1, %s5
  %s8 = scalar_select 0, %s7, %s5
  $region1: #{tpu_custom_call.1} parent=0
    #allocation2 [shape = 'u8[4096]{0}', space=vmem, size = 0x1000, scoped, tag = 'input window, operand 0, single buffered']
    #allocation3 [shape = 's32[1]{0}', space=sflag, size = 0x4, scoped, tag = 'scoped memory for tpu_custom_call.1']
    #allocation4 [shape = 's32[1]{0}', space=sflag, size = 0x4, scoped, tag = 'scoped memory for tpu_custom_call.1']
    #allocation5 [shape = 'u8[262144]{0}', space=vmem, size = 0x40000, scoped, tag = 'input window, operand 1, single buffered']
    #allocation6 [shape = 's32[1]{0}', space=sflag, size = 0x4, scoped, tag = 'scoped memory for tpu_custom_call.1']
    #allocation7 [shape = 'u8[524288]{0}', space=vmem, size = 0x80000, scoped, tag = 'input window, operand 2, single buffered']
    #allocation8 [shape = 'u8[8192]{0}', space=vmem, size = 0x2000, scoped, tag = 'input window, operand 3, single buffered']
    #allocation9 [shape = 's32[1]{0}', space=sflag, size = 0x4, scoped, tag = 'scoped memory for tpu_custom_call.1']
    #allocation10 [shape = 'u8[4096]{0}', space=vmem, size = 0x1000, scoped, tag = 'output window, operand 0, single buffered']
    %9 = vsyncpa [#allocation3], 0
    %10 = vsyncpa [#allocation6], 0
    %11 = vsyncpa [#allocation9], 0
    %12 = vsyncpa [#allocation4], 0
    // Predicated region
    $region2: #{tpu_custom_call.1} parent=1 // pred_check
      _
    $region3: #{tpu_custom_call.1} parent=1 // pred_check_branch
      %14 = sbr.rel (0) target = $region5
    $region4: #{tpu_custom_call.1} parent=1 // pred_region
      %s16 = ssub.s32 128, 128
      %17 = vsyncadd [#allocation3], %s16
      %s19 = sshll.u32 [#allocation2], 4
      %s20 = int_to_ptr.vmem [resolvable:$true] %s19
      %22 = dma.hbm_to_vmem [thread:$0]  %s0, 128, %s20, [#allocation3]
    $region5: #{tpu_custom_call.1} parent=1 // pred_fallthru
      _
    // Predicated region
    $region6: #{tpu_custom_call.1} parent=1 // pred_check
      _
    $region7: #{tpu_custom_call.1} parent=1 // pred_check_branch
      %24 = sbr.rel (0) target = $region9
    $region8: #{tpu_custom_call.1} parent=1 // pred_region
      %s26 = ssub.s32 8192, 8192
      %27 = vsyncadd [#allocation6], %s26
      %s28 = sshll.u32 [#allocation5], 4
      %s29 = int_to_ptr.vmem [resolvable:$true] %s28
      %34 = dma.hbm_to_vmem [thread:$0]  %s1, 8192, %s29, [#allocation6], 1024, 1024, 64
    $region9: #{tpu_custom_call.1} parent=1 // pred_fallthru
      _
    // Predicated region
    $region10: #{tpu_custom_call.1} parent=1 // pred_check
      _
    $region11: #{tpu_custom_call.1} parent=1 // pred_check_branch
      %36 = sbr.rel (0) target = $region13
    $region12: #{tpu_custom_call.1} parent=1 // pred_region
      %s38 = ssub.s32 16384, 16384
      %39 = vsyncadd [#allocation6], %s38
      %s40 = sshll.u32 [#allocation7], 4
      %s41 = int_to_ptr.vmem [resolvable:$true] %s40
      %46 = dma.hbm_to_vmem [thread:$0]  %s2, 16384, %s41, [#allocation6], 256, 256, 16
    $region13: #{tpu_custom_call.1} parent=1 // pred_fallthru
      _
    // Predicated region
    $region14: #{tpu_custom_call.1} parent=1 // pred_check
      _
    $region15: #{tpu_custom_call.1} parent=1 // pred_check_branch
      %48 = sbr.rel (0) target = $region17
    $region16: #{tpu_custom_call.1} parent=1 // pred_region
      %s50 = ssub.s32 256, 256
      %51 = vsyncadd [#allocation9], %s50
      %s53 = sshll.u32 [#allocation8], 4
      %s54 = int_to_ptr.vmem [resolvable:$true] %s53
      %56 = dma.hbm_to_vmem [thread:$0]  %s3, 256, %s54, [#allocation9]
    $region17: #{tpu_custom_call.1} parent=1 // pred_fallthru
      _
    // Predicated region
    $region18: #{tpu_custom_call.1} parent=1 // pred_check
      _
    $region19: #{tpu_custom_call.1} parent=1 // pred_check_branch
      %58 = sbr.rel (0) target = $region21
    $region20: #{tpu_custom_call.1} parent=1 // pred_region
      %59 = dma.done [#allocation3], 128
    $region21: #{tpu_custom_call.1} parent=1 // pred_fallthru
      _
    // Predicated region
    $region22: #{tpu_custom_call.1} parent=1 // pred_check
      _
    $region23: #{tpu_custom_call.1} parent=1 // pred_check_branch
      %61 = sbr.rel (0) target = $region25
    $region24: #{tpu_custom_call.1} parent=1 // pred_region
      %62 = dma.done [#allocation6], 8192
    $region25: #{tpu_custom_call.1} parent=1 // pred_fallthru
      _
    // Predicated region
    $region26: #{tpu_custom_call.1} parent=1 // pred_check
      _
    $region27: #{tpu_custom_call.1} parent=1 // pred_check_branch
      %64 = sbr.rel (0) target = $region29
    $region28: #{tpu_custom_call.1} parent=1 // pred_region
      %65 = dma.done [#allocation6], 16384
    $region29: #{tpu_custom_call.1} parent=1 // pred_fallthru
      _
    // Predicated region
    $region30: #{tpu_custom_call.1} parent=1 // pred_check
      _
    $region31: #{tpu_custom_call.1} parent=1 // pred_check_branch
      %67 = sbr.rel (0) target = $region33
    $region32: #{tpu_custom_call.1} parent=1 // pred_region
      %68 = dma.done [#allocation9], 256
    $region33: #{tpu_custom_call.1} parent=1 // pred_fallthru
      _
    %v71 = vld [vmem:[#allocation2] sm:$0xff]
    %v72 = vpack.c.bf16 %v71, %v71
    %v73 = vld [vmem:[#allocation5] sm:$0xff]
    %v74 = vld [vmem:[#allocation5 + $0x8] sm:$0xff]
    %v75 = vld [vmem:[#allocation5 + $0x10] sm:$0xff]
    %v76 = vld [vmem:[#allocation5 + $0x18] sm:$0xff]
    %v77 = vld [vmem:[#allocation5 + $0x20] sm:$0xff]
    %v78 = vld [vmem:[#allocation5 + $0x28] sm:$0xff]
    %v79 = vld [vmem:[#allocation5 + $0x30] sm:$0xff]
    %v80 = vld [vmem:[#allocation5 + $0x38] sm:$0xff]
    %v81 = vld [vmem:[#allocation5 + $0x40] sm:$0xff]
    %v82 = vld [vmem:[#allocation5 + $0x48] sm:$0xff]
    %v83 = vld [vmem:[#allocation5 + $0x50] sm:$0xff]
    %v84 = vld [vmem:[#allocation5 + $0x58] sm:$0xff]
    %v85 = vld [vmem:[#allocation5 + $0x60] sm:$0xff]
    %v86 = vld [vmem:[#allocation5 + $0x68] sm:$0xff]
    %v87 = vld [vmem:[#allocation5 + $0x70] sm:$0xff]
    %v88 = vld [vmem:[#allocation5 + $0x78] sm:$0xff]
    %v89 = vld [vmem:[#allocation5 + $0x80] sm:$0xff]
    %v90 = vld [vmem:[#allocation5 + $0x88] sm:$0xff]
    %v91 = vld [vmem:[#allocation5 + $0x90] sm:$0xff]
    %v92 = vld [vmem:[#allocation5 + $0x98] sm:$0xff]
    %v93 = vld [vmem:[#allocation5 + $0xa0] sm:$0xff]
    %v94 = vld [vmem:[#allocation5 + $0xa8] sm:$0xff]
    %v95 = vld [vmem:[#allocation5 + $0xb0] sm:$0xff]
    %v96 = vld [vmem:[#allocation5 + $0xb8] sm:$0xff]
    %v97 = vld [vmem:[#allocation5 + $0xc0] sm:$0xff]
    %v98 = vld [vmem:[#allocation5 + $0xc8] sm:$0xff]
    %v99 = vld [vmem:[#allocation5 + $0xd0] sm:$0xff]
    %v100 = vld [vmem:[#allocation5 + $0xd8] sm:$0xff]
    %v101 = vld [vmem:[#allocation5 + $0xe0] sm:$0xff]
    %v102 = vld [vmem:[#allocation5 + $0xe8] sm:$0xff]
    %v103 = vld [vmem:[#allocation5 + $0xf0] sm:$0xff]
    %v104 = vld [vmem:[#allocation5 + $0xf8] sm:$0xff]
    %v105 = vld [vmem:[#allocation5 + $0x100] sm:$0xff]
    %v106 = vld [vmem:[#allocation5 + $0x108] sm:$0xff]
    %v107 = vld [vmem:[#allocation5 + $0x110] sm:$0xff]
    %v108 = vld [vmem:[#allocation5 + $0x118] sm:$0xff]
    %v109 = vld [vmem:[#allocation5 + $0x120] sm:$0xff]
    %v110 = vld [vmem:[#allocation5 + $0x128] sm:$0xff]
    %v111 = vld [vmem:[#allocation5 + $0x130] sm:$0xff]
    %v112 = vld [vmem:[#allocation5 + $0x138] sm:$0xff]
    %v113 = vld [vmem:[#allocation5 + $0x140] sm:$0xff]
    %v114 = vld [vmem:[#allocation5 + $0x148] sm:$0xff]
    %v115 = vld [vmem:[#allocation5 + $0x150] sm:$0xff]
    %v116 = vld [vmem:[#allocation5 + $0x158] sm:$0xff]
    %v117 = vld [vmem:[#allocation5 + $0x160] sm:$0xff]
    %v118 = vld [vmem:[#allocation5 + $0x168] sm:$0xff]
    %v119 = vld [vmem:[#allocation5 + $0x170] sm:$0xff]
    %v120 = vld [vmem:[#allocation5 + $0x178] sm:$0xff]
    %v121 = vld [vmem:[#allocation5 + $0x180] sm:$0xff]
    %v122 = vld [vmem:[#allocation5 + $0x188] sm:$0xff]
    %v123 = vld [vmem:[#allocation5 + $0x190] sm:$0xff]
    %v124 = vld [vmem:[#allocation5 + $0x198] sm:$0xff]
    %v125 = vld [vmem:[#allocation5 + $0x1a0] sm:$0xff]
    %v126 = vld [vmem:[#allocation5 + $0x1a8] sm:$0xff]
    %v127 = vld [vmem:[#allocation5 + $0x1b0] sm:$0xff]
    %v128 = vld [vmem:[#allocation5 + $0x1b8] sm:$0xff]
    %v129 = vld [vmem:[#allocation5 + $0x1c0] sm:$0xff]
    %v130 = vld [vmem:[#allocation5 + $0x1c8] sm:$0xff]
    %v131 = vld [vmem:[#allocation5 + $0x1d0] sm:$0xff]
    %v132 = vld [vmem:[#allocation5 + $0x1d8] sm:$0xff]
    %v133 = vld [vmem:[#allocation5 + $0x1e0] sm:$0xff]
    %v134 = vld [vmem:[#allocation5 + $0x1e8] sm:$0xff]
    %v135 = vld [vmem:[#allocation5 + $0x1f0] sm:$0xff]
    %v136 = vld [vmem:[#allocation5 + $0x1f8] sm:$0xff]
    %v137 = vld [vmem:[#allocation8] sm:$0xff]
    %v138 = vld [vmem:[#allocation8 + $0x8] sm:$0xff]
    %v141 = vlaneseq
    %v142 = vshrl.u32 %v141, 7
    %v143 = vsub.s32 0, %v142
    %v144 = vrot.slane %v137, %v143
    %v145 = vlaneseq
    %v146 = vshrl.u32 %v145, 7
    %v147 = vsub.s32 1, %v146
    %v148 = vrot.slane %v137, %v147
    %v149 = vlaneseq
    %v150 = vshrl.u32 %v149, 7
    %v151 = vsub.s32 2, %v150
    %v152 = vrot.slane %v137, %v151
    %v153 = vlaneseq
    %v154 = vshrl.u32 %v153, 7
    %v155 = vsub.s32 3, %v154
    %v156 = vrot.slane %v137, %v155
    %v157 = vlaneseq
    %v158 = vshrl.u32 %v157, 7
    %v159 = vsub.s32 4, %v158
    %v160 = vrot.slane %v137, %v159
    %v161 = vlaneseq
    %v162 = vshrl.u32 %v161, 7
    %v163 = vsub.s32 5, %v162
    %v164 = vrot.slane %v137, %v163
    %v165 = vlaneseq
    %v166 = vshrl.u32 %v165, 7
    %v167 = vsub.s32 6, %v166
    %v168 = vrot.slane %v137, %v167
    %v169 = vlaneseq
    %v170 = vshrl.u32 %v169, 7
    %v171 = vsub.s32 7, %v170
    %v172 = vrot.slane %v137, %v171
    %v173 = vlaneseq
    %v174 = vshrl.u32 %v173, 7
    %v175 = vsub.s32 0, %v174
    %v176 = vrot.slane %v138, %v175
    %v177 = vlaneseq
    %v178 = vshrl.u32 %v177, 7
    %v179 = vsub.s32 1, %v178
    %v180 = vrot.slane %v138, %v179
    %v181 = vlaneseq
    %v182 = vshrl.u32 %v181, 7
    %v183 = vsub.s32 2, %v182
    %v184 = vrot.slane %v138, %v183
    %v185 = vlaneseq
    %v186 = vshrl.u32 %v185, 7
    %v187 = vsub.s32 3, %v186
    %v188 = vrot.slane %v138, %v187
    %v189 = vlaneseq
    %v190 = vshrl.u32 %v189, 7
    %v191 = vsub.s32 4, %v190
    %v192 = vrot.slane %v138, %v191
    %v193 = vlaneseq
    %v194 = vshrl.u32 %v193, 7
    %v195 = vsub.s32 5, %v194
    %v196 = vrot.slane %v138, %v195
    %v197 = vlaneseq
    %v198 = vshrl.u32 %v197, 7
    %v199 = vsub.s32 6, %v198
    %v200 = vrot.slane %v138, %v199
    %v201 = vlaneseq
    %v202 = vshrl.u32 %v201, 7
    %v203 = vsub.s32 7, %v202
    %v204 = vrot.slane %v138, %v203
    %v285 = vunpack.c.l.b16 %v73
    %v286 = vunpack.c.h.b16 %v73
    %v287 = vunpack.c.l.b16 %v74
    %v288 = vunpack.c.h.b16 %v74
    %v289 = vunpack.c.l.b16 %v75
    %v290 = vunpack.c.h.b16 %v75
    %v291 = vunpack.c.l.b16 %v76
    %v292 = vunpack.c.h.b16 %v76
    %v293 = vunpack.c.l.b16 %v77
    %v294 = vunpack.c.h.b16 %v77
    %v295 = vunpack.c.l.b16 %v78
    %v296 = vunpack.c.h.b16 %v78
    %v297 = vunpack.c.l.b16 %v79
    %v298 = vunpack.c.h.b16 %v79
    %v299 = vunpack.c.l.b16 %v80
    %v300 = vunpack.c.h.b16 %v80
    %v301 = vunpack.c.l.b16 %v81
    %v302 = vunpack.c.h.b16 %v81
    %v303 = vunpack.c.l.b16 %v82
    %v304 = vunpack.c.h.b16 %v82
    %v305 = vunpack.c.l.b16 %v83
    %v306 = vunpack.c.h.b16 %v83
    %v307 = vunpack.c.l.b16 %v84
    %v308 = vunpack.c.h.b16 %v84
    %v309 = vunpack.c.l.b16 %v85
    %v310 = vunpack.c.h.b16 %v85
    %v311 = vunpack.c.l.b16 %v86
    %v312 = vunpack.c.h.b16 %v86
    %v313 = vunpack.c.l.b16 %v87
    %v314 = vunpack.c.h.b16 %v87
    %v315 = vunpack.c.l.b16 %v88
    %v316 = vunpack.c.h.b16 %v88
    %v317 = vunpack.c.l.b16 %v89
    %v318 = vunpack.c.h.b16 %v89
    %v319 = vunpack.c.l.b16 %v90
    %v320 = vunpack.c.h.b16 %v90
    %v321 = vunpack.c.l.b16 %v91
    %v322 = vunpack.c.h.b16 %v91
    %v323 = vunpack.c.l.b16 %v92
    %v324 = vunpack.c.h.b16 %v92
    %v325 = vunpack.c.l.b16 %v93
    %v326 = vunpack.c.h.b16 %v93
    %v327 = vunpack.c.l.b16 %v94
    %v328 = vunpack.c.h.b16 %v94
    %v329 = vunpack.c.l.b16 %v95
    %v330 = vunpack.c.h.b16 %v95
    %v331 = vunpack.c.l.b16 %v96
    %v332 = vunpack.c.h.b16 %v96
    %v333 = vunpack.c.l.b16 %v97
    %v334 = vunpack.c.h.b16 %v97
    %v335 = vunpack.c.l.b16 %v98
    %v336 = vunpack.c.h.b16 %v98
    %v337 = vunpack.c.l.b16 %v99
    %v338 = vunpack.c.h.b16 %v99
    %v339 = vunpack.c.l.b16 %v100
    %v340 = vunpack.c.h.b16 %v100
    %v341 = vunpack.c.l.b16 %v101
    %v342 = vunpack.c.h.b16 %v101
    %v343 = vunpack.c.l.b16 %v102
    %v344 = vunpack.c.h.b16 %v102
    %v345 = vunpack.c.l.b16 %v103
    %v346 = vunpack.c.h.b16 %v103
    %v347 = vunpack.c.l.b16 %v104
    %v348 = vunpack.c.h.b16 %v104
    %v349 = vunpack.c.l.b16 %v105
    %v350 = vunpack.c.h.b16 %v105
    %v351 = vunpack.c.l.b16 %v106
    %v352 = vunpack.c.h.b16 %v106
    %v353 = vunpack.c.l.b16 %v107
    %v354 = vunpack.c.h.b16 %v107
    %v355 = vunpack.c.l.b16 %v108
    %v356 = vunpack.c.h.b16 %v108
    %v357 = vunpack.c.l.b16 %v109
    %v358 = vunpack.c.h.b16 %v109
    %v359 = vunpack.c.l.b16 %v110
    %v360 = vunpack.c.h.b16 %v110
    %v361 = vunpack.c.l.b16 %v111
    %v362 = vunpack.c.h.b16 %v111
    %v363 = vunpack.c.l.b16 %v112
    %v364 = vunpack.c.h.b16 %v112
    %v365 = vunpack.c.l.b16 %v113
    %v366 = vunpack.c.h.b16 %v113
    %v367 = vunpack.c.l.b16 %v114
    %v368 = vunpack.c.h.b16 %v114
    %v369 = vunpack.c.l.b16 %v115
    %v370 = vunpack.c.h.b16 %v115
    %v371 = vunpack.c.l.b16 %v116
    %v372 = vunpack.c.h.b16 %v116
    %v373 = vunpack.c.l.b16 %v117
    %v374 = vunpack.c.h.b16 %v117
    %v375 = vunpack.c.l.b16 %v118
    %v376 = vunpack.c.h.b16 %v118
    %v377 = vunpack.c.l.b16 %v119
    %v378 = vunpack.c.h.b16 %v119
    %v379 = vunpack.c.l.b16 %v120
    %v380 = vunpack.c.h.b16 %v120
    %v381 = vunpack.c.l.b16 %v121
    %v382 = vunpack.c.h.b16 %v121
    %v383 = vunpack.c.l.b16 %v122
    %v384 = vunpack.c.h.b16 %v122
    %v385 = vunpack.c.l.b16 %v123
    %v386 = vunpack.c.h.b16 %v123
    %v387 = vunpack.c.l.b16 %v124
    %v388 = vunpack.c.h.b16 %v124
    %v389 = vunpack.c.l.b16 %v125
    %v390 = vunpack.c.h.b16 %v125
    %v391 = vunpack.c.l.b16 %v126
    %v392 = vunpack.c.h.b16 %v126
    %v393 = vunpack.c.l.b16 %v127
    %v394 = vunpack.c.h.b16 %v127
    %v395 = vunpack.c.l.b16 %v128
    %v396 = vunpack.c.h.b16 %v128
    %v397 = vunpack.c.l.b16 %v129
    %v398 = vunpack.c.h.b16 %v129
    %v399 = vunpack.c.l.b16 %v130
    %v400 = vunpack.c.h.b16 %v130
    %v401 = vunpack.c.l.b16 %v131
    %v402 = vunpack.c.h.b16 %v131
    %v403 = vunpack.c.l.b16 %v132
    %v404 = vunpack.c.h.b16 %v132
    %v405 = vunpack.c.l.b16 %v133
    %v406 = vunpack.c.h.b16 %v133
    %v407 = vunpack.c.l.b16 %v134
    %v408 = vunpack.c.h.b16 %v134
    %v409 = vunpack.c.l.b16 %v135
    %v410 = vunpack.c.h.b16 %v135
    %v411 = vunpack.c.l.b16 %v136
    %v412 = vunpack.c.h.b16 %v136
    %v413 = vpack.c.b16 %v301, %v285
    %v414 = vpack.c.b16 %v302, %v286
    %v415 = vpack.c.b16 %v303, %v287
    %v416 = vpack.c.b16 %v304, %v288
    %v417 = vpack.c.b16 %v305, %v289
    %v418 = vpack.c.b16 %v306, %v290
    %v419 = vpack.c.b16 %v307, %v291
    %v420 = vpack.c.b16 %v308, %v292
    %v421 = vpack.c.b16 %v309, %v293
    %v422 = vpack.c.b16 %v310, %v294
    %v423 = vpack.c.b16 %v311, %v295
    %v424 = vpack.c.b16 %v312, %v296
    %v425 = vpack.c.b16 %v313, %v297
    %v426 = vpack.c.b16 %v314, %v298
    %v427 = vpack.c.b16 %v315, %v299
    %v428 = vpack.c.b16 %v316, %v300
    %v429 = vpack.c.b16 %v333, %v317
    %v430 = vpack.c.b16 %v334, %v318
    %v431 = vpack.c.b16 %v335, %v319
    %v432 = vpack.c.b16 %v336, %v320
    %v433 = vpack.c.b16 %v337, %v321
    %v434 = vpack.c.b16 %v338, %v322
    %v435 = vpack.c.b16 %v339, %v323
    %v436 = vpack.c.b16 %v340, %v324
    %v437 = vpack.c.b16 %v341, %v325
    %v438 = vpack.c.b16 %v342, %v326
    %v439 = vpack.c.b16 %v343, %v327
    %v440 = vpack.c.b16 %v344, %v328
    %v441 = vpack.c.b16 %v345, %v329
    %v442 = vpack.c.b16 %v346, %v330
    %v443 = vpack.c.b16 %v347, %v331
    %v444 = vpack.c.b16 %v348, %v332
    %v445 = vpack.c.b16 %v365, %v349
    %v446 = vpack.c.b16 %v366, %v350
    %v447 = vpack.c.b16 %v367, %v351
    %v448 = vpack.c.b16 %v368, %v352
    %v449 = vpack.c.b16 %v369, %v353
    %v450 = vpack.c.b16 %v370, %v354
    %v451 = vpack.c.b16 %v371, %v355
    %v452 = vpack.c.b16 %v372, %v356
    %v453 = vpack.c.b16 %v373, %v357
    %v454 = vpack.c.b16 %v374, %v358
    %v455 = vpack.c.b16 %v375, %v359
    %v456 = vpack.c.b16 %v376, %v360
    %v457 = vpack.c.b16 %v377, %v361
    %v458 = vpack.c.b16 %v378, %v362
    %v459 = vpack.c.b16 %v379, %v363
    %v460 = vpack.c.b16 %v380, %v364
    %v461 = vpack.c.b16 %v397, %v381
    %v462 = vpack.c.b16 %v398, %v382
    %v463 = vpack.c.b16 %v399, %v383
    %v464 = vpack.c.b16 %v400, %v384
    %v465 = vpack.c.b16 %v401, %v385
    %v466 = vpack.c.b16 %v402, %v386
    %v467 = vpack.c.b16 %v403, %v387
    %v468 = vpack.c.b16 %v404, %v388
    %v469 = vpack.c.b16 %v405, %v389
    %v470 = vpack.c.b16 %v406, %v390
    %v471 = vpack.c.b16 %v407, %v391
    %v472 = vpack.c.b16 %v408, %v392
    %v473 = vpack.c.b16 %v409, %v393
    %v474 = vpack.c.b16 %v410, %v394
    %v475 = vpack.c.b16 %v411, %v395
    %v476 = vpack.c.b16 %v412, %v396
    %vm541 = vcmask 523264
    %v543 = vsel %vm541, %v72, 0
    %545 = vmatprep.subr.bf16.mxu0 %v414
    %546 = vmatpush1.bf16.msra.mxu0 %v413
    %547 = vmatprep.subr.bf16.mxu0 %v430
    %548 = vmatpush1.bf16.msra.mxu0 %v429
    %549 = vmatprep.subr.bf16.mxu0 %v446
    %550 = vmatpush1.bf16.msra.mxu0 %v445
    %551 = vmatprep.subr.bf16.mxu0 %v462
    %552 = vmatpush1.bf16.msra.mxu0 %v461
    %553 = vmatprep.subr.bf16.mxu0 0
    %554 = vmatpush1.bf16.msra.mxu0 0
    %555 = vmatprep.subr.bf16.mxu0 0
    %556 = vmatpush1.bf16.msra.mxu0 0
    %557 = vmatprep.subr.bf16.mxu0 0
    %558 = vmatpush1.bf16.msra.mxu0 0
    %559 = vmatprep.subr.bf16.mxu0 0
    %560 = vmatpush1.bf16.msra.mxu0 0
    %561 = vmatprep.subr.bf16.mxu0 0
    %562 = vmatpush1.bf16.msra.mxu0 0
    %563 = vmatprep.subr.bf16.mxu0 0
    %564 = vmatpush1.bf16.msra.mxu0 0
    %565 = vmatprep.subr.bf16.mxu0 0
    %566 = vmatpush1.bf16.msra.mxu0 0
    %567 = vmatprep.subr.bf16.mxu0 0
    %568 = vmatpush1.bf16.msra.mxu0 0
    %569 = vmatprep.subr.bf16.mxu0 0
    %570 = vmatpush1.bf16.msra.mxu0 0
    %571 = vmatprep.subr.bf16.mxu0 0
    %572 = vmatpush1.bf16.msra.mxu0 0
    %573 = vmatprep.subr.bf16.mxu0 0
    %574 = vmatpush1.bf16.msra.mxu0 0
    %575 = vmatprep.subr.bf16.mxu0 0
    %576 = vmatpush1.bf16.msra.mxu0 0
    %577 = vmatprep.mubr.bf16.mxu0 0
    %578 = vmatmul.mubr.bf16.gmra.mrb[0].mxu0 %v543
    %v579 = vpop.f32.mrb[0].mxu0
    %v580 = vadd.f32 %v144, %v579
    %v581 = vpop.f32.mrb[0].mxu0
    %v582 = vadd.f32 %v148, %v581
    %v583 = vpop.f32.mrb[0].mxu0
    %v584 = vpop.f32.mrb[0].mxu0
    %585 = vdwg.mxu0
    %586 = vmatprep.subr.bf16.mxu0 %v416
    %587 = vmatpush1.bf16.msra.mxu0 %v415
    %588 = vmatprep.subr.bf16.mxu0 %v432
    %589 = vmatpush1.bf16.msra.mxu0 %v431
    %590 = vmatprep.subr.bf16.mxu0 %v448
    %591 = vmatpush1.bf16.msra.mxu0 %v447
    %592 = vmatprep.subr.bf16.mxu0 %v464
    %593 = vmatpush1.bf16.msra.mxu0 %v463
    %594 = vmatprep.subr.bf16.mxu0 0
    %595 = vmatpush1.bf16.msra.mxu0 0
    %596 = vmatprep.subr.bf16.mxu0 0
    %597 = vmatpush1.bf16.msra.mxu0 0
    %598 = vmatprep.subr.bf16.mxu0 0
    %599 = vmatpush1.bf16.msra.mxu0 0
    %600 = vmatprep.subr.bf16.mxu0 0
    %601 = vmatpush1.bf16.msra.mxu0 0
    %602 = vmatprep.subr.bf16.mxu0 0
    %603 = vmatpush1.bf16.msra.mxu0 0
    %604 = vmatprep.subr.bf16.mxu0 0
    %605 = vmatpush1.bf16.msra.mxu0 0
    %606 = vmatprep.subr.bf16.mxu0 0
    %607 = vmatpush1.bf16.msra.mxu0 0
    %608 = vmatprep.subr.bf16.mxu0 0
    %609 = vmatpush1.bf16.msra.mxu0 0
    %610 = vmatprep.subr.bf16.mxu0 0
    %611 = vmatpush1.bf16.msra.mxu0 0
    %612 = vmatprep.subr.bf16.mxu0 0
    %613 = vmatpush1.bf16.msra.mxu0 0
    %614 = vmatprep.subr.bf16.mxu0 0
    %615 = vmatpush1.bf16.msra.mxu0 0
    %616 = vmatprep.subr.bf16.mxu0 0
    %617 = vmatpush1.bf16.msra.mxu0 0
    %618 = vmatprep.mubr.bf16.mxu0 0
    %619 = vmatmul.mubr.bf16.gmra.mrb[0].mxu0 %v543
    %v620 = vpop.f32.mrb[0].mxu0
    %v621 = vadd.f32 %v152, %v620
    %v622 = vpop.f32.mrb[0].mxu0
    %v623 = vadd.f32 %v156, %v622
    %v624 = vpop.f32.mrb[0].mxu0
    %v625 = vpop.f32.mrb[0].mxu0
    %626 = vdwg.mxu0
    %627 = vmatprep.subr.bf16.mxu0 %v418
    %628 = vmatpush1.bf16.msra.mxu0 %v417
    %629 = vmatprep.subr.bf16.mxu0 %v434
    %630 = vmatpush1.bf16.msra.mxu0 %v433
    %631 = vmatprep.subr.bf16.mxu0 %v450
    %632 = vmatpush1.bf16.msra.mxu0 %v449
    %633 = vmatprep.subr.bf16.mxu0 %v466
    %634 = vmatpush1.bf16.msra.mxu0 %v465
    %635 = vmatprep.subr.bf16.mxu0 0
    %636 = vmatpush1.bf16.msra.mxu0 0
    %637 = vmatprep.subr.bf16.mxu0 0
    %638 = vmatpush1.bf16.msra.mxu0 0
    %639 = vmatprep.subr.bf16.mxu0 0
    %640 = vmatpush1.bf16.msra.mxu0 0
    %641 = vmatprep.subr.bf16.mxu0 0
    %642 = vmatpush1.bf16.msra.mxu0 0
    %643 = vmatprep.subr.bf16.mxu0 0
    %644 = vmatpush1.bf16.msra.mxu0 0
    %645 = vmatprep.subr.bf16.mxu0 0
    %646 = vmatpush1.bf16.msra.mxu0 0
    %647 = vmatprep.subr.bf16.mxu0 0
    %648 = vmatpush1.bf16.msra.mxu0 0
    %649 = vmatprep.subr.bf16.mxu0 0
    %650 = vmatpush1.bf16.msra.mxu0 0
    %651 = vmatprep.subr.bf16.mxu0 0
    %652 = vmatpush1.bf16.msra.mxu0 0
    %653 = vmatprep.subr.bf16.mxu0 0
    %654 = vmatpush1.bf16.msra.mxu0 0
    %655 = vmatprep.subr.bf16.mxu0 0
    %656 = vmatpush1.bf16.msra.mxu0 0
    %657 = vmatprep.subr.bf16.mxu0 0
    %658 = vmatpush1.bf16.msra.mxu0 0
    %659 = vmatprep.mubr.bf16.mxu0 0
    %660 = vmatmul.mubr.bf16.gmra.mrb[0].mxu0 %v543
    %v661 = vpop.f32.mrb[0].mxu0
    %v662 = vadd.f32 %v160, %v661
    %v663 = vpop.f32.mrb[0].mxu0
    %v664 = vadd.f32 %v164, %v663
    %v665 = vpop.f32.mrb[0].mxu0
    %v666 = vpop.f32.mrb[0].mxu0
    %667 = vdwg.mxu0
    %668 = vmatprep.subr.bf16.mxu0 %v420
    %669 = vmatpush1.bf16.msra.mxu0 %v419
    %670 = vmatprep.subr.bf16.mxu0 %v436
    %671 = vmatpush1.bf16.msra.mxu0 %v435
    %672 = vmatprep.subr.bf16.mxu0 %v452
    %673 = vmatpush1.bf16.msra.mxu0 %v451
    %674 = vmatprep.subr.bf16.mxu0 %v468
    %675 = vmatpush1.bf16.msra.mxu0 %v467
    %676 = vmatprep.subr.bf16.mxu0 0
    %677 = vmatpush1.bf16.msra.mxu0 0
    %678 = vmatprep.subr.bf16.mxu0 0
    %679 = vmatpush1.bf16.msra.mxu0 0
    %680 = vmatprep.subr.bf16.mxu0 0
    %681 = vmatpush1.bf16.msra.mxu0 0
    %682 = vmatprep.subr.bf16.mxu0 0
    %683 = vmatpush1.bf16.msra.mxu0 0
    %684 = vmatprep.subr.bf16.mxu0 0
    %685 = vmatpush1.bf16.msra.mxu0 0
    %686 = vmatprep.subr.bf16.mxu0 0
    %687 = vmatpush1.bf16.msra.mxu0 0
    %688 = vmatprep.subr.bf16.mxu0 0
    %689 = vmatpush1.bf16.msra.mxu0 0
    %690 = vmatprep.subr.bf16.mxu0 0
    %691 = vmatpush1.bf16.msra.mxu0 0
    %692 = vmatprep.subr.bf16.mxu0 0
    %693 = vmatpush1.bf16.msra.mxu0 0
    %694 = vmatprep.subr.bf16.mxu0 0
    %695 = vmatpush1.bf16.msra.mxu0 0
    %696 = vmatprep.subr.bf16.mxu0 0
    %697 = vmatpush1.bf16.msra.mxu0 0
    %698 = vmatprep.subr.bf16.mxu0 0
    %699 = vmatpush1.bf16.msra.mxu0 0
    %700 = vmatprep.mubr.bf16.mxu0 0
    %701 = vmatmul.mubr.bf16.gmra.mrb[0].mxu0 %v543
    %v702 = vpop.f32.mrb[0].mxu0
    %v703 = vadd.f32 %v168, %v702
    %v704 = vpop.f32.mrb[0].mxu0
    %v705 = vadd.f32 %v172, %v704
    %v706 = vpop.f32.mrb[0].mxu0
    %v707 = vpop.f32.mrb[0].mxu0
    %708 = vdwg.mxu0
    %709 = vmatprep.subr.bf16.mxu0 %v422
    %710 = vmatpush1.bf16.msra.mxu0 %v421
    %711 = vmatprep.subr.bf16.mxu0 %v438
    %712 = vmatpush1.bf16.msra.mxu0 %v437
    %713 = vmatprep.subr.bf16.mxu0 %v454
    %714 = vmatpush1.bf16.msra.mxu0 %v453
    %715 = vmatprep.subr.bf16.mxu0 %v470
    %716 = vmatpush1.bf16.msra.mxu0 %v469
    %717 = vmatprep.subr.bf16.mxu0 0
    %718 = vmatpush1.bf16.msra.mxu0 0
    %719 = vmatprep.subr.bf16.mxu0 0
    %720 = vmatpush1.bf16.msra.mxu0 0
    %721 = vmatprep.subr.bf16.mxu0 0
    %722 = vmatpush1.bf16.msra.mxu0 0
    %723 = vmatprep.subr.bf16.mxu0 0
    %724 = vmatpush1.bf16.msra.mxu0 0
    %725 = vmatprep.subr.bf16.mxu0 0
    %726 = vmatpush1.bf16.msra.mxu0 0
    %727 = vmatprep.subr.bf16.mxu0 0
    %728 = vmatpush1.bf16.msra.mxu0 0
    %729 = vmatprep.subr.bf16.mxu0 0
    %730 = vmatpush1.bf16.msra.mxu0 0
    %731 = vmatprep.subr.bf16.mxu0 0
    %732 = vmatpush1.bf16.msra.mxu0 0
    %733 = vmatprep.subr.bf16.mxu0 0
    %734 = vmatpush1.bf16.msra.mxu0 0
    %735 = vmatprep.subr.bf16.mxu0 0
    %736 = vmatpush1.bf16.msra.mxu0 0
    %737 = vmatprep.subr.bf16.mxu0 0
    %738 = vmatpush1.bf16.msra.mxu0 0
    %739 = vmatprep.subr.bf16.mxu0 0
    %740 = vmatpush1.bf16.msra.mxu0 0
    %741 = vmatprep.mubr.bf16.mxu0 0
    %742 = vmatmul.mubr.bf16.gmra.mrb[0].mxu0 %v543
    %v743 = vpop.f32.mrb[0].mxu0
    %v744 = vadd.f32 %v176, %v743
    %v745 = vpop.f32.mrb[0].mxu0
    %v746 = vadd.f32 %v180, %v745
    %v747 = vpop.f32.mrb[0].mxu0
    %v748 = vpop.f32.mrb[0].mxu0
    %749 = vdwg.mxu0
    %750 = vmatprep.subr.bf16.mxu0 %v424
    %751 = vmatpush1.bf16.msra.mxu0 %v423
    %752 = vmatprep.subr.bf16.mxu0 %v440
    %753 = vmatpush1.bf16.msra.mxu0 %v439
    %754 = vmatprep.subr.bf16.mxu0 %v456
    %755 = vmatpush1.bf16.msra.mxu0 %v455
    %756 = vmatprep.subr.bf16.mxu0 %v472
    %757 = vmatpush1.bf16.msra.mxu0 %v471
    %758 = vmatprep.subr.bf16.mxu0 0
    %759 = vmatpush1.bf16.msra.mxu0 0
    %760 = vmatprep.subr.bf16.mxu0 0
    %761 = vmatpush1.bf16.msra.mxu0 0
    %762 = vmatprep.subr.bf16.mxu0 0
    %763 = vmatpush1.bf16.msra.mxu0 0
    %764 = vmatprep.subr.bf16.mxu0 0
    %765 = vmatpush1.bf16.msra.mxu0 0
    %766 = vmatprep.subr.bf16.mxu0 0
    %767 = vmatpush1.bf16.msra.mxu0 0
    %768 = vmatprep.subr.bf16.mxu0 0
    %769 = vmatpush1.bf16.msra.mxu0 0
    %770 = vmatprep.subr.bf16.mxu0 0
    %771 = vmatpush1.bf16.msra.mxu0 0
    %772 = vmatprep.subr.bf16.mxu0 0
    %773 = vmatpush1.bf16.msra.mxu0 0
    %774 = vmatprep.subr.bf16.mxu0 0
    %775 = vmatpush1.bf16.msra.mxu0 0
    %776 = vmatprep.subr.bf16.mxu0 0
    %777 = vmatpush1.bf16.msra.mxu0 0
    %778 = vmatprep.subr.bf16.mxu0 0
    %779 = vmatpush1.bf16.msra.mxu0 0
    %780 = vmatprep.subr.bf16.mxu0 0
    %781 = vmatpush1.bf16.msra.mxu0 0
    %782 = vmatprep.mubr.bf16.mxu0 0
    %783 = vmatmul.mubr.bf16.gmra.mrb[0].mxu0 %v543
    %v784 = vpop.f32.mrb[0].mxu0
    %v785 = vadd.f32 %v184, %v784
    %v786 = vpop.f32.mrb[0].mxu0
    %v787 = vadd.f32 %v188, %v786
    %v788 = vpop.f32.mrb[0].mxu0
    %v789 = vpop.f32.mrb[0].mxu0
    %790 = vdwg.mxu0
    %791 = vmatprep.subr.bf16.mxu0 %v426
    %792 = vmatpush1.bf16.msra.mxu0 %v425
    %793 = vmatprep.subr.bf16.mxu0 %v442
    %794 = vmatpush1.bf16.msra.mxu0 %v441
    %795 = vmatprep.subr.bf16.mxu0 %v458
    %796 = vmatpush1.bf16.msra.mxu0 %v457
    %797 = vmatprep.subr.bf16.mxu0 %v474
    %798 = vmatpush1.bf16.msra.mxu0 %v473
    %799 = vmatprep.subr.bf16.mxu0 0
    %800 = vmatpush1.bf16.msra.mxu0 0
    %801 = vmatprep.subr.bf16.mxu0 0
    %802 = vmatpush1.bf16.msra.mxu0 0
    %803 = vmatprep.subr.bf16.mxu0 0
    %804 = vmatpush1.bf16.msra.mxu0 0
    %805 = vmatprep.subr.bf16.mxu0 0
    %806 = vmatpush1.bf16.msra.mxu0 0
    %807 = vmatprep.subr.bf16.mxu0 0
    %808 = vmatpush1.bf16.msra.mxu0 0
    %809 = vmatprep.subr.bf16.mxu0 0
    %810 = vmatpush1.bf16.msra.mxu0 0
    %811 = vmatprep.subr.bf16.mxu0 0
    %812 = vmatpush1.bf16.msra.mxu0 0
    %813 = vmatprep.subr.bf16.mxu0 0
    %814 = vmatpush1.bf16.msra.mxu0 0
    %815 = vmatprep.subr.bf16.mxu0 0
    %816 = vmatpush1.bf16.msra.mxu0 0
    %817 = vmatprep.subr.bf16.mxu0 0
    %818 = vmatpush1.bf16.msra.mxu0 0
    %819 = vmatprep.subr.bf16.mxu0 0
    %820 = vmatpush1.bf16.msra.mxu0 0
    %821 = vmatprep.subr.bf16.mxu0 0
    %822 = vmatpush1.bf16.msra.mxu0 0
    %823 = vmatprep.mubr.bf16.mxu0 0
    %824 = vmatmul.mubr.bf16.gmra.mrb[0].mxu0 %v543
    %v825 = vpop.f32.mrb[0].mxu0
    %v826 = vadd.f32 %v192, %v825
    %v827 = vpop.f32.mrb[0].mxu0
    %v828 = vadd.f32 %v196, %v827
    %v829 = vpop.f32.mrb[0].mxu0
    %v830 = vpop.f32.mrb[0].mxu0
    %831 = vdwg.mxu0
    %832 = vmatprep.subr.bf16.mxu0 %v428
    %833 = vmatpush1.bf16.msra.mxu0 %v427
    %834 = vmatprep.subr.bf16.mxu0 %v444
    %835 = vmatpush1.bf16.msra.mxu0 %v443
    %836 = vmatprep.subr.bf16.mxu0 %v460
    %837 = vmatpush1.bf16.msra.mxu0 %v459
    %838 = vmatprep.subr.bf16.mxu0 %v476
    %839 = vmatpush1.bf16.msra.mxu0 %v475
    %840 = vmatprep.subr.bf16.mxu0 0
    %841 = vmatpush1.bf16.msra.mxu0 0
    %842 = vmatprep.subr.bf16.mxu0 0
    %843 = vmatpush1.bf16.msra.mxu0 0
    %844 = vmatprep.subr.bf16.mxu0 0
    %845 = vmatpush1.bf16.msra.mxu0 0
    %846 = vmatprep.subr.bf16.mxu0 0
    %847 = vmatpush1.bf16.msra.mxu0 0
    %848 = vmatprep.subr.bf16.mxu0 0
    %849 = vmatpush1.bf16.msra.mxu0 0
    %850 = vmatprep.subr.bf16.mxu0 0
    %851 = vmatpush1.bf16.msra.mxu0 0
    %852 = vmatprep.subr.bf16.mxu0 0
    %853 = vmatpush1.bf16.msra.mxu0 0
    %854 = vmatprep.subr.bf16.mxu0 0
    %855 = vmatpush1.bf16.msra.mxu0 0
    %856 = vmatprep.subr.bf16.mxu0 0
    %857 = vmatpush1.bf16.msra.mxu0 0
    %858 = vmatprep.subr.bf16.mxu0 0
    %859 = vmatpush1.bf16.msra.mxu0 0
    %860 = vmatprep.subr.bf16.mxu0 0
    %861 = vmatpush1.bf16.msra.mxu0 0
    %862 = vmatprep.subr.bf16.mxu0 0
    %863 = vmatpush1.bf16.msra.mxu0 0
    %864 = vmatprep.mubr.bf16.mxu0 0
    %865 = vmatmul.mubr.bf16.gmra.mrb[0].mxu0 %v543
    %v866 = vpop.f32.mrb[0].mxu0
    %v867 = vadd.f32 %v200, %v866
    %v868 = vpop.f32.mrb[0].mxu0
    %v869 = vadd.f32 %v204, %v868
    %v870 = vpop.f32.mrb[0].mxu0
    %v871 = vpop.f32.mrb[0].mxu0
    %872 = vdwg.mxu0
    %v873 = vpack.c.bf16 %v580, %v580
    %v874 = vpack.c.bf16 %v582, %v582
    %v875 = vpack.c.bf16 %v621, %v621
    %v876 = vpack.c.bf16 %v623, %v623
    %v877 = vpack.c.bf16 %v662, %v662
    %v878 = vpack.c.bf16 %v664, %v664
    %v879 = vpack.c.bf16 %v703, %v703
    %v880 = vpack.c.bf16 %v705, %v705
    %v881 = vpack.c.bf16 %v744, %v744
    %v882 = vpack.c.bf16 %v746, %v746
    %v883 = vpack.c.bf16 %v785, %v785
    %v884 = vpack.c.bf16 %v787, %v787
    %v885 = vpack.c.bf16 %v826, %v826
    %v886 = vpack.c.bf16 %v828, %v828
    %v887 = vpack.c.bf16 %v867, %v867
    %v888 = vpack.c.bf16 %v869, %v869
    %v889 = vxor.u32 %v873, 2147516416
    %v891 = vmul.bf16 %v889, 1069105081
    %v892 = vpow.bf16.pop %v891
    %v893 = vadd.bf16 %v892, 1065369472
    %v894 = vrcp.bf16.pop %v893
    %v895 = vmul.bf16 1065369472, %v894
    %v896 = vxor.u32 %v874, 2147516416
    %v898 = vmul.bf16 %v896, 1069105081
    %v899 = vpow.bf16.pop %v898
    %v900 = vadd.bf16 %v899, 1065369472
    %v901 = vrcp.bf16.pop %v900
    %v902 = vmul.bf16 1065369472, %v901
    %v903 = vtanh.bf16.pop %v875
    %v904 = vxor.u32 %v876, 2147516416
    %v906 = vmul.bf16 %v904, 1069105081
    %v907 = vpow.bf16.pop %v906
    %v908 = vadd.bf16 %v907, 1065369472
    %v909 = vrcp.bf16.pop %v908
    %v910 = vmul.bf16 1065369472, %v909
    %v911 = vunpack.c.l.bf16 %v902
    %v912 = vmul.f32 %v911, 0.0
    %v913 = vmul.bf16 %v895, %v903
    %v914 = vunpack.c.l.bf16 %v913
    %v915 = vadd.f32 %v912, %v914
    %v916 = vunpack.c.l.bf16 %v910
    %v917 = vtanh.pop %v915
    %v918 = vmul.f32 %v916, %v917
    %v919 = vpack.c.bf16 %v918, %v918
    %v920 = vunpack.c.l.bf16 %v877
    %v921 = vunpack.c.l.bf16 %v878
    %v922 = vunpack.c.l.bf16 %v879
    %v923 = vunpack.c.l.bf16 %v880
    %s924 = scalar_lea.vmem [#allocation7], 256
    %v925 = vld [vmem:[%s924] sm:$0xff]
    %v926 = vld [vmem:[%s924 + $0x8] sm:$0xff]
    %v927 = vld [vmem:[%s924 + $0x10] sm:$0xff]
    %v928 = vld [vmem:[%s924 + $0x18] sm:$0xff]
    %v929 = vld [vmem:[%s924 + $0x20] sm:$0xff]
    %v930 = vld [vmem:[%s924 + $0x28] sm:$0xff]
    %v931 = vld [vmem:[%s924 + $0x30] sm:$0xff]
    %v932 = vld [vmem:[%s924 + $0x38] sm:$0xff]
    %v933 = vld [vmem:[%s924 + $0x40] sm:$0xff]
    %v934 = vld [vmem:[%s924 + $0x48] sm:$0xff]
    %v935 = vld [vmem:[%s924 + $0x50] sm:$0xff]
    %v936 = vld [vmem:[%s924 + $0x58] sm:$0xff]
    %v937 = vld [vmem:[%s924 + $0x60] sm:$0xff]
    %v938 = vld [vmem:[%s924 + $0x68] sm:$0xff]
    %v939 = vld [vmem:[%s924 + $0x70] sm:$0xff]
    %v940 = vld [vmem:[%s924 + $0x78] sm:$0xff]
    %v941 = vld [vmem:[%s924 + $0x80] sm:$0xff]
    %v942 = vld [vmem:[%s924 + $0x88] sm:$0xff]
    %v943 = vld [vmem:[%s924 + $0x90] sm:$0xff]
    %v944 = vld [vmem:[%s924 + $0x98] sm:$0xff]
    %v945 = vld [vmem:[%s924 + $0xa0] sm:$0xff]
    %v946 = vld [vmem:[%s924 + $0xa8] sm:$0xff]
    %v947 = vld [vmem:[%s924 + $0xb0] sm:$0xff]
    %v948 = vld [vmem:[%s924 + $0xb8] sm:$0xff]
    %v949 = vld [vmem:[%s924 + $0xc0] sm:$0xff]
    %v950 = vld [vmem:[%s924 + $0xc8] sm:$0xff]
    %v951 = vld [vmem:[%s924 + $0xd0] sm:$0xff]
    %v952 = vld [vmem:[%s924 + $0xd8] sm:$0xff]
    %v953 = vld [vmem:[%s924 + $0xe0] sm:$0xff]
    %v954 = vld [vmem:[%s924 + $0xe8] sm:$0xff]
    %v955 = vld [vmem:[%s924 + $0xf0] sm:$0xff]
    %v956 = vld [vmem:[%s924 + $0xf8] sm:$0xff]
    %v989 = vunpack.c.l.b16 %v925
    %v990 = vunpack.c.h.b16 %v925
    %v991 = vunpack.c.l.b16 %v926
    %v992 = vunpack.c.h.b16 %v926
    %v993 = vunpack.c.l.b16 %v927
    %v994 = vunpack.c.h.b16 %v927
    %v995 = vunpack.c.l.b16 %v928
    %v996 = vunpack.c.h.b16 %v928
    %v997 = vunpack.c.l.b16 %v929
    %v998 = vunpack.c.h.b16 %v929
    %v999 = vunpack.c.l.b16 %v930
    %v1000 = vunpack.c.h.b16 %v930
    %v1001 = vunpack.c.l.b16 %v931
    %v1002 = vunpack.c.h.b16 %v931
    %v1003 = vunpack.c.l.b16 %v932
    %v1004 = vunpack.c.h.b16 %v932
    %v1005 = vunpack.c.l.b16 %v933
    %v1006 = vunpack.c.h.b16 %v933
    %v1007 = vunpack.c.l.b16 %v934
    %v1008 = vunpack.c.h.b16 %v934
    %v1009 = vunpack.c.l.b16 %v935
    %v1010 = vunpack.c.h.b16 %v935
    %v1011 = vunpack.c.l.b16 %v936
    %v1012 = vunpack.c.h.b16 %v936
    %v1013 = vunpack.c.l.b16 %v937
    %v1014 = vunpack.c.h.b16 %v937
    %v1015 = vunpack.c.l.b16 %v938
    %v1016 = vunpack.c.h.b16 %v938
    %v1017 = vunpack.c.l.b16 %v939
    %v1018 = vunpack.c.h.b16 %v939
    %v1019 = vunpack.c.l.b16 %v940
    %v1020 = vunpack.c.h.b16 %v940
    %v1021 = vunpack.c.l.b16 %v941
    %v1022 = vunpack.c.h.b16 %v941
    %v1023 = vunpack.c.l.b16 %v942
    %v1024 = vunpack.c.h.b16 %v942
    %v1025 = vunpack.c.l.b16 %v943
    %v1026 = vunpack.c.h.b16 %v943
    %v1027 = vunpack.c.l.b16 %v944
    %v1028 = vunpack.c.h.b16 %v944
    %v1029 = vunpack.c.l.b16 %v945
    %v1030 = vunpack.c.h.b16 %v945
    %v1031 = vunpack.c.l.b16 %v946
    %v1032 = vunpack.c.h.b16 %v946
    %v1033 = vunpack.c.l.b16 %v947
    %v1034 = vunpack.c.h.b16 %v947
    %v1035 = vunpack.c.l.b16 %v948
    %v1036 = vunpack.c.h.b16 %v948
    %v1037 = vunpack.c.l.b16 %v949
    %v1038 = vunpack.c.h.b16 %v949
    %v1039 = vunpack.c.l.b16 %v950
    %v1040 = vunpack.c.h.b16 %v950
    %v1041 = vunpack.c.l.b16 %v951
    %v1042 = vunpack.c.h.b16 %v951
    %v1043 = vunpack.c.l.b16 %v952
    %v1044 = vunpack.c.h.b16 %v952
    %v1045 = vunpack.c.l.b16 %v953
    %v1046 = vunpack.c.h.b16 %v953
    %v1047 = vunpack.c.l.b16 %v954
    %v1048 = vunpack.c.h.b16 %v954
    %v1049 = vunpack.c.l.b16 %v955
    %v1050 = vunpack.c.h.b16 %v955
    %v1051 = vunpack.c.l.b16 %v956
    %v1052 = vunpack.c.h.b16 %v956
    %v1053 = vpack.c.b16 %v993, %v989
    %v1054 = vpack.c.b16 %v994, %v990
    %v1055 = vpack.c.b16 %v995, %v991
    %v1056 = vpack.c.b16 %v996, %v992
    %v1057 = vpack.c.b16 %v1001, %v997
    %v1058 = vpack.c.b16 %v1002, %v998
    %v1059 = vpack.c.b16 %v1003, %v999
    %v1060 = vpack.c.b16 %v1004, %v1000
    %v1061 = vpack.c.b16 %v1009, %v1005
    %v1062 = vpack.c.b16 %v1010, %v1006
    %v1063 = vpack.c.b16 %v1011, %v1007
    %v1064 = vpack.c.b16 %v1012, %v1008
    %v1065 = vpack.c.b16 %v1017, %v1013
    %v1066 = vpack.c.b16 %v1018, %v1014
    %v1067 = vpack.c.b16 %v1019, %v1015
    %v1068 = vpack.c.b16 %v1020, %v1016
    %v1069 = vpack.c.b16 %v1025, %v1021
    %v1070 = vpack.c.b16 %v1026, %v1022
    %v1071 = vpack.c.b16 %v1027, %v1023
    %v1072 = vpack.c.b16 %v1028, %v1024
    %v1073 = vpack.c.b16 %v1033, %v1029
    %v1074 = vpack.c.b16 %v1034, %v1030
    %v1075 = vpack.c.b16 %v1035, %v1031
    %v1076 = vpack.c.b16 %v1036, %v1032
    %v1077 = vpack.c.b16 %v1041, %v1037
    %v1078 = vpack.c.b16 %v1042, %v1038
    %v1079 = vpack.c.b16 %v1043, %v1039
    %v1080 = vpack.c.b16 %v1044, %v1040
    %v1081 = vpack.c.b16 %v1049, %v1045
    %v1082 = vpack.c.b16 %v1050, %v1046
    %v1083 = vpack.c.b16 %v1051, %v1047
    %v1084 = vpack.c.b16 %v1052, %v1048
    %1117 = vmatprep.subr.bf16.mxu0 %v1054
    %1118 = vmatpush1.bf16.msra.mxu0 %v1053
    %1119 = vmatprep.subr.bf16.mxu0 %v1058
    %1120 = vmatpush1.bf16.msra.mxu0 %v1057
    %1121 = vmatprep.subr.bf16.mxu0 %v1062
    %1122 = vmatpush1.bf16.msra.mxu0 %v1061
    %1123 = vmatprep.subr.bf16.mxu0 %v1066
    %1124 = vmatpush1.bf16.msra.mxu0 %v1065
    %1125 = vmatprep.subr.bf16.mxu0 %v1070
    %1126 = vmatpush1.bf16.msra.mxu0 %v1069
    %1127 = vmatprep.subr.bf16.mxu0 %v1074
    %1128 = vmatpush1.bf16.msra.mxu0 %v1073
    %1129 = vmatprep.subr.bf16.mxu0 %v1078
    %1130 = vmatpush1.bf16.msra.mxu0 %v1077
    %1131 = vmatprep.subr.bf16.mxu0 %v1082
    %1132 = vmatpush1.bf16.msra.mxu0 %v1081
    %1133 = vmatprep.subr.bf16.mxu0 0
    %1134 = vmatpush1.bf16.msra.mxu0 0
    %1135 = vmatprep.subr.bf16.mxu0 0
    %1136 = vmatpush1.bf16.msra.mxu0 0
    %1137 = vmatprep.subr.bf16.mxu0 0
    %1138 = vmatpush1.bf16.msra.mxu0 0
    %1139 = vmatprep.subr.bf16.mxu0 0
    %1140 = vmatpush1.bf16.msra.mxu0 0
    %1141 = vmatprep.subr.bf16.mxu0 0
    %1142 = vmatpush1.bf16.msra.mxu0 0
    %1143 = vmatprep.subr.bf16.mxu0 0
    %1144 = vmatpush1.bf16.msra.mxu0 0
    %1145 = vmatprep.subr.bf16.mxu0 0
    %1146 = vmatpush1.bf16.msra.mxu0 0
    %1147 = vmatprep.subr.bf16.mxu0 0
    %1148 = vmatpush1.bf16.msra.mxu0 0
    %1149 = vmatprep.mubr.bf16.mxu0 0
    %1150 = vmatmul.mubr.bf16.gmra.mrb[0].mxu0 %v919
    %v1151 = vpop.f32.mrb[0].mxu0
    %v1152 = vadd.f32 0.0, %v1151
    %v1153 = vpop.f32.mrb[0].mxu0
    %v1154 = vadd.f32 0.0, %v1153
    %v1155 = vpop.f32.mrb[0].mxu0
    %v1156 = vpop.f32.mrb[0].mxu0
    %1157 = vdwg.mxu0
    %1158 = vmatprep.subr.bf16.mxu0 %v1056
    %1159 = vmatpush1.bf16.msra.mxu0 %v1055
    %1160 = vmatprep.subr.bf16.mxu0 %v1060
    %1161 = vmatpush1.bf16.msra.mxu0 %v1059
    %1162 = vmatprep.subr.bf16.mxu0 %v1064
    %1163 = vmatpush1.bf16.msra.mxu0 %v1063
    %1164 = vmatprep.subr.bf16.mxu0 %v1068
    %1165 = vmatpush1.bf16.msra.mxu0 %v1067
    %1166 = vmatprep.subr.bf16.mxu0 %v1072
    %1167 = vmatpush1.bf16.msra.mxu0 %v1071
    %1168 = vmatprep.subr.bf16.mxu0 %v1076
    %1169 = vmatpush1.bf16.msra.mxu0 %v1075
    %1170 = vmatprep.subr.bf16.mxu0 %v1080
    %1171 = vmatpush1.bf16.msra.mxu0 %v1079
    %1172 = vmatprep.subr.bf16.mxu0 %v1084
    %1173 = vmatpush1.bf16.msra.mxu0 %v1083
    %1174 = vmatprep.subr.bf16.mxu0 0
    %1175 = vmatpush1.bf16.msra.mxu0 0
    %1176 = vmatprep.subr.bf16.mxu0 0
    %1177 = vmatpush1.bf16.msra.mxu0 0
    %1178 = vmatprep.subr.bf16.mxu0 0
    %1179 = vmatpush1.bf16.msra.mxu0 0
    %1180 = vmatprep.subr.bf16.mxu0 0
    %1181 = vmatpush1.bf16.msra.mxu0 0
    %1182 = vmatprep.subr.bf16.mxu0 0
    %1183 = vmatpush1.bf16.msra.mxu0 0
    %1184 = vmatprep.subr.bf16.mxu0 0
    %1185 = vmatpush1.bf16.msra.mxu0 0
    %1186 = vmatprep.subr.bf16.mxu0 0
    %1187 = vmatpush1.bf16.msra.mxu0 0
    %1188 = vmatprep.subr.bf16.mxu0 0
    %1189 = vmatpush1.bf16.msra.mxu0 0
    %1190 = vmatprep.mubr.bf16.mxu0 0
    %1191 = vmatmul.mubr.bf16.gmra.mrb[0].mxu0 %v919
    %v1192 = vpop.f32.mrb[0].mxu0
    %v1193 = vadd.f32 0.0, %v1192
    %v1194 = vpop.f32.mrb[0].mxu0
    %v1195 = vadd.f32 0.0, %v1194
    %v1196 = vpop.f32.mrb[0].mxu0
    %v1197 = vpop.f32.mrb[0].mxu0
    %1198 = vdwg.mxu0
    %v1199 = vadd.f32 %v920, %v1152
    %v1200 = vadd.f32 %v921, %v1154
    %v1201 = vadd.f32 %v922, %v1193
    %v1202 = vadd.f32 %v923, %v1195
    %v1203 = vpack.c.bf16 %v1199, %v1199
    %v1204 = vpack.c.bf16 %v1200, %v1200
    %v1205 = vpack.c.bf16 %v1201, %v1201
    %v1206 = vpack.c.bf16 %v1202, %v1202
    %v1207 = vxor.u32 %v1203, 2147516416
    %v1209 = vmul.bf16 %v1207, 1069105081
    %v1210 = vpow.bf16.pop %v1209
    %v1211 = vadd.bf16 %v1210, 1065369472
    %v1212 = vrcp.bf16.pop %v1211
    %v1213 = vmul.bf16 1065369472, %v1212
    %v1214 = vxor.u32 %v1204, 2147516416
    %v1216 = vmul.bf16 %v1214, 1069105081
    %v1217 = vpow.bf16.pop %v1216
    %v1218 = vadd.bf16 %v1217, 1065369472
    %v1219 = vrcp.bf16.pop %v1218
    %v1220 = vmul.bf16 1065369472, %v1219
    %v1221 = vtanh.bf16.pop %v1205
    %v1222 = vxor.u32 %v1206, 2147516416
    %v1224 = vmul.bf16 %v1222, 1069105081
    %v1225 = vpow.bf16.pop %v1224
    %v1226 = vadd.bf16 %v1225, 1065369472
    %v1227 = vrcp.bf16.pop %v1226
    %v1228 = vmul.bf16 1065369472, %v1227
    %v1229 = vunpack.c.l.bf16 %v1220
    %v1230 = vmul.f32 %v1229, %v915
    %v1231 = vmul.bf16 %v1213, %v1221
    %v1232 = vunpack.c.l.bf16 %v1231
    %v1233 = vadd.f32 %v1230, %v1232
    %v1234 = vunpack.c.l.bf16 %v1228
    %v1235 = vtanh.pop %v1233
    %v1236 = vmul.f32 %v1234, %v1235
    %v1237 = vpack.c.bf16 %v1236, %v1236
    %v1238 = vunpack.c.l.bf16 %v881
    %v1239 = vunpack.c.l.bf16 %v882
    %v1240 = vunpack.c.l.bf16 %v883
    %v1241 = vunpack.c.l.bf16 %v884
    %s1242 = scalar_lea.vmem [#allocation7], 512
    %v1243 = vld [vmem:[%s1242] sm:$0xff]
    %v1244 = vld [vmem:[%s1242 + $0x8] sm:$0xff]
    %v1245 = vld [vmem:[%s1242 + $0x10] sm:$0xff]
    %v1246 = vld [vmem:[%s1242 + $0x18] sm:$0xff]
    %v1247 = vld [vmem:[%s1242 + $0x20] sm:$0xff]
    %v1248 = vld [vmem:[%s1242 + $0x28] sm:$0xff]
    %v1249 = vld [vmem:[%s1242 + $0x30] sm:$0xff]
    %v1250 = vld [vmem:[%s1242 + $0x38] sm:$0xff]
    %v1251 = vld [vmem:[%s1242 + $0x40] sm:$0xff]
    %v1252 = vld [vmem:[%s1242 + $0x48] sm:$0xff]
    %v1253 = vld [vmem:[%s1242 + $0x50] sm:$0xff]
    %v1254 = vld [vmem:[%s1242 + $0x58] sm:$0xff]
    %v1255 = vld [vmem:[%s1242 + $0x60] sm:$0xff]
    %v1256 = vld [vmem:[%s1242 + $0x68] sm:$0xff]
    %v1257 = vld [vmem:[%s1242 + $0x70] sm:$0xff]
    %v1258 = vld [vmem:[%s1242 + $0x78] sm:$0xff]
    %v1259 = vld [vmem:[%s1242 + $0x80] sm:$0xff]
    %v1260 = vld [vmem:[%s1242 + $0x88] sm:$0xff]
    %v1261 = vld [vmem:[%s1242 + $0x90] sm:$0xff]
    %v1262 = vld [vmem:[%s1242 + $0x98] sm:$0xff]
    %v1263 = vld [vmem:[%s1242 + $0xa0] sm:$0xff]
    %v1264 = vld [vmem:[%s1242 + $0xa8] sm:$0xff]
    %v1265 = vld [vmem:[%s1242 + $0xb0] sm:$0xff]
    %v1266 = vld [vmem:[%s1242 + $0xb8] sm:$0xff]
    %v1267 = vld [vmem:[%s1242 + $0xc0] sm:$0xff]
    %v1268 = vld [vmem:[%s1242 + $0xc8] sm:$0xff]
    %v1269 = vld [vmem:[%s1242 + $0xd0] sm:$0xff]
    %v1270 = vld [vmem:[%s1242 + $0xd8] sm:$0xff]
    %v1271 = vld [vmem:[%s1242 + $0xe0] sm:$0xff]
    %v1272 = vld [vmem:[%s1242 + $0xe8] sm:$0xff]
    %v1273 = vld [vmem:[%s1242 + $0xf0] sm:$0xff]
    %v1274 = vld [vmem:[%s1242 + $0xf8] sm:$0xff]
    %v1307 = vunpack.c.l.b16 %v1243
    %v1308 = vunpack.c.h.b16 %v1243
    %v1309 = vunpack.c.l.b16 %v1244
    %v1310 = vunpack.c.h.b16 %v1244
    %v1311 = vunpack.c.l.b16 %v1245
    %v1312 = vunpack.c.h.b16 %v1245
    %v1313 = vunpack.c.l.b16 %v1246
    %v1314 = vunpack.c.h.b16 %v1246
    %v1315 = vunpack.c.l.b16 %v1247
    %v1316 = vunpack.c.h.b16 %v1247
    %v1317 = vunpack.c.l.b16 %v1248
    %v1318 = vunpack.c.h.b16 %v1248
    %v1319 = vunpack.c.l.b16 %v1249
    %v1320 = vunpack.c.h.b16 %v1249
    %v1321 = vunpack.c.l.b16 %v1250
    %v1322 = vunpack.c.h.b16 %v1250
    %v1323 = vunpack.c.l.b16 %v1251
    %v1324 = vunpack.c.h.b16 %v1251
    %v1325 = vunpack.c.l.b16 %v1252
    %v1326 = vunpack.c.h.b16 %v1252
    %v1327 = vunpack.c.l.b16 %v1253
    %v1328 = vunpack.c.h.b16 %v1253
    %v1329 = vunpack.c.l.b16 %v1254
    %v1330 = vunpack.c.h.b16 %v1254
    %v1331 = vunpack.c.l.b16 %v1255
    %v1332 = vunpack.c.h.b16 %v1255
    %v1333 = vunpack.c.l.b16 %v1256
    %v1334 = vunpack.c.h.b16 %v1256
    %v1335 = vunpack.c.l.b16 %v1257
    %v1336 = vunpack.c.h.b16 %v1257
    %v1337 = vunpack.c.l.b16 %v1258
    %v1338 = vunpack.c.h.b16 %v1258
    %v1339 = vunpack.c.l.b16 %v1259
    %v1340 = vunpack.c.h.b16 %v1259
    %v1341 = vunpack.c.l.b16 %v1260
    %v1342 = vunpack.c.h.b16 %v1260
    %v1343 = vunpack.c.l.b16 %v1261
    %v1344 = vunpack.c.h.b16 %v1261
    %v1345 = vunpack.c.l.b16 %v1262
    %v1346 = vunpack.c.h.b16 %v1262
    %v1347 = vunpack.c.l.b16 %v1263
    %v1348 = vunpack.c.h.b16 %v1263
    %v1349 = vunpack.c.l.b16 %v1264
    %v1350 = vunpack.c.h.b16 %v1264
    %v1351 = vunpack.c.l.b16 %v1265
    %v1352 = vunpack.c.h.b16 %v1265
    %v1353 = vunpack.c.l.b16 %v1266
    %v1354 = vunpack.c.h.b16 %v1266
    %v1355 = vunpack.c.l.b16 %v1267
    %v1356 = vunpack.c.h.b16 %v1267
    %v1357 = vunpack.c.l.b16 %v1268
    %v1358 = vunpack.c.h.b16 %v1268
    %v1359 = vunpack.c.l.b16 %v1269
    %v1360 = vunpack.c.h.b16 %v1269
    %v1361 = vunpack.c.l.b16 %v1270
    %v1362 = vunpack.c.h.b16 %v1270
    %v1363 = vunpack.c.l.b16 %v1271
    %v1364 = vunpack.c.h.b16 %v1271
    %v1365 = vunpack.c.l.b16 %v1272
    %v1366 = vunpack.c.h.b16 %v1272
    %v1367 = vunpack.c.l.b16 %v1273
    %v1368 = vunpack.c.h.b16 %v1273
    %v1369 = vunpack.c.l.b16 %v1274
    %v1370 = vunpack.c.h.b16 %v1274
    %v1371 = vpack.c.b16 %v1311, %v1307
    %v1372 = vpack.c.b16 %v1312, %v1308
    %v1373 = vpack.c.b16 %v1313, %v1309
    %v1374 = vpack.c.b16 %v1314, %v1310
    %v1375 = vpack.c.b16 %v1319, %v1315
    %v1376 = vpack.c.b16 %v1320, %v1316
    %v1377 = vpack.c.b16 %v1321, %v1317
    %v1378 = vpack.c.b16 %v1322, %v1318
    %v1379 = vpack.c.b16 %v1327, %v1323
    %v1380 = vpack.c.b16 %v1328, %v1324
    %v1381 = vpack.c.b16 %v1329, %v1325
    %v1382 = vpack.c.b16 %v1330, %v1326
    %v1383 = vpack.c.b16 %v1335, %v1331
    %v1384 = vpack.c.b16 %v1336, %v1332
    %v1385 = vpack.c.b16 %v1337, %v1333
    %v1386 = vpack.c.b16 %v1338, %v1334
    %v1387 = vpack.c.b16 %v1343, %v1339
    %v1388 = vpack.c.b16 %v1344, %v1340
    %v1389 = vpack.c.b16 %v1345, %v1341
    %v1390 = vpack.c.b16 %v1346, %v1342
    %v1391 = vpack.c.b16 %v1351, %v1347
    %v1392 = vpack.c.b16 %v1352, %v1348
    %v1393 = vpack.c.b16 %v1353, %v1349
    %v1394 = vpack.c.b16 %v1354, %v1350
    %v1395 = vpack.c.b16 %v1359, %v1355
    %v1396 = vpack.c.b16 %v1360, %v1356
    %v1397 = vpack.c.b16 %v1361, %v1357
    %v1398 = vpack.c.b16 %v1362, %v1358
    %v1399 = vpack.c.b16 %v1367, %v1363
    %v1400 = vpack.c.b16 %v1368, %v1364
    %v1401 = vpack.c.b16 %v1369, %v1365
    %v1402 = vpack.c.b16 %v1370, %v1366
    %1435 = vmatprep.subr.bf16.mxu0 %v1372
    %1436 = vmatpush1.bf16.msra.mxu0 %v1371
    %1437 = vmatprep.subr.bf16.mxu0 %v1376
    %1438 = vmatpush1.bf16.msra.mxu0 %v1375
    %1439 = vmatprep.subr.bf16.mxu0 %v1380
    %1440 = vmatpush1.bf16.msra.mxu0 %v1379
    %1441 = vmatprep.subr.bf16.mxu0 %v1384
    %1442 = vmatpush1.bf16.msra.mxu0 %v1383
    %1443 = vmatprep.subr.bf16.mxu0 %v1388
    %1444 = vmatpush1.bf16.msra.mxu0 %v1387
    %1445 = vmatprep.subr.bf16.mxu0 %v1392
    %1446 = vmatpush1.bf16.msra.mxu0 %v1391
    %1447 = vmatprep.subr.bf16.mxu0 %v1396
    %1448 = vmatpush1.bf16.msra.mxu0 %v1395
    %1449 = vmatprep.subr.bf16.mxu0 %v1400
    %1450 = vmatpush1.bf16.msra.mxu0 %v1399
    %1451 = vmatprep.subr.bf16.mxu0 0
    %1452 = vmatpush1.bf16.msra.mxu0 0
    %1453 = vmatprep.subr.bf16.mxu0 0
    %1454 = vmatpush1.bf16.msra.mxu0 0
    %1455 = vmatprep.subr.bf16.mxu0 0
    %1456 = vmatpush1.bf16.msra.mxu0 0
    %1457 = vmatprep.subr.bf16.mxu0 0
    %1458 = vmatpush1.bf16.msra.mxu0 0
    %1459 = vmatprep.subr.bf16.mxu0 0
    %1460 = vmatpush1.bf16.msra.mxu0 0
    %1461 = vmatprep.subr.bf16.mxu0 0
    %1462 = vmatpush1.bf16.msra.mxu0 0
    %1463 = vmatprep.subr.bf16.mxu0 0
    %1464 = vmatpush1.bf16.msra.mxu0 0
    %1465 = vmatprep.subr.bf16.mxu0 0
    %1466 = vmatpush1.bf16.msra.mxu0 0
    %1467 = vmatprep.mubr.bf16.mxu0 0
    %1468 = vmatmul.mubr.bf16.gmra.mrb[0].mxu0 %v1237
    %v1469 = vpop.f32.mrb[0].mxu0
    %v1470 = vadd.f32 0.0, %v1469
    %v1471 = vpop.f32.mrb[0].mxu0
    %v1472 = vadd.f32 0.0, %v1471
    %v1473 = vpop.f32.mrb[0].mxu0
    %v1474 = vpop.f32.mrb[0].mxu0
    %1475 = vdwg.mxu0
    %1476 = vmatprep.subr.bf16.mxu0 %v1374
    %1477 = vmatpush1.bf16.msra.mxu0 %v1373
    %1478 = vmatprep.subr.bf16.mxu0 %v1378
    %1479 = vmatpush1.bf16.msra.mxu0 %v1377
    %1480 = vmatprep.subr.bf16.mxu0 %v1382
    %1481 = vmatpush1.bf16.msra.mxu0 %v1381
    %1482 = vmatprep.subr.bf16.mxu0 %v1386
    %1483 = vmatpush1.bf16.msra.mxu0 %v1385
    %1484 = vmatprep.subr.bf16.mxu0 %v1390
    %1485 = vmatpush1.bf16.msra.mxu0 %v1389
    %1486 = vmatprep.subr.bf16.mxu0 %v1394
    %1487 = vmatpush1.bf16.msra.mxu0 %v1393
    %1488 = vmatprep.subr.bf16.mxu0 %v1398
    %1489 = vmatpush1.bf16.msra.mxu0 %v1397
    %1490 = vmatprep.subr.bf16.mxu0 %v1402
    %1491 = vmatpush1.bf16.msra.mxu0 %v1401
    %1492 = vmatprep.subr.bf16.mxu0 0
    %1493 = vmatpush1.bf16.msra.mxu0 0
    %1494 = vmatprep.subr.bf16.mxu0 0
    %1495 = vmatpush1.bf16.msra.mxu0 0
    %1496 = vmatprep.subr.bf16.mxu0 0
    %1497 = vmatpush1.bf16.msra.mxu0 0
    %1498 = vmatprep.subr.bf16.mxu0 0
    %1499 = vmatpush1.bf16.msra.mxu0 0
    %1500 = vmatprep.subr.bf16.mxu0 0
    %1501 = vmatpush1.bf16.msra.mxu0 0
    %1502 = vmatprep.subr.bf16.mxu0 0
    %1503 = vmatpush1.bf16.msra.mxu0 0
    %1504 = vmatprep.subr.bf16.mxu0 0
    %1505 = vmatpush1.bf16.msra.mxu0 0
    %1506 = vmatprep.subr.bf16.mxu0 0
    %1507 = vmatpush1.bf16.msra.mxu0 0
    %1508 = vmatprep.mubr.bf16.mxu0 0
    %1509 = vmatmul.mubr.bf16.gmra.mrb[0].mxu0 %v1237
    %v1510 = vpop.f32.mrb[0].mxu0
    %v1511 = vadd.f32 0.0, %v1510
    %v1512 = vpop.f32.mrb[0].mxu0
    %v1513 = vadd.f32 0.0, %v1512
    %v1514 = vpop.f32.mrb[0].mxu0
    %v1515 = vpop.f32.mrb[0].mxu0
    %1516 = vdwg.mxu0
    %v1517 = vadd.f32 %v1238, %v1470
    %v1518 = vadd.f32 %v1239, %v1472
    %v1519 = vadd.f32 %v1240, %v1511
    %v1520 = vadd.f32 %v1241, %v1513
    %v1521 = vpack.c.bf16 %v1517, %v1517
    %v1522 = vpack.c.bf16 %v1518, %v1518
    %v1523 = vpack.c.bf16 %v1519, %v1519
    %v1524 = vpack.c.bf16 %v1520, %v1520
    %v1525 = vxor.u32 %v1521, 2147516416
    %v1527 = vmul.bf16 %v1525, 1069105081
    %v1528 = vpow.bf16.pop %v1527
    %v1529 = vadd.bf16 %v1528, 1065369472
    %v1530 = vrcp.bf16.pop %v1529
    %v1531 = vmul.bf16 1065369472, %v1530
    %v1532 = vxor.u32 %v1522, 2147516416
    %v1534 = vmul.bf16 %v1532, 1069105081
    %v1535 = vpow.bf16.pop %v1534
    %v1536 = vadd.bf16 %v1535, 1065369472
    %v1537 = vrcp.bf16.pop %v1536
    %v1538 = vmul.bf16 1065369472, %v1537
    %v1539 = vtanh.bf16.pop %v1523
    %v1540 = vxor.u32 %v1524, 2147516416
    %v1542 = vmul.bf16 %v1540, 1069105081
    %v1543 = vpow.bf16.pop %v1542
    %v1544 = vadd.bf16 %v1543, 1065369472
    %v1545 = vrcp.bf16.pop %v1544
    %v1546 = vmul.bf16 1065369472, %v1545
    %v1547 = vunpack.c.l.bf16 %v1538
    %v1548 = vmul.f32 %v1547, %v1233
    %v1549 = vmul.bf16 %v1531, %v1539
    %v1550 = vunpack.c.l.bf16 %v1549
    %v1551 = vadd.f32 %v1548, %v1550
    %v1552 = vunpack.c.l.bf16 %v1546
    %v1553 = vtanh.pop %v1551
    %v1554 = vmul.f32 %v1552, %v1553
    %v1555 = vpack.c.bf16 %v1554, %v1554
    %v1556 = vunpack.c.l.bf16 %v885
    %v1557 = vunpack.c.l.bf16 %v886
    %v1558 = vunpack.c.l.bf16 %v887
    %v1559 = vunpack.c.l.bf16 %v888
    %s1560 = scalar_lea.vmem [#allocation7], 768
    %v1561 = vld [vmem:[%s1560] sm:$0xff]
    %v1562 = vld [vmem:[%s1560 + $0x8] sm:$0xff]
    %v1563 = vld [vmem:[%s1560 + $0x10] sm:$0xff]
    %v1564 = vld [vmem:[%s1560 + $0x18] sm:$0xff]
    %v1565 = vld [vmem:[%s1560 + $0x20] sm:$0xff]
    %v1566 = vld [vmem:[%s1560 + $0x28] sm:$0xff]
    %v1567 = vld [vmem:[%s1560 + $0x30] sm:$0xff]
    %v1568 = vld [vmem:[%s1560 + $0x38] sm:$0xff]
    %v1569 = vld [vmem:[%s1560 + $0x40] sm:$0xff]
    %v1570 = vld [vmem:[%s1560 + $0x48] sm:$0xff]
    %v1571 = vld [vmem:[%s1560 + $0x50] sm:$0xff]
    %v1572 = vld [vmem:[%s1560 + $0x58] sm:$0xff]
    %v1573 = vld [vmem:[%s1560 + $0x60] sm:$0xff]
    %v1574 = vld [vmem:[%s1560 + $0x68] sm:$0xff]
    %v1575 = vld [vmem:[%s1560 + $0x70] sm:$0xff]
    %v1576 = vld [vmem:[%s1560 + $0x78] sm:$0xff]
    %v1577 = vld [vmem:[%s1560 + $0x80] sm:$0xff]
    %v1578 = vld [vmem:[%s1560 + $0x88] sm:$0xff]
    %v1579 = vld [vmem:[%s1560 + $0x90] sm:$0xff]
    %v1580 = vld [vmem:[%s1560 + $0x98] sm:$0xff]
    %v1581 = vld [vmem:[%s1560 + $0xa0] sm:$0xff]
    %v1582 = vld [vmem:[%s1560 + $0xa8] sm:$0xff]
    %v1583 = vld [vmem:[%s1560 + $0xb0] sm:$0xff]
    %v1584 = vld [vmem:[%s1560 + $0xb8] sm:$0xff]
    %v1585 = vld [vmem:[%s1560 + $0xc0] sm:$0xff]
    %v1586 = vld [vmem:[%s1560 + $0xc8] sm:$0xff]
    %v1587 = vld [vmem:[%s1560 + $0xd0] sm:$0xff]
    %v1588 = vld [vmem:[%s1560 + $0xd8] sm:$0xff]
    %v1589 = vld [vmem:[%s1560 + $0xe0] sm:$0xff]
    %v1590 = vld [vmem:[%s1560 + $0xe8] sm:$0xff]
    %v1591 = vld [vmem:[%s1560 + $0xf0] sm:$0xff]
    %v1592 = vld [vmem:[%s1560 + $0xf8] sm:$0xff]
    %v1625 = vunpack.c.l.b16 %v1561
    %v1626 = vunpack.c.h.b16 %v1561
    %v1627 = vunpack.c.l.b16 %v1562
    %v1628 = vunpack.c.h.b16 %v1562
    %v1629 = vunpack.c.l.b16 %v1563
    %v1630 = vunpack.c.h.b16 %v1563
    %v1631 = vunpack.c.l.b16 %v1564
    %v1632 = vunpack.c.h.b16 %v1564
    %v1633 = vunpack.c.l.b16 %v1565
    %v1634 = vunpack.c.h.b16 %v1565
    %v1635 = vunpack.c.l.b16 %v1566
    %v1636 = vunpack.c.h.b16 %v1566
    %v1637 = vunpack.c.l.b16 %v1567
    %v1638 = vunpack.c.h.b16 %v1567
    %v1639 = vunpack.c.l.b16 %v1568
    %v1640 = vunpack.c.h.b16 %v1568
    %v1641 = vunpack.c.l.b16 %v1569
    %v1642 = vunpack.c.h.b16 %v1569
    %v1643 = vunpack.c.l.b16 %v1570
    %v1644 = vunpack.c.h.b16 %v1570
    %v1645 = vunpack.c.l.b16 %v1571
    %v1646 = vunpack.c.h.b16 %v1571
    %v1647 = vunpack.c.l.b16 %v1572
    %v1648 = vunpack.c.h.b16 %v1572
    %v1649 = vunpack.c.l.b16 %v1573
    %v1650 = vunpack.c.h.b16 %v1573
    %v1651 = vunpack.c.l.b16 %v1574
    %v1652 = vunpack.c.h.b16 %v1574
    %v1653 = vunpack.c.l.b16 %v1575
    %v1654 = vunpack.c.h.b16 %v1575
    %v1655 = vunpack.c.l.b16 %v1576
    %v1656 = vunpack.c.h.b16 %v1576
    %v1657 = vunpack.c.l.b16 %v1577
    %v1658 = vunpack.c.h.b16 %v1577
    %v1659 = vunpack.c.l.b16 %v1578
    %v1660 = vunpack.c.h.b16 %v1578
    %v1661 = vunpack.c.l.b16 %v1579
    %v1662 = vunpack.c.h.b16 %v1579
    %v1663 = vunpack.c.l.b16 %v1580
    %v1664 = vunpack.c.h.b16 %v1580
    %v1665 = vunpack.c.l.b16 %v1581
    %v1666 = vunpack.c.h.b16 %v1581
    %v1667 = vunpack.c.l.b16 %v1582
    %v1668 = vunpack.c.h.b16 %v1582
    %v1669 = vunpack.c.l.b16 %v1583
    %v1670 = vunpack.c.h.b16 %v1583
    %v1671 = vunpack.c.l.b16 %v1584
    %v1672 = vunpack.c.h.b16 %v1584
    %v1673 = vunpack.c.l.b16 %v1585
    %v1674 = vunpack.c.h.b16 %v1585
    %v1675 = vunpack.c.l.b16 %v1586
    %v1676 = vunpack.c.h.b16 %v1586
    %v1677 = vunpack.c.l.b16 %v1587
    %v1678 = vunpack.c.h.b16 %v1587
    %v1679 = vunpack.c.l.b16 %v1588
    %v1680 = vunpack.c.h.b16 %v1588
    %v1681 = vunpack.c.l.b16 %v1589
    %v1682 = vunpack.c.h.b16 %v1589
    %v1683 = vunpack.c.l.b16 %v1590
    %v1684 = vunpack.c.h.b16 %v1590
    %v1685 = vunpack.c.l.b16 %v1591
    %v1686 = vunpack.c.h.b16 %v1591
    %v1687 = vunpack.c.l.b16 %v1592
    %v1688 = vunpack.c.h.b16 %v1592
    %v1689 = vpack.c.b16 %v1629, %v1625
    %v1690 = vpack.c.b16 %v1630, %v1626
    %v1691 = vpack.c.b16 %v1631, %v1627
    %v1692 = vpack.c.b16 %v1632, %v1628
    %v1693 = vpack.c.b16 %v1637, %v1633
    %v1694 = vpack.c.b16 %v1638, %v1634
    %v1695 = vpack.c.b16 %v1639, %v1635
    %v1696 = vpack.c.b16 %v1640, %v1636
    %v1697 = vpack.c.b16 %v1645, %v1641
    %v1698 = vpack.c.b16 %v1646, %v1642
    %v1699 = vpack.c.b16 %v1647, %v1643
    %v1700 = vpack.c.b16 %v1648, %v1644
    %v1701 = vpack.c.b16 %v1653, %v1649
    %v1702 = vpack.c.b16 %v1654, %v1650
    %v1703 = vpack.c.b16 %v1655, %v1651
    %v1704 = vpack.c.b16 %v1656, %v1652
    %v1705 = vpack.c.b16 %v1661, %v1657
    %v1706 = vpack.c.b16 %v1662, %v1658
    %v1707 = vpack.c.b16 %v1663, %v1659
    %v1708 = vpack.c.b16 %v1664, %v1660
    %v1709 = vpack.c.b16 %v1669, %v1665
    %v1710 = vpack.c.b16 %v1670, %v1666
    %v1711 = vpack.c.b16 %v1671, %v1667
    %v1712 = vpack.c.b16 %v1672, %v1668
    %v1713 = vpack.c.b16 %v1677, %v1673
    %v1714 = vpack.c.b16 %v1678, %v1674
    %v1715 = vpack.c.b16 %v1679, %v1675
    %v1716 = vpack.c.b16 %v1680, %v1676
    %v1717 = vpack.c.b16 %v1685, %v1681
    %v1718 = vpack.c.b16 %v1686, %v1682
    %v1719 = vpack.c.b16 %v1687, %v1683
    %v1720 = vpack.c.b16 %v1688, %v1684
    %1753 = vmatprep.subr.bf16.mxu0 %v1690
    %1754 = vmatpush1.bf16.msra.mxu0 %v1689
    %1755 = vmatprep.subr.bf16.mxu0 %v1694
    %1756 = vmatpush1.bf16.msra.mxu0 %v1693
    %1757 = vmatprep.subr.bf16.mxu0 %v1698
    %1758 = vmatpush1.bf16.msra.mxu0 %v1697
    %1759 = vmatprep.subr.bf16.mxu0 %v1702
    %1760 = vmatpush1.bf16.msra.mxu0 %v1701
    %1761 = vmatprep.subr.bf16.mxu0 %v1706
    %1762 = vmatpush1.bf16.msra.mxu0 %v1705
    %1763 = vmatprep.subr.bf16.mxu0 %v1710
    %1764 = vmatpush1.bf16.msra.mxu0 %v1709
    %1765 = vmatprep.subr.bf16.mxu0 %v1714
    %1766 = vmatpush1.bf16.msra.mxu0 %v1713
    %1767 = vmatprep.subr.bf16.mxu0 %v1718
    %1768 = vmatpush1.bf16.msra.mxu0 %v1717
    %1769 = vmatprep.subr.bf16.mxu0 0
    %1770 = vmatpush1.bf16.msra.mxu0 0
    %1771 = vmatprep.subr.bf16.mxu0 0
    %1772 = vmatpush1.bf16.msra.mxu0 0
    %1773 = vmatprep.subr.bf16.mxu0 0
    %1774 = vmatpush1.bf16.msra.mxu0 0
    %1775 = vmatprep.subr.bf16.mxu0 0
    %1776 = vmatpush1.bf16.msra.mxu0 0
    %1777 = vmatprep.subr.bf16.mxu0 0
    %1778 = vmatpush1.bf16.msra.mxu0 0
    %1779 = vmatprep.subr.bf16.mxu0 0
    %1780 = vmatpush1.bf16.msra.mxu0 0
    %1781 = vmatprep.subr.bf16.mxu0 0
    %1782 = vmatpush1.bf16.msra.mxu0 0
    %1783 = vmatprep.subr.bf16.mxu0 0
    %1784 = vmatpush1.bf16.msra.mxu0 0
    %1785 = vmatprep.mubr.bf16.mxu0 0
    %1786 = vmatmul.mubr.bf16.gmra.mrb[0].mxu0 %v1555
    %v1787 = vpop.f32.mrb[0].mxu0
    %v1788 = vadd.f32 0.0, %v1787
    %v1789 = vpop.f32.mrb[0].mxu0
    %v1790 = vadd.f32 0.0, %v1789
    %v1791 = vpop.f32.mrb[0].mxu0
    %v1792 = vpop.f32.mrb[0].mxu0
    %1793 = vdwg.mxu0
    %1794 = vmatprep.subr.bf16.mxu0 %v1692
    %1795 = vmatpush1.bf16.msra.mxu0 %v1691
    %1796 = vmatprep.subr.bf16.mxu0 %v1696
    %1797 = vmatpush1.bf16.msra.mxu0 %v1695
    %1798 = vmatprep.subr.bf16.mxu0 %v1700
    %1799 = vmatpush1.bf16.msra.mxu0 %v1699
    %1800 = vmatprep.subr.bf16.mxu0 %v1704
    %1801 = vmatpush1.bf16.msra.mxu0 %v1703
    %1802 = vmatprep.subr.bf16.mxu0 %v1708
    %1803 = vmatpush1.bf16.msra.mxu0 %v1707
    %1804 = vmatprep.subr.bf16.mxu0 %v1712
    %1805 = vmatpush1.bf16.msra.mxu0 %v1711
    %1806 = vmatprep.subr.bf16.mxu0 %v1716
    %1807 = vmatpush1.bf16.msra.mxu0 %v1715
    %1808 = vmatprep.subr.bf16.mxu0 %v1720
    %1809 = vmatpush1.bf16.msra.mxu0 %v1719
    %1810 = vmatprep.subr.bf16.mxu0 0
    %1811 = vmatpush1.bf16.msra.mxu0 0
    %1812 = vmatprep.subr.bf16.mxu0 0
    %1813 = vmatpush1.bf16.msra.mxu0 0
    %1814 = vmatprep.subr.bf16.mxu0 0
    %1815 = vmatpush1.bf16.msra.mxu0 0
    %1816 = vmatprep.subr.bf16.mxu0 0
    %1817 = vmatpush1.bf16.msra.mxu0 0
    %1818 = vmatprep.subr.bf16.mxu0 0
    %1819 = vmatpush1.bf16.msra.mxu0 0
    %1820 = vmatprep.subr.bf16.mxu0 0
    %1821 = vmatpush1.bf16.msra.mxu0 0
    %1822 = vmatprep.subr.bf16.mxu0 0
    %1823 = vmatpush1.bf16.msra.mxu0 0
    %1824 = vmatprep.subr.bf16.mxu0 0
    %1825 = vmatpush1.bf16.msra.mxu0 0
    %1826 = vmatprep.mubr.bf16.mxu0 0
    %1827 = vmatmul.mubr.bf16.gmra.mrb[0].mxu0 %v1555
    %v1828 = vpop.f32.mrb[0].mxu0
    %v1829 = vadd.f32 0.0, %v1828
    %v1830 = vpop.f32.mrb[0].mxu0
    %v1831 = vadd.f32 0.0, %v1830
    %v1832 = vpop.f32.mrb[0].mxu0
    %v1833 = vpop.f32.mrb[0].mxu0
    %1834 = vdwg.mxu0
    %v1835 = vadd.f32 %v1556, %v1788
    %v1836 = vadd.f32 %v1557, %v1790
    %v1837 = vadd.f32 %v1558, %v1829
    %v1838 = vadd.f32 %v1559, %v1831
    %v1839 = vpack.c.bf16 %v1835, %v1835
    %v1840 = vpack.c.bf16 %v1836, %v1836
    %v1841 = vpack.c.bf16 %v1837, %v1837
    %v1842 = vpack.c.bf16 %v1838, %v1838
    %v1843 = vxor.u32 %v1839, 2147516416
    %v1845 = vmul.bf16 %v1843, 1069105081
    %v1846 = vpow.bf16.pop %v1845
    %v1847 = vadd.bf16 %v1846, 1065369472
    %v1848 = vrcp.bf16.pop %v1847
    %v1849 = vmul.bf16 1065369472, %v1848
    %v1850 = vxor.u32 %v1840, 2147516416
    %v1852 = vmul.bf16 %v1850, 1069105081
    %v1853 = vpow.bf16.pop %v1852
    %v1854 = vadd.bf16 %v1853, 1065369472
    %v1855 = vrcp.bf16.pop %v1854
    %v1856 = vmul.bf16 1065369472, %v1855
    %v1857 = vtanh.bf16.pop %v1841
    %v1858 = vxor.u32 %v1842, 2147516416
    %v1860 = vmul.bf16 %v1858, 1069105081
    %v1861 = vpow.bf16.pop %v1860
    %v1862 = vadd.bf16 %v1861, 1065369472
    %v1863 = vrcp.bf16.pop %v1862
    %v1864 = vmul.bf16 1065369472, %v1863
    %v1865 = vunpack.c.l.bf16 %v1856
    %v1866 = vmul.f32 %v1865, %v1551
    %v1867 = vmul.bf16 %v1849, %v1857
    %v1868 = vunpack.c.l.bf16 %v1867
    %v1869 = vadd.f32 %v1866, %v1868
    %v1870 = vunpack.c.l.bf16 %v1864
    %v1871 = vtanh.pop %v1869
    %v1872 = vmul.f32 %v1870, %v1871
    %v1873 = vmax.f32 %v1872, 0.0
    %1874 = vst [vmem:[#allocation10] sm:$0xff] %v1873
    // Predicated region
    $region34: #{tpu_custom_call.1} parent=1 // pred_check
      _
    $region35: #{tpu_custom_call.1} parent=1 // pred_check_branch
      %1876 = sbr.rel (0) target = $region37
    $region36: #{tpu_custom_call.1} parent=1 // pred_region
      %s1878 = ssub.s32 128, 128
      %1879 = vsyncadd [#allocation4], %s1878
      %s1881 = sshll.u32 [#allocation10], 4
      %s1882 = int_to_ptr.vmem [resolvable:$true] %s1881
      %1884 = dma.vmem_to_hbm [thread:$0]  %s1882, 128, %s4, [#allocation4]
    $region37: #{tpu_custom_call.1} parent=1 // pred_fallthru
      _
    // Predicated region
    $region38: #{tpu_custom_call.1} parent=1 // pred_check
      _
    $region39: #{tpu_custom_call.1} parent=1 // pred_check_branch
      %1886 = sbr.rel (0) target = $region41
    $region40: #{tpu_custom_call.1} parent=1 // pred_region
      %1887 = dma.done [#allocation4], 128
    $region41: #{tpu_custom_call.1} parent=1 // pred_fallthru
      _
    %1888 = vsyncpa [#allocation3], 1
    %1889 = vsyncpa [#allocation6], 1
    %1890 = vsyncpa [#allocation9], 1
    %1891 = vsyncpa [#allocation4], 1

// kernel: tpu_custom_call.1
$region0: #{tpu_custom_call.1}
  #allocation0 [shape = 'u32[]', space=smem, size = 0x4, offset = 0x4, fixed_abs, tag = 'smem constant byte address 0x4 - core index']
  #allocation1 [shape = 'u32[144,128]{1,0:T(1,128)}', space=vmem, size = 0x12000, scoped, tag = 'internal scratch']
  %s0 = inlined_call_operand.hbm [shape: f32[8,64], index: 0, kind: input, shape index: {}]
  %s1 = inlined_call_operand.hbm [shape: bf16[64,2048], index: 1, kind: input, shape index: {}]
  %s2 = inlined_call_operand.hbm [shape: bf16[4,128,512], index: 2, kind: input, shape index: {}]
  %s3 = inlined_call_operand.hbm [shape: f32[1,2048], index: 3, kind: input, shape index: {}]
  %s4 = inlined_call_operand.hbm [shape: f32[8,128], index: 4, kind: output, shape index: {}]
  %s5 = sld [smem:[#allocation0]]
  $region42: #{tpu_custom_call.1} parent=0
    _
  %s7 = ssub.s32 1, %s5
  %s8 = scalar_select 0, %s7, %s5
  $region1: #{tpu_custom_call.1} parent=0
    #allocation2 [shape = 'u8[4096]{0}', space=vmem, size = 0x1000, scoped, tag = 'input window, operand 0, single buffered']
    #allocation3 [shape = 's32[1]{0}', space=sflag, size = 0x4, scoped, tag = 'scoped memory for tpu_custom_call.1']
    #allocation4 [shape = 's32[1]{0}', space=sflag, size = 0x4, scoped, tag = 'scoped memory for tpu_custom_call.1']
    #allocation5 [shape = 'u8[262144]{0}', space=vmem, size = 0x40000, scoped, tag = 'input window, operand 1, single buffered']
    #allocation6 [shape = 's32[1]{0}', space=sflag, size = 0x4, scoped, tag = 'scoped memory for tpu_custom_call.1']
    #allocation7 [shape = 'u8[524288]{0}', space=vmem, size = 0x80000, scoped, tag = 'input window, operand 2, single buffered']
    #allocation8 [shape = 'u8[8192]{0}', space=vmem, size = 0x2000, scoped, tag = 'input window, operand 3, single buffered']
    #allocation9 [shape = 's32[1]{0}', space=sflag, size = 0x4, scoped, tag = 'scoped memory for tpu_custom_call.1']
    #allocation10 [shape = 'u8[4096]{0}', space=vmem, size = 0x1000, scoped, tag = 'output window, operand 0, single buffered']
    %9 = vsyncpa [#allocation3], 0
    %10 = vsyncpa [#allocation6], 0
    %11 = vsyncpa [#allocation9], 0
    %12 = vsyncpa [#allocation4], 0
    // Predicated region
    $region2: #{tpu_custom_call.1} parent=1 // pred_check
      _
    $region3: #{tpu_custom_call.1} parent=1 // pred_check_branch
      %14 = sbr.rel (0) target = $region5
    $region4: #{tpu_custom_call.1} parent=1 // pred_region
      %s16 = ssub.s32 128, 128
      %17 = vsyncadd [#allocation3], %s16
      %s19 = sshll.u32 [#allocation2], 4
      %s20 = int_to_ptr.vmem [resolvable:$true] %s19
      %22 = dma.hbm_to_vmem [thread:$0]  %s0, 128, %s20, [#allocation3]
    $region5: #{tpu_custom_call.1} parent=1 // pred_fallthru
      _
    // Predicated region
    $region6: #{tpu_custom_call.1} parent=1 // pred_check
      _
    $region7: #{tpu_custom_call.1} parent=1 // pred_check_branch
      %24 = sbr.rel (0) target = $region9
    $region8: #{tpu_custom_call.1} parent=1 // pred_region
      %s26 = ssub.s32 8192, 8192
      %27 = vsyncadd [#allocation6], %s26
      %s28 = sshll.u32 [#allocation5], 4
      %s29 = int_to_ptr.vmem [resolvable:$true] %s28
      %34 = dma.hbm_to_vmem [thread:$0]  %s1, 8192, %s29, [#allocation6], 1024, 1024, 64
    $region9: #{tpu_custom_call.1} parent=1 // pred_fallthru
      _
    // Predicated region
    $region10: #{tpu_custom_call.1} parent=1 // pred_check
      _
    $region11: #{tpu_custom_call.1} parent=1 // pred_check_branch
      %36 = sbr.rel (0) target = $region13
    $region12: #{tpu_custom_call.1} parent=1 // pred_region
      %s38 = ssub.s32 16384, 16384
      %39 = vsyncadd [#allocation6], %s38
      %s40 = sshll.u32 [#allocation7], 4
      %s41 = int_to_ptr.vmem [resolvable:$true] %s40
      %46 = dma.hbm_to_vmem [thread:$0]  %s2, 16384, %s41, [#allocation6], 256, 256, 16
    $region13: #{tpu_custom_call.1} parent=1 // pred_fallthru
      _
    // Predicated region
    $region14: #{tpu_custom_call.1} parent=1 // pred_check
      _
    $region15: #{tpu_custom_call.1} parent=1 // pred_check_branch
      %48 = sbr.rel (0) target = $region17
    $region16: #{tpu_custom_call.1} parent=1 // pred_region
      %s50 = ssub.s32 256, 256
      %51 = vsyncadd [#allocation9], %s50
      %s53 = sshll.u32 [#allocation8], 4
      %s54 = int_to_ptr.vmem [resolvable:$true] %s53
      %56 = dma.hbm_to_vmem [thread:$0]  %s3, 256, %s54, [#allocation9]
    $region17: #{tpu_custom_call.1} parent=1 // pred_fallthru
      _
    // Predicated region
    $region18: #{tpu_custom_call.1} parent=1 // pred_check
      _
    $region19: #{tpu_custom_call.1} parent=1 // pred_check_branch
      %58 = sbr.rel (0) target = $region21
    $region20: #{tpu_custom_call.1} parent=1 // pred_region
      %59 = dma.done [#allocation3], 128
    $region21: #{tpu_custom_call.1} parent=1 // pred_fallthru
      _
    // Predicated region
    $region22: #{tpu_custom_call.1} parent=1 // pred_check
      _
    $region23: #{tpu_custom_call.1} parent=1 // pred_check_branch
      %61 = sbr.rel (0) target = $region25
    $region24: #{tpu_custom_call.1} parent=1 // pred_region
      %62 = dma.done [#allocation6], 8192
    $region25: #{tpu_custom_call.1} parent=1 // pred_fallthru
      _
    // Predicated region
    $region26: #{tpu_custom_call.1} parent=1 // pred_check
      _
    $region27: #{tpu_custom_call.1} parent=1 // pred_check_branch
      %64 = sbr.rel (0) target = $region29
    $region28: #{tpu_custom_call.1} parent=1 // pred_region
      %65 = dma.done [#allocation6], 16384
    $region29: #{tpu_custom_call.1} parent=1 // pred_fallthru
      _
    // Predicated region
    $region30: #{tpu_custom_call.1} parent=1 // pred_check
      _
    $region31: #{tpu_custom_call.1} parent=1 // pred_check_branch
      %67 = sbr.rel (0) target = $region33
    $region32: #{tpu_custom_call.1} parent=1 // pred_region
      %68 = dma.done [#allocation9], 256
    $region33: #{tpu_custom_call.1} parent=1 // pred_fallthru
      _
    %v71 = vld [vmem:[#allocation2] sm:$0xff]
    %v72 = vpack.c.bf16 %v71, %v71
    %v73 = vld [vmem:[#allocation5] sm:$0xff]
    %v74 = vld [vmem:[#allocation5 + $0x8] sm:$0xff]
    %v75 = vld [vmem:[#allocation5 + $0x10] sm:$0xff]
    %v76 = vld [vmem:[#allocation5 + $0x18] sm:$0xff]
    %v77 = vld [vmem:[#allocation5 + $0x20] sm:$0xff]
    %v78 = vld [vmem:[#allocation5 + $0x28] sm:$0xff]
    %v79 = vld [vmem:[#allocation5 + $0x30] sm:$0xff]
    %v80 = vld [vmem:[#allocation5 + $0x38] sm:$0xff]
    %v81 = vld [vmem:[#allocation5 + $0x40] sm:$0xff]
    %v82 = vld [vmem:[#allocation5 + $0x48] sm:$0xff]
    %v83 = vld [vmem:[#allocation5 + $0x50] sm:$0xff]
    %v84 = vld [vmem:[#allocation5 + $0x58] sm:$0xff]
    %v85 = vld [vmem:[#allocation5 + $0x60] sm:$0xff]
    %v86 = vld [vmem:[#allocation5 + $0x68] sm:$0xff]
    %v87 = vld [vmem:[#allocation5 + $0x70] sm:$0xff]
    %v88 = vld [vmem:[#allocation5 + $0x78] sm:$0xff]
    %v89 = vld [vmem:[#allocation5 + $0x80] sm:$0xff]
    %v90 = vld [vmem:[#allocation5 + $0x88] sm:$0xff]
    %v91 = vld [vmem:[#allocation5 + $0x90] sm:$0xff]
    %v92 = vld [vmem:[#allocation5 + $0x98] sm:$0xff]
    %v93 = vld [vmem:[#allocation5 + $0xa0] sm:$0xff]
    %v94 = vld [vmem:[#allocation5 + $0xa8] sm:$0xff]
    %v95 = vld [vmem:[#allocation5 + $0xb0] sm:$0xff]
    %v96 = vld [vmem:[#allocation5 + $0xb8] sm:$0xff]
    %v97 = vld [vmem:[#allocation5 + $0xc0] sm:$0xff]
    %v98 = vld [vmem:[#allocation5 + $0xc8] sm:$0xff]
    %v99 = vld [vmem:[#allocation5 + $0xd0] sm:$0xff]
    %v100 = vld [vmem:[#allocation5 + $0xd8] sm:$0xff]
    %v101 = vld [vmem:[#allocation5 + $0xe0] sm:$0xff]
    %v102 = vld [vmem:[#allocation5 + $0xe8] sm:$0xff]
    %v103 = vld [vmem:[#allocation5 + $0xf0] sm:$0xff]
    %v104 = vld [vmem:[#allocation5 + $0xf8] sm:$0xff]
    %v105 = vld [vmem:[#allocation5 + $0x100] sm:$0xff]
    %v106 = vld [vmem:[#allocation5 + $0x108] sm:$0xff]
    %v107 = vld [vmem:[#allocation5 + $0x110] sm:$0xff]
    %v108 = vld [vmem:[#allocation5 + $0x118] sm:$0xff]
    %v109 = vld [vmem:[#allocation5 + $0x120] sm:$0xff]
    %v110 = vld [vmem:[#allocation5 + $0x128] sm:$0xff]
    %v111 = vld [vmem:[#allocation5 + $0x130] sm:$0xff]
    %v112 = vld [vmem:[#allocation5 + $0x138] sm:$0xff]
    %v113 = vld [vmem:[#allocation5 + $0x140] sm:$0xff]
    %v114 = vld [vmem:[#allocation5 + $0x148] sm:$0xff]
    %v115 = vld [vmem:[#allocation5 + $0x150] sm:$0xff]
    %v116 = vld [vmem:[#allocation5 + $0x158] sm:$0xff]
    %v117 = vld [vmem:[#allocation5 + $0x160] sm:$0xff]
    %v118 = vld [vmem:[#allocation5 + $0x168] sm:$0xff]
    %v119 = vld [vmem:[#allocation5 + $0x170] sm:$0xff]
    %v120 = vld [vmem:[#allocation5 + $0x178] sm:$0xff]
    %v121 = vld [vmem:[#allocation5 + $0x180] sm:$0xff]
    %v122 = vld [vmem:[#allocation5 + $0x188] sm:$0xff]
    %v123 = vld [vmem:[#allocation5 + $0x190] sm:$0xff]
    %v124 = vld [vmem:[#allocation5 + $0x198] sm:$0xff]
    %v125 = vld [vmem:[#allocation5 + $0x1a0] sm:$0xff]
    %v126 = vld [vmem:[#allocation5 + $0x1a8] sm:$0xff]
    %v127 = vld [vmem:[#allocation5 + $0x1b0] sm:$0xff]
    %v128 = vld [vmem:[#allocation5 + $0x1b8] sm:$0xff]
    %v129 = vld [vmem:[#allocation5 + $0x1c0] sm:$0xff]
    %v130 = vld [vmem:[#allocation5 + $0x1c8] sm:$0xff]
    %v131 = vld [vmem:[#allocation5 + $0x1d0] sm:$0xff]
    %v132 = vld [vmem:[#allocation5 + $0x1d8] sm:$0xff]
    %v133 = vld [vmem:[#allocation5 + $0x1e0] sm:$0xff]
    %v134 = vld [vmem:[#allocation5 + $0x1e8] sm:$0xff]
    %v135 = vld [vmem:[#allocation5 + $0x1f0] sm:$0xff]
    %v136 = vld [vmem:[#allocation5 + $0x1f8] sm:$0xff]
    %v137 = vld [vmem:[#allocation8] sm:$0xff]
    %v138 = vld [vmem:[#allocation8 + $0x8] sm:$0xff]
    %v141 = vlaneseq
    %v142 = vshrl.u32 %v141, 7
    %v143 = vsub.s32 0, %v142
    %v144 = vrot.slane %v137, %v143
    %v145 = vlaneseq
    %v146 = vshrl.u32 %v145, 7
    %v147 = vsub.s32 1, %v146
    %v148 = vrot.slane %v137, %v147
    %v149 = vlaneseq
    %v150 = vshrl.u32 %v149, 7
    %v151 = vsub.s32 2, %v150
    %v152 = vrot.slane %v137, %v151
    %v153 = vlaneseq
    %v154 = vshrl.u32 %v153, 7
    %v155 = vsub.s32 3, %v154
    %v156 = vrot.slane %v137, %v155
    %v157 = vlaneseq
    %v158 = vshrl.u32 %v157, 7
    %v159 = vsub.s32 4, %v158
    %v160 = vrot.slane %v137, %v159
    %v161 = vlaneseq
    %v162 = vshrl.u32 %v161, 7
    %v163 = vsub.s32 5, %v162
    %v164 = vrot.slane %v137, %v163
    %v165 = vlaneseq
    %v166 = vshrl.u32 %v165, 7
    %v167 = vsub.s32 6, %v166
    %v168 = vrot.slane %v137, %v167
    %v169 = vlaneseq
    %v170 = vshrl.u32 %v169, 7
    %v171 = vsub.s32 7, %v170
    %v172 = vrot.slane %v137, %v171
    %v173 = vlaneseq
    %v174 = vshrl.u32 %v173, 7
    %v175 = vsub.s32 0, %v174
    %v176 = vrot.slane %v138, %v175
    %v177 = vlaneseq
    %v178 = vshrl.u32 %v177, 7
    %v179 = vsub.s32 1, %v178
    %v180 = vrot.slane %v138, %v179
    %v181 = vlaneseq
    %v182 = vshrl.u32 %v181, 7
    %v183 = vsub.s32 2, %v182
    %v184 = vrot.slane %v138, %v183
    %v185 = vlaneseq
    %v186 = vshrl.u32 %v185, 7
    %v187 = vsub.s32 3, %v186
    %v188 = vrot.slane %v138, %v187
    %v189 = vlaneseq
    %v190 = vshrl.u32 %v189, 7
    %v191 = vsub.s32 4, %v190
    %v192 = vrot.slane %v138, %v191
    %v193 = vlaneseq
    %v194 = vshrl.u32 %v193, 7
    %v195 = vsub.s32 5, %v194
    %v196 = vrot.slane %v138, %v195
    %v197 = vlaneseq
    %v198 = vshrl.u32 %v197, 7
    %v199 = vsub.s32 6, %v198
    %v200 = vrot.slane %v138, %v199
    %v201 = vlaneseq
    %v202 = vshrl.u32 %v201, 7
    %v203 = vsub.s32 7, %v202
    %v204 = vrot.slane %v138, %v203
    %v285 = vunpack.c.l.b16 %v73
    %v286 = vunpack.c.h.b16 %v73
    %v287 = vunpack.c.l.b16 %v74
    %v288 = vunpack.c.h.b16 %v74
    %v289 = vunpack.c.l.b16 %v75
    %v290 = vunpack.c.h.b16 %v75
    %v291 = vunpack.c.l.b16 %v76
    %v292 = vunpack.c.h.b16 %v76
    %v293 = vunpack.c.l.b16 %v77
    %v294 = vunpack.c.h.b16 %v77
    %v295 = vunpack.c.l.b16 %v78
    %v296 = vunpack.c.h.b16 %v78
    %v297 = vunpack.c.l.b16 %v79
    %v298 = vunpack.c.h.b16 %v79
    %v299 = vunpack.c.l.b16 %v80
    %v300 = vunpack.c.h.b16 %v80
    %v301 = vunpack.c.l.b16 %v81
    %v302 = vunpack.c.h.b16 %v81
    %v303 = vunpack.c.l.b16 %v82
    %v304 = vunpack.c.h.b16 %v82
    %v305 = vunpack.c.l.b16 %v83
    %v306 = vunpack.c.h.b16 %v83
    %v307 = vunpack.c.l.b16 %v84
    %v308 = vunpack.c.h.b16 %v84
    %v309 = vunpack.c.l.b16 %v85
    %v310 = vunpack.c.h.b16 %v85
    %v311 = vunpack.c.l.b16 %v86
    %v312 = vunpack.c.h.b16 %v86
    %v313 = vunpack.c.l.b16 %v87
    %v314 = vunpack.c.h.b16 %v87
    %v315 = vunpack.c.l.b16 %v88
    %v316 = vunpack.c.h.b16 %v88
    %v317 = vunpack.c.l.b16 %v89
    %v318 = vunpack.c.h.b16 %v89
    %v319 = vunpack.c.l.b16 %v90
    %v320 = vunpack.c.h.b16 %v90
    %v321 = vunpack.c.l.b16 %v91
    %v322 = vunpack.c.h.b16 %v91
    %v323 = vunpack.c.l.b16 %v92
    %v324 = vunpack.c.h.b16 %v92
    %v325 = vunpack.c.l.b16 %v93
    %v326 = vunpack.c.h.b16 %v93
    %v327 = vunpack.c.l.b16 %v94
    %v328 = vunpack.c.h.b16 %v94
    %v329 = vunpack.c.l.b16 %v95
    %v330 = vunpack.c.h.b16 %v95
    %v331 = vunpack.c.l.b16 %v96
    %v332 = vunpack.c.h.b16 %v96
    %v333 = vunpack.c.l.b16 %v97
    %v334 = vunpack.c.h.b16 %v97
    %v335 = vunpack.c.l.b16 %v98
    %v336 = vunpack.c.h.b16 %v98
    %v337 = vunpack.c.l.b16 %v99
    %v338 = vunpack.c.h.b16 %v99
    %v339 = vunpack.c.l.b16 %v100
    %v340 = vunpack.c.h.b16 %v100
    %v341 = vunpack.c.l.b16 %v101
    %v342 = vunpack.c.h.b16 %v101
    %v343 = vunpack.c.l.b16 %v102
    %v344 = vunpack.c.h.b16 %v102
    %v345 = vunpack.c.l.b16 %v103
    %v346 = vunpack.c.h.b16 %v103
    %v347 = vunpack.c.l.b16 %v104
    %v348 = vunpack.c.h.b16 %v104
    %v349 = vunpack.c.l.b16 %v105
    %v350 = vunpack.c.h.b16 %v105
    %v351 = vunpack.c.l.b16 %v106
    %v352 = vunpack.c.h.b16 %v106
    %v353 = vunpack.c.l.b16 %v107
    %v354 = vunpack.c.h.b16 %v107
    %v355 = vunpack.c.l.b16 %v108
    %v356 = vunpack.c.h.b16 %v108
    %v357 = vunpack.c.l.b16 %v109
    %v358 = vunpack.c.h.b16 %v109
    %v359 = vunpack.c.l.b16 %v110
    %v360 = vunpack.c.h.b16 %v110
    %v361 = vunpack.c.l.b16 %v111
    %v362 = vunpack.c.h.b16 %v111
    %v363 = vunpack.c.l.b16 %v112
    %v364 = vunpack.c.h.b16 %v112
    %v365 = vunpack.c.l.b16 %v113
    %v366 = vunpack.c.h.b16 %v113
    %v367 = vunpack.c.l.b16 %v114
    %v368 = vunpack.c.h.b16 %v114
    %v369 = vunpack.c.l.b16 %v115
    %v370 = vunpack.c.h.b16 %v115
    %v371 = vunpack.c.l.b16 %v116
    %v372 = vunpack.c.h.b16 %v116
    %v373 = vunpack.c.l.b16 %v117
    %v374 = vunpack.c.h.b16 %v117
    %v375 = vunpack.c.l.b16 %v118
    %v376 = vunpack.c.h.b16 %v118
    %v377 = vunpack.c.l.b16 %v119
    %v378 = vunpack.c.h.b16 %v119
    %v379 = vunpack.c.l.b16 %v120
    %v380 = vunpack.c.h.b16 %v120
    %v381 = vunpack.c.l.b16 %v121
    %v382 = vunpack.c.h.b16 %v121
    %v383 = vunpack.c.l.b16 %v122
    %v384 = vunpack.c.h.b16 %v122
    %v385 = vunpack.c.l.b16 %v123
    %v386 = vunpack.c.h.b16 %v123
    %v387 = vunpack.c.l.b16 %v124
    %v388 = vunpack.c.h.b16 %v124
    %v389 = vunpack.c.l.b16 %v125
    %v390 = vunpack.c.h.b16 %v125
    %v391 = vunpack.c.l.b16 %v126
    %v392 = vunpack.c.h.b16 %v126
    %v393 = vunpack.c.l.b16 %v127
    %v394 = vunpack.c.h.b16 %v127
    %v395 = vunpack.c.l.b16 %v128
    %v396 = vunpack.c.h.b16 %v128
    %v397 = vunpack.c.l.b16 %v129
    %v398 = vunpack.c.h.b16 %v129
    %v399 = vunpack.c.l.b16 %v130
    %v400 = vunpack.c.h.b16 %v130
    %v401 = vunpack.c.l.b16 %v131
    %v402 = vunpack.c.h.b16 %v131
    %v403 = vunpack.c.l.b16 %v132
    %v404 = vunpack.c.h.b16 %v132
    %v405 = vunpack.c.l.b16 %v133
    %v406 = vunpack.c.h.b16 %v133
    %v407 = vunpack.c.l.b16 %v134
    %v408 = vunpack.c.h.b16 %v134
    %v409 = vunpack.c.l.b16 %v135
    %v410 = vunpack.c.h.b16 %v135
    %v411 = vunpack.c.l.b16 %v136
    %v412 = vunpack.c.h.b16 %v136
    %v413 = vpack.c.b16 %v301, %v285
    %v414 = vpack.c.b16 %v302, %v286
    %v415 = vpack.c.b16 %v303, %v287
    %v416 = vpack.c.b16 %v304, %v288
    %v417 = vpack.c.b16 %v305, %v289
    %v418 = vpack.c.b16 %v306, %v290
    %v419 = vpack.c.b16 %v307, %v291
    %v420 = vpack.c.b16 %v308, %v292
    %v421 = vpack.c.b16 %v309, %v293
    %v422 = vpack.c.b16 %v310, %v294
    %v423 = vpack.c.b16 %v311, %v295
    %v424 = vpack.c.b16 %v312, %v296
    %v425 = vpack.c.b16 %v313, %v297
    %v426 = vpack.c.b16 %v314, %v298
    %v427 = vpack.c.b16 %v315, %v299
    %v428 = vpack.c.b16 %v316, %v300
    %v429 = vpack.c.b16 %v333, %v317
    %v430 = vpack.c.b16 %v334, %v318
    %v431 = vpack.c.b16 %v335, %v319
    %v432 = vpack.c.b16 %v336, %v320
    %v433 = vpack.c.b16 %v337, %v321
    %v434 = vpack.c.b16 %v338, %v322
    %v435 = vpack.c.b16 %v339, %v323
    %v436 = vpack.c.b16 %v340, %v324
    %v437 = vpack.c.b16 %v341, %v325
    %v438 = vpack.c.b16 %v342, %v326
    %v439 = vpack.c.b16 %v343, %v327
    %v440 = vpack.c.b16 %v344, %v328
    %v441 = vpack.c.b16 %v345, %v329
    %v442 = vpack.c.b16 %v346, %v330
    %v443 = vpack.c.b16 %v347, %v331
    %v444 = vpack.c.b16 %v348, %v332
    %v445 = vpack.c.b16 %v365, %v349
    %v446 = vpack.c.b16 %v366, %v350
    %v447 = vpack.c.b16 %v367, %v351
    %v448 = vpack.c.b16 %v368, %v352
    %v449 = vpack.c.b16 %v369, %v353
    %v450 = vpack.c.b16 %v370, %v354
    %v451 = vpack.c.b16 %v371, %v355
    %v452 = vpack.c.b16 %v372, %v356
    %v453 = vpack.c.b16 %v373, %v357
    %v454 = vpack.c.b16 %v374, %v358
    %v455 = vpack.c.b16 %v375, %v359
    %v456 = vpack.c.b16 %v376, %v360
    %v457 = vpack.c.b16 %v377, %v361
    %v458 = vpack.c.b16 %v378, %v362
    %v459 = vpack.c.b16 %v379, %v363
    %v460 = vpack.c.b16 %v380, %v364
    %v461 = vpack.c.b16 %v397, %v381
    %v462 = vpack.c.b16 %v398, %v382
    %v463 = vpack.c.b16 %v399, %v383
    %v464 = vpack.c.b16 %v400, %v384
    %v465 = vpack.c.b16 %v401, %v385
    %v466 = vpack.c.b16 %v402, %v386
    %v467 = vpack.c.b16 %v403, %v387
    %v468 = vpack.c.b16 %v404, %v388
    %v469 = vpack.c.b16 %v405, %v389
    %v470 = vpack.c.b16 %v406, %v390
    %v471 = vpack.c.b16 %v407, %v391
    %v472 = vpack.c.b16 %v408, %v392
    %v473 = vpack.c.b16 %v409, %v393
    %v474 = vpack.c.b16 %v410, %v394
    %v475 = vpack.c.b16 %v411, %v395
    %v476 = vpack.c.b16 %v412, %v396
    %vm541 = vcmask 523264
    %v543 = vsel %vm541, %v72, 0
    %545 = vmatprep.subr.bf16.mxu0 %v414
    %546 = vmatpush1.bf16.msra.mxu0 %v413
    %547 = vmatprep.subr.bf16.mxu0 %v430
    %548 = vmatpush1.bf16.msra.mxu0 %v429
    %549 = vmatprep.subr.bf16.mxu0 %v446
    %550 = vmatpush1.bf16.msra.mxu0 %v445
    %551 = vmatprep.subr.bf16.mxu0 %v462
    %552 = vmatpush1.bf16.msra.mxu0 %v461
    %553 = vmatprep.subr.bf16.mxu0 0
    %554 = vmatpush1.bf16.msra.mxu0 0
    %555 = vmatprep.subr.bf16.mxu0 0
    %556 = vmatpush1.bf16.msra.mxu0 0
    %557 = vmatprep.subr.bf16.mxu0 0
    %558 = vmatpush1.bf16.msra.mxu0 0
    %559 = vmatprep.subr.bf16.mxu0 0
    %560 = vmatpush1.bf16.msra.mxu0 0
    %561 = vmatprep.subr.bf16.mxu0 0
    %562 = vmatpush1.bf16.msra.mxu0 0
    %563 = vmatprep.subr.bf16.mxu0 0
    %564 = vmatpush1.bf16.msra.mxu0 0
    %565 = vmatprep.subr.bf16.mxu0 0
    %566 = vmatpush1.bf16.msra.mxu0 0
    %567 = vmatprep.subr.bf16.mxu0 0
    %568 = vmatpush1.bf16.msra.mxu0 0
    %569 = vmatprep.subr.bf16.mxu0 0
    %570 = vmatpush1.bf16.msra.mxu0 0
    %571 = vmatprep.subr.bf16.mxu0 0
    %572 = vmatpush1.bf16.msra.mxu0 0
    %573 = vmatprep.subr.bf16.mxu0 0
    %574 = vmatpush1.bf16.msra.mxu0 0
    %575 = vmatprep.subr.bf16.mxu0 0
    %576 = vmatpush1.bf16.msra.mxu0 0
    %577 = vmatprep.mubr.bf16.mxu0 0
    %578 = vmatmul.mubr.bf16.gmra.mrb[0].mxu0 %v543
    %v579 = vpop.f32.mrb[0].mxu0
    %v580 = vadd.f32 %v144, %v579
    %v581 = vpop.f32.mrb[0].mxu0
    %v582 = vadd.f32 %v148, %v581
    %v583 = vpop.f32.mrb[0].mxu0
    %v584 = vpop.f32.mrb[0].mxu0
    %585 = vdwg.mxu0
    %586 = vmatprep.subr.bf16.mxu0 %v416
    %587 = vmatpush1.bf16.msra.mxu0 %v415
    %588 = vmatprep.subr.bf16.mxu0 %v432
    %589 = vmatpush1.bf16.msra.mxu0 %v431
    %590 = vmatprep.subr.bf16.mxu0 %v448
    %591 = vmatpush1.bf16.msra.mxu0 %v447
    %592 = vmatprep.subr.bf16.mxu0 %v464
    %593 = vmatpush1.bf16.msra.mxu0 %v463
    %594 = vmatprep.subr.bf16.mxu0 0
    %595 = vmatpush1.bf16.msra.mxu0 0
    %596 = vmatprep.subr.bf16.mxu0 0
    %597 = vmatpush1.bf16.msra.mxu0 0
    %598 = vmatprep.subr.bf16.mxu0 0
    %599 = vmatpush1.bf16.msra.mxu0 0
    %600 = vmatprep.subr.bf16.mxu0 0
    %601 = vmatpush1.bf16.msra.mxu0 0
    %602 = vmatprep.subr.bf16.mxu0 0
    %603 = vmatpush1.bf16.msra.mxu0 0
    %604 = vmatprep.subr.bf16.mxu0 0
    %605 = vmatpush1.bf16.msra.mxu0 0
    %606 = vmatprep.subr.bf16.mxu0 0
    %607 = vmatpush1.bf16.msra.mxu0 0
    %608 = vmatprep.subr.bf16.mxu0 0
    %609 = vmatpush1.bf16.msra.mxu0 0
    %610 = vmatprep.subr.bf16.mxu0 0
    %611 = vmatpush1.bf16.msra.mxu0 0
    %612 = vmatprep.subr.bf16.mxu0 0
    %613 = vmatpush1.bf16.msra.mxu0 0
    %614 = vmatprep.subr.bf16.mxu0 0
    %615 = vmatpush1.bf16.msra.mxu0 0
    %616 = vmatprep.subr.bf16.mxu0 0
    %617 = vmatpush1.bf16.msra.mxu0 0
    %618 = vmatprep.mubr.bf16.mxu0 0
    %619 = vmatmul.mubr.bf16.gmra.mrb[0].mxu0 %v543
    %v620 = vpop.f32.mrb[0].mxu0
    %v621 = vadd.f32 %v152, %v620
    %v622 = vpop.f32.mrb[0].mxu0
    %v623 = vadd.f32 %v156, %v622
    %v624 = vpop.f32.mrb[0].mxu0
    %v625 = vpop.f32.mrb[0].mxu0
    %626 = vdwg.mxu0
    %627 = vmatprep.subr.bf16.mxu0 %v418
    %628 = vmatpush1.bf16.msra.mxu0 %v417
    %629 = vmatprep.subr.bf16.mxu0 %v434
    %630 = vmatpush1.bf16.msra.mxu0 %v433
    %631 = vmatprep.subr.bf16.mxu0 %v450
    %632 = vmatpush1.bf16.msra.mxu0 %v449
    %633 = vmatprep.subr.bf16.mxu0 %v466
    %634 = vmatpush1.bf16.msra.mxu0 %v465
    %635 = vmatprep.subr.bf16.mxu0 0
    %636 = vmatpush1.bf16.msra.mxu0 0
    %637 = vmatprep.subr.bf16.mxu0 0
    %638 = vmatpush1.bf16.msra.mxu0 0
    %639 = vmatprep.subr.bf16.mxu0 0
    %640 = vmatpush1.bf16.msra.mxu0 0
    %641 = vmatprep.subr.bf16.mxu0 0
    %642 = vmatpush1.bf16.msra.mxu0 0
    %643 = vmatprep.subr.bf16.mxu0 0
    %644 = vmatpush1.bf16.msra.mxu0 0
    %645 = vmatprep.subr.bf16.mxu0 0
    %646 = vmatpush1.bf16.msra.mxu0 0
    %647 = vmatprep.subr.bf16.mxu0 0
    %648 = vmatpush1.bf16.msra.mxu0 0
    %649 = vmatprep.subr.bf16.mxu0 0
    %650 = vmatpush1.bf16.msra.mxu0 0
    %651 = vmatprep.subr.bf16.mxu0 0
    %652 = vmatpush1.bf16.msra.mxu0 0
    %653 = vmatprep.subr.bf16.mxu0 0
    %654 = vmatpush1.bf16.msra.mxu0 0
    %655 = vmatprep.subr.bf16.mxu0 0
    %656 = vmatpush1.bf16.msra.mxu0 0
    %657 = vmatprep.subr.bf16.mxu0 0
    %658 = vmatpush1.bf16.msra.mxu0 0
    %659 = vmatprep.mubr.bf16.mxu0 0
    %660 = vmatmul.mubr.bf16.gmra.mrb[0].mxu0 %v543
    %v661 = vpop.f32.mrb[0].mxu0
    %v662 = vadd.f32 %v160, %v661
    %v663 = vpop.f32.mrb[0].mxu0
    %v664 = vadd.f32 %v164, %v663
    %v665 = vpop.f32.mrb[0].mxu0
    %v666 = vpop.f32.mrb[0].mxu0
    %667 = vdwg.mxu0
    %668 = vmatprep.subr.bf16.mxu0 %v420
    %669 = vmatpush1.bf16.msra.mxu0 %v419
    %670 = vmatprep.subr.bf16.mxu0 %v436
    %671 = vmatpush1.bf16.msra.mxu0 %v435
    %672 = vmatprep.subr.bf16.mxu0 %v452
    %673 = vmatpush1.bf16.msra.mxu0 %v451
    %674 = vmatprep.subr.bf16.mxu0 %v468
    %675 = vmatpush1.bf16.msra.mxu0 %v467
    %676 = vmatprep.subr.bf16.mxu0 0
    %677 = vmatpush1.bf16.msra.mxu0 0
    %678 = vmatprep.subr.bf16.mxu0 0
    %679 = vmatpush1.bf16.msra.mxu0 0
    %680 = vmatprep.subr.bf16.mxu0 0
    %681 = vmatpush1.bf16.msra.mxu0 0
    %682 = vmatprep.subr.bf16.mxu0 0
    %683 = vmatpush1.bf16.msra.mxu0 0
    %684 = vmatprep.subr.bf16.mxu0 0
    %685 = vmatpush1.bf16.msra.mxu0 0
    %686 = vmatprep.subr.bf16.mxu0 0
    %687 = vmatpush1.bf16.msra.mxu0 0
    %688 = vmatprep.subr.bf16.mxu0 0
    %689 = vmatpush1.bf16.msra.mxu0 0
    %690 = vmatprep.subr.bf16.mxu0 0
    %691 = vmatpush1.bf16.msra.mxu0 0
    %692 = vmatprep.subr.bf16.mxu0 0
    %693 = vmatpush1.bf16.msra.mxu0 0
    %694 = vmatprep.subr.bf16.mxu0 0
    %695 = vmatpush1.bf16.msra.mxu0 0
    %696 = vmatprep.subr.bf16.mxu0 0
    %697 = vmatpush1.bf16.msra.mxu0 0
    %698 = vmatprep.subr.bf16.mxu0 0
    %699 = vmatpush1.bf16.msra.mxu0 0
    %700 = vmatprep.mubr.bf16.mxu0 0
    %701 = vmatmul.mubr.bf16.gmra.mrb[0].mxu0 %v543
    %v702 = vpop.f32.mrb[0].mxu0
    %v703 = vadd.f32 %v168, %v702
    %v704 = vpop.f32.mrb[0].mxu0
    %v705 = vadd.f32 %v172, %v704
    %v706 = vpop.f32.mrb[0].mxu0
    %v707 = vpop.f32.mrb[0].mxu0
    %708 = vdwg.mxu0
    %709 = vmatprep.subr.bf16.mxu0 %v422
    %710 = vmatpush1.bf16.msra.mxu0 %v421
    %711 = vmatprep.subr.bf16.mxu0 %v438
    %712 = vmatpush1.bf16.msra.mxu0 %v437
    %713 = vmatprep.subr.bf16.mxu0 %v454
    %714 = vmatpush1.bf16.msra.mxu0 %v453
    %715 = vmatprep.subr.bf16.mxu0 %v470
    %716 = vmatpush1.bf16.msra.mxu0 %v469
    %717 = vmatprep.subr.bf16.mxu0 0
    %718 = vmatpush1.bf16.msra.mxu0 0
    %719 = vmatprep.subr.bf16.mxu0 0
    %720 = vmatpush1.bf16.msra.mxu0 0
    %721 = vmatprep.subr.bf16.mxu0 0
    %722 = vmatpush1.bf16.msra.mxu0 0
    %723 = vmatprep.subr.bf16.mxu0 0
    %724 = vmatpush1.bf16.msra.mxu0 0
    %725 = vmatprep.subr.bf16.mxu0 0
    %726 = vmatpush1.bf16.msra.mxu0 0
    %727 = vmatprep.subr.bf16.mxu0 0
    %728 = vmatpush1.bf16.msra.mxu0 0
    %729 = vmatprep.subr.bf16.mxu0 0
    %730 = vmatpush1.bf16.msra.mxu0 0
    %731 = vmatprep.subr.bf16.mxu0 0
    %732 = vmatpush1.bf16.msra.mxu0 0
    %733 = vmatprep.subr.bf16.mxu0 0
    %734 = vmatpush1.bf16.msra.mxu0 0
    %735 = vmatprep.subr.bf16.mxu0 0
    %736 = vmatpush1.bf16.msra.mxu0 0
    %737 = vmatprep.subr.bf16.mxu0 0
    %738 = vmatpush1.bf16.msra.mxu0 0
    %739 = vmatprep.subr.bf16.mxu0 0
    %740 = vmatpush1.bf16.msra.mxu0 0
    %741 = vmatprep.mubr.bf16.mxu0 0
    %742 = vmatmul.mubr.bf16.gmra.mrb[0].mxu0 %v543
    %v743 = vpop.f32.mrb[0].mxu0
    %v744 = vadd.f32 %v176, %v743
    %v745 = vpop.f32.mrb[0].mxu0
    %v746 = vadd.f32 %v180, %v745
    %v747 = vpop.f32.mrb[0].mxu0
    %v748 = vpop.f32.mrb[0].mxu0
    %749 = vdwg.mxu0
    %750 = vmatprep.subr.bf16.mxu0 %v424
    %751 = vmatpush1.bf16.msra.mxu0 %v423
    %752 = vmatprep.subr.bf16.mxu0 %v440
    %753 = vmatpush1.bf16.msra.mxu0 %v439
    %754 = vmatprep.subr.bf16.mxu0 %v456
    %755 = vmatpush1.bf16.msra.mxu0 %v455
    %756 = vmatprep.subr.bf16.mxu0 %v472
    %757 = vmatpush1.bf16.msra.mxu0 %v471
    %758 = vmatprep.subr.bf16.mxu0 0
    %759 = vmatpush1.bf16.msra.mxu0 0
    %760 = vmatprep.subr.bf16.mxu0 0
    %761 = vmatpush1.bf16.msra.mxu0 0
    %762 = vmatprep.subr.bf16.mxu0 0
    %763 = vmatpush1.bf16.msra.mxu0 0
    %764 = vmatprep.subr.bf16.mxu0 0
    %765 = vmatpush1.bf16.msra.mxu0 0
    %766 = vmatprep.subr.bf16.mxu0 0
    %767 = vmatpush1.bf16.msra.mxu0 0
    %768 = vmatprep.subr.bf16.mxu0 0
    %769 = vmatpush1.bf16.msra.mxu0 0
    %770 = vmatprep.subr.bf16.mxu0 0
    %771 = vmatpush1.bf16.msra.mxu0 0
    %772 = vmatprep.subr.bf16.mxu0 0
    %773 = vmatpush1.bf16.msra.mxu0 0
    %774 = vmatprep.subr.bf16.mxu0 0
    %775 = vmatpush1.bf16.msra.mxu0 0
    %776 = vmatprep.subr.bf16.mxu0 0
    %777 = vmatpush1.bf16.msra.mxu0 0
    %778 = vmatprep.subr.bf16.mxu0 0
    %779 = vmatpush1.bf16.msra.mxu0 0
    %780 = vmatprep.subr.bf16.mxu0 0
    %781 = vmatpush1.bf16.msra.mxu0 0
    %782 = vmatprep.mubr.bf16.mxu0 0
    %783 = vmatmul.mubr.bf16.gmra.mrb[0].mxu0 %v543
    %v784 = vpop.f32.mrb[0].mxu0
    %v785 = vadd.f32 %v184, %v784
    %v786 = vpop.f32.mrb[0].mxu0
    %v787 = vadd.f32 %v188, %v786
    %v788 = vpop.f32.mrb[0].mxu0
    %v789 = vpop.f32.mrb[0].mxu0
    %790 = vdwg.mxu0
    %791 = vmatprep.subr.bf16.mxu0 %v426
    %792 = vmatpush1.bf16.msra.mxu0 %v425
    %793 = vmatprep.subr.bf16.mxu0 %v442
    %794 = vmatpush1.bf16.msra.mxu0 %v441
    %795 = vmatprep.subr.bf16.mxu0 %v458
    %796 = vmatpush1.bf16.msra.mxu0 %v457
    %797 = vmatprep.subr.bf16.mxu0 %v474
    %798 = vmatpush1.bf16.msra.mxu0 %v473
    %799 = vmatprep.subr.bf16.mxu0 0
    %800 = vmatpush1.bf16.msra.mxu0 0
    %801 = vmatprep.subr.bf16.mxu0 0
    %802 = vmatpush1.bf16.msra.mxu0 0
    %803 = vmatprep.subr.bf16.mxu0 0
    %804 = vmatpush1.bf16.msra.mxu0 0
    %805 = vmatprep.subr.bf16.mxu0 0
    %806 = vmatpush1.bf16.msra.mxu0 0
    %807 = vmatprep.subr.bf16.mxu0 0
    %808 = vmatpush1.bf16.msra.mxu0 0
    %809 = vmatprep.subr.bf16.mxu0 0
    %810 = vmatpush1.bf16.msra.mxu0 0
    %811 = vmatprep.subr.bf16.mxu0 0
    %812 = vmatpush1.bf16.msra.mxu0 0
    %813 = vmatprep.subr.bf16.mxu0 0
    %814 = vmatpush1.bf16.msra.mxu0 0
    %815 = vmatprep.subr.bf16.mxu0 0
    %816 = vmatpush1.bf16.msra.mxu0 0
    %817 = vmatprep.subr.bf16.mxu0 0
    %818 = vmatpush1.bf16.msra.mxu0 0
    %819 = vmatprep.subr.bf16.mxu0 0
    %820 = vmatpush1.bf16.msra.mxu0 0
    %821 = vmatprep.subr.bf16.mxu0 0
    %822 = vmatpush1.bf16.msra.mxu0 0
    %823 = vmatprep.mubr.bf16.mxu0 0
    %824 = vmatmul.mubr.bf16.gmra.mrb[0].mxu0 %v543
    %v825 = vpop.f32.mrb[0].mxu0
    %v826 = vadd.f32 %v192, %v825
    %v827 = vpop.f32.mrb[0].mxu0
    %v828 = vadd.f32 %v196, %v827
    %v829 = vpop.f32.mrb[0].mxu0
    %v830 = vpop.f32.mrb[0].mxu0
    %831 = vdwg.mxu0
    %832 = vmatprep.subr.bf16.mxu0 %v428
    %833 = vmatpush1.bf16.msra.mxu0 %v427
    %834 = vmatprep.subr.bf16.mxu0 %v444
    %835 = vmatpush1.bf16.msra.mxu0 %v443
    %836 = vmatprep.subr.bf16.mxu0 %v460
    %837 = vmatpush1.bf16.msra.mxu0 %v459
    %838 = vmatprep.subr.bf16.mxu0 %v476
    %839 = vmatpush1.bf16.msra.mxu0 %v475
    %840 = vmatprep.subr.bf16.mxu0 0
    %841 = vmatpush1.bf16.msra.mxu0 0
    %842 = vmatprep.subr.bf16.mxu0 0
    %843 = vmatpush1.bf16.msra.mxu0 0
    %844 = vmatprep.subr.bf16.mxu0 0
    %845 = vmatpush1.bf16.msra.mxu0 0
    %846 = vmatprep.subr.bf16.mxu0 0
    %847 = vmatpush1.bf16.msra.mxu0 0
    %848 = vmatprep.subr.bf16.mxu0 0
    %849 = vmatpush1.bf16.msra.mxu0 0
    %850 = vmatprep.subr.bf16.mxu0 0
    %851 = vmatpush1.bf16.msra.mxu0 0
    %852 = vmatprep.subr.bf16.mxu0 0
    %853 = vmatpush1.bf16.msra.mxu0 0
    %854 = vmatprep.subr.bf16.mxu0 0
    %855 = vmatpush1.bf16.msra.mxu0 0
    %856 = vmatprep.subr.bf16.mxu0 0
    %857 = vmatpush1.bf16.msra.mxu0 0
    %858 = vmatprep.subr.bf16.mxu0 0
    %859 = vmatpush1.bf16.msra.mxu0 0
    %860 = vmatprep.subr.bf16.mxu0 0
    %861 = vmatpush1.bf16.msra.mxu0 0
    %862 = vmatprep.subr.bf16.mxu0 0
    %863 = vmatpush1.bf16.msra.mxu0 0
    %864 = vmatprep.mubr.bf16.mxu0 0
    %865 = vmatmul.mubr.bf16.gmra.mrb[0].mxu0 %v543
    %v866 = vpop.f32.mrb[0].mxu0
    %v867 = vadd.f32 %v200, %v866
    %v868 = vpop.f32.mrb[0].mxu0
    %v869 = vadd.f32 %v204, %v868
    %v870 = vpop.f32.mrb[0].mxu0
    %v871 = vpop.f32.mrb[0].mxu0
    %872 = vdwg.mxu0
    %v873 = vpack.c.bf16 %v580, %v580
    %v874 = vpack.c.bf16 %v582, %v582
    %v875 = vpack.c.bf16 %v621, %v621
    %v876 = vpack.c.bf16 %v623, %v623
    %v877 = vpack.c.bf16 %v662, %v662
    %v878 = vpack.c.bf16 %v664, %v664
    %v879 = vpack.c.bf16 %v703, %v703
    %v880 = vpack.c.bf16 %v705, %v705
    %v881 = vpack.c.bf16 %v744, %v744
    %v882 = vpack.c.bf16 %v746, %v746
    %v883 = vpack.c.bf16 %v785, %v785
    %v884 = vpack.c.bf16 %v787, %v787
    %v885 = vpack.c.bf16 %v826, %v826
    %v886 = vpack.c.bf16 %v828, %v828
    %v887 = vpack.c.bf16 %v867, %v867
    %v888 = vpack.c.bf16 %v869, %v869
    %v889 = vxor.u32 %v873, 2147516416
    %v891 = vmul.bf16 %v889, 1069105081
    %v892 = vpow.bf16.pop %v891
    %v893 = vadd.bf16 %v892, 1065369472
    %v894 = vrcp.bf16.pop %v893
    %v895 = vmul.bf16 1065369472, %v894
    %v896 = vxor.u32 %v874, 2147516416
    %v898 = vmul.bf16 %v896, 1069105081
    %v899 = vpow.bf16.pop %v898
    %v900 = vadd.bf16 %v899, 1065369472
    %v901 = vrcp.bf16.pop %v900
    %v902 = vmul.bf16 1065369472, %v901
    %v903 = vtanh.bf16.pop %v875
    %v904 = vxor.u32 %v876, 2147516416
    %v906 = vmul.bf16 %v904, 1069105081
    %v907 = vpow.bf16.pop %v906
    %v908 = vadd.bf16 %v907, 1065369472
    %v909 = vrcp.bf16.pop %v908
    %v910 = vmul.bf16 1065369472, %v909
    %v911 = vunpack.c.l.bf16 %v902
    %v912 = vmul.f32 %v911, 0.0
    %v913 = vmul.bf16 %v895, %v903
    %v914 = vunpack.c.l.bf16 %v913
    %v915 = vadd.f32 %v912, %v914
    %v916 = vunpack.c.l.bf16 %v910
    %v917 = vtanh.pop %v915
    %v918 = vmul.f32 %v916, %v917
    %v919 = vpack.c.bf16 %v918, %v918
    %v920 = vunpack.c.l.bf16 %v877
    %v921 = vunpack.c.l.bf16 %v878
    %v922 = vunpack.c.l.bf16 %v879
    %v923 = vunpack.c.l.bf16 %v880
    %s924 = scalar_lea.vmem [#allocation7], 256
    %v925 = vld [vmem:[%s924] sm:$0xff]
    %v926 = vld [vmem:[%s924 + $0x8] sm:$0xff]
    %v927 = vld [vmem:[%s924 + $0x10] sm:$0xff]
    %v928 = vld [vmem:[%s924 + $0x18] sm:$0xff]
    %v929 = vld [vmem:[%s924 + $0x20] sm:$0xff]
    %v930 = vld [vmem:[%s924 + $0x28] sm:$0xff]
    %v931 = vld [vmem:[%s924 + $0x30] sm:$0xff]
    %v932 = vld [vmem:[%s924 + $0x38] sm:$0xff]
    %v933 = vld [vmem:[%s924 + $0x40] sm:$0xff]
    %v934 = vld [vmem:[%s924 + $0x48] sm:$0xff]
    %v935 = vld [vmem:[%s924 + $0x50] sm:$0xff]
    %v936 = vld [vmem:[%s924 + $0x58] sm:$0xff]
    %v937 = vld [vmem:[%s924 + $0x60] sm:$0xff]
    %v938 = vld [vmem:[%s924 + $0x68] sm:$0xff]
    %v939 = vld [vmem:[%s924 + $0x70] sm:$0xff]
    %v940 = vld [vmem:[%s924 + $0x78] sm:$0xff]
    %v941 = vld [vmem:[%s924 + $0x80] sm:$0xff]
    %v942 = vld [vmem:[%s924 + $0x88] sm:$0xff]
    %v943 = vld [vmem:[%s924 + $0x90] sm:$0xff]
    %v944 = vld [vmem:[%s924 + $0x98] sm:$0xff]
    %v945 = vld [vmem:[%s924 + $0xa0] sm:$0xff]
    %v946 = vld [vmem:[%s924 + $0xa8] sm:$0xff]
    %v947 = vld [vmem:[%s924 + $0xb0] sm:$0xff]
    %v948 = vld [vmem:[%s924 + $0xb8] sm:$0xff]
    %v949 = vld [vmem:[%s924 + $0xc0] sm:$0xff]
    %v950 = vld [vmem:[%s924 + $0xc8] sm:$0xff]
    %v951 = vld [vmem:[%s924 + $0xd0] sm:$0xff]
    %v952 = vld [vmem:[%s924 + $0xd8] sm:$0xff]
    %v953 = vld [vmem:[%s924 + $0xe0] sm:$0xff]
    %v954 = vld [vmem:[%s924 + $0xe8] sm:$0xff]
    %v955 = vld [vmem:[%s924 + $0xf0] sm:$0xff]
    %v956 = vld [vmem:[%s924 + $0xf8] sm:$0xff]
    %v989 = vunpack.c.l.b16 %v925
    %v990 = vunpack.c.h.b16 %v925
    %v991 = vunpack.c.l.b16 %v926
    %v992 = vunpack.c.h.b16 %v926
    %v993 = vunpack.c.l.b16 %v927
    %v994 = vunpack.c.h.b16 %v927
    %v995 = vunpack.c.l.b16 %v928
    %v996 = vunpack.c.h.b16 %v928
    %v997 = vunpack.c.l.b16 %v929
    %v998 = vunpack.c.h.b16 %v929
    %v999 = vunpack.c.l.b16 %v930
    %v1000 = vunpack.c.h.b16 %v930
    %v1001 = vunpack.c.l.b16 %v931
    %v1002 = vunpack.c.h.b16 %v931
    %v1003 = vunpack.c.l.b16 %v932
    %v1004 = vunpack.c.h.b16 %v932
    %v1005 = vunpack.c.l.b16 %v933
    %v1006 = vunpack.c.h.b16 %v933
    %v1007 = vunpack.c.l.b16 %v934
    %v1008 = vunpack.c.h.b16 %v934
    %v1009 = vunpack.c.l.b16 %v935
    %v1010 = vunpack.c.h.b16 %v935
    %v1011 = vunpack.c.l.b16 %v936
    %v1012 = vunpack.c.h.b16 %v936
    %v1013 = vunpack.c.l.b16 %v937
    %v1014 = vunpack.c.h.b16 %v937
    %v1015 = vunpack.c.l.b16 %v938
    %v1016 = vunpack.c.h.b16 %v938
    %v1017 = vunpack.c.l.b16 %v939
    %v1018 = vunpack.c.h.b16 %v939
    %v1019 = vunpack.c.l.b16 %v940
    %v1020 = vunpack.c.h.b16 %v940
    %v1021 = vunpack.c.l.b16 %v941
    %v1022 = vunpack.c.h.b16 %v941
    %v1023 = vunpack.c.l.b16 %v942
    %v1024 = vunpack.c.h.b16 %v942
    %v1025 = vunpack.c.l.b16 %v943
    %v1026 = vunpack.c.h.b16 %v943
    %v1027 = vunpack.c.l.b16 %v944
    %v1028 = vunpack.c.h.b16 %v944
    %v1029 = vunpack.c.l.b16 %v945
    %v1030 = vunpack.c.h.b16 %v945
    %v1031 = vunpack.c.l.b16 %v946
    %v1032 = vunpack.c.h.b16 %v946
    %v1033 = vunpack.c.l.b16 %v947
    %v1034 = vunpack.c.h.b16 %v947
    %v1035 = vunpack.c.l.b16 %v948
    %v1036 = vunpack.c.h.b16 %v948
    %v1037 = vunpack.c.l.b16 %v949
    %v1038 = vunpack.c.h.b16 %v949
    %v1039 = vunpack.c.l.b16 %v950
    %v1040 = vunpack.c.h.b16 %v950
    %v1041 = vunpack.c.l.b16 %v951
    %v1042 = vunpack.c.h.b16 %v951
    %v1043 = vunpack.c.l.b16 %v952
    %v1044 = vunpack.c.h.b16 %v952
    %v1045 = vunpack.c.l.b16 %v953
    %v1046 = vunpack.c.h.b16 %v953
    %v1047 = vunpack.c.l.b16 %v954
    %v1048 = vunpack.c.h.b16 %v954
    %v1049 = vunpack.c.l.b16 %v955
    %v1050 = vunpack.c.h.b16 %v955
    %v1051 = vunpack.c.l.b16 %v956
    %v1052 = vunpack.c.h.b16 %v956
    %v1053 = vpack.c.b16 %v993, %v989
    %v1054 = vpack.c.b16 %v994, %v990
    %v1055 = vpack.c.b16 %v995, %v991
    %v1056 = vpack.c.b16 %v996, %v992
    %v1057 = vpack.c.b16 %v1001, %v997
    %v1058 = vpack.c.b16 %v1002, %v998
    %v1059 = vpack.c.b16 %v1003, %v999
    %v1060 = vpack.c.b16 %v1004, %v1000
    %v1061 = vpack.c.b16 %v1009, %v1005
    %v1062 = vpack.c.b16 %v1010, %v1006
    %v1063 = vpack.c.b16 %v1011, %v1007
    %v1064 = vpack.c.b16 %v1012, %v1008
    %v1065 = vpack.c.b16 %v1017, %v1013
    %v1066 = vpack.c.b16 %v1018, %v1014
    %v1067 = vpack.c.b16 %v1019, %v1015
    %v1068 = vpack.c.b16 %v1020, %v1016
    %v1069 = vpack.c.b16 %v1025, %v1021
    %v1070 = vpack.c.b16 %v1026, %v1022
    %v1071 = vpack.c.b16 %v1027, %v1023
    %v1072 = vpack.c.b16 %v1028, %v1024
    %v1073 = vpack.c.b16 %v1033, %v1029
    %v1074 = vpack.c.b16 %v1034, %v1030
    %v1075 = vpack.c.b16 %v1035, %v1031
    %v1076 = vpack.c.b16 %v1036, %v1032
    %v1077 = vpack.c.b16 %v1041, %v1037
    %v1078 = vpack.c.b16 %v1042, %v1038
    %v1079 = vpack.c.b16 %v1043, %v1039
    %v1080 = vpack.c.b16 %v1044, %v1040
    %v1081 = vpack.c.b16 %v1049, %v1045
    %v1082 = vpack.c.b16 %v1050, %v1046
    %v1083 = vpack.c.b16 %v1051, %v1047
    %v1084 = vpack.c.b16 %v1052, %v1048
    %1117 = vmatprep.subr.bf16.mxu0 %v1054
    %1118 = vmatpush1.bf16.msra.mxu0 %v1053
    %1119 = vmatprep.subr.bf16.mxu0 %v1058
    %1120 = vmatpush1.bf16.msra.mxu0 %v1057
    %1121 = vmatprep.subr.bf16.mxu0 %v1062
    %1122 = vmatpush1.bf16.msra.mxu0 %v1061
    %1123 = vmatprep.subr.bf16.mxu0 %v1066
    %1124 = vmatpush1.bf16.msra.mxu0 %v1065
    %1125 = vmatprep.subr.bf16.mxu0 %v1070
    %1126 = vmatpush1.bf16.msra.mxu0 %v1069
    %1127 = vmatprep.subr.bf16.mxu0 %v1074
    %1128 = vmatpush1.bf16.msra.mxu0 %v1073
    %1129 = vmatprep.subr.bf16.mxu0 %v1078
    %1130 = vmatpush1.bf16.msra.mxu0 %v1077
    %1131 = vmatprep.subr.bf16.mxu0 %v1082
    %1132 = vmatpush1.bf16.msra.mxu0 %v1081
    %1133 = vmatprep.subr.bf16.mxu0 0
    %1134 = vmatpush1.bf16.msra.mxu0 0
    %1135 = vmatprep.subr.bf16.mxu0 0
    %1136 = vmatpush1.bf16.msra.mxu0 0
    %1137 = vmatprep.subr.bf16.mxu0 0
    %1138 = vmatpush1.bf16.msra.mxu0 0
    %1139 = vmatprep.subr.bf16.mxu0 0
    %1140 = vmatpush1.bf16.msra.mxu0 0
    %1141 = vmatprep.subr.bf16.mxu0 0
    %1142 = vmatpush1.bf16.msra.mxu0 0
    %1143 = vmatprep.subr.bf16.mxu0 0
    %1144 = vmatpush1.bf16.msra.mxu0 0
    %1145 = vmatprep.subr.bf16.mxu0 0
    %1146 = vmatpush1.bf16.msra.mxu0 0
    %1147 = vmatprep.subr.bf16.mxu0 0
    %1148 = vmatpush1.bf16.msra.mxu0 0
    %1149 = vmatprep.mubr.bf16.mxu0 0
    %1150 = vmatmul.mubr.bf16.gmra.mrb[0].mxu0 %v919
    %v1151 = vpop.f32.mrb[0].mxu0
    %v1152 = vadd.f32 0.0, %v1151
    %v1153 = vpop.f32.mrb[0].mxu0
    %v1154 = vadd.f32 0.0, %v1153
    %v1155 = vpop.f32.mrb[0].mxu0
    %v1156 = vpop.f32.mrb[0].mxu0
    %1157 = vdwg.mxu0
    %1158 = vmatprep.subr.bf16.mxu0 %v1056
    %1159 = vmatpush1.bf16.msra.mxu0 %v1055
    %1160 = vmatprep.subr.bf16.mxu0 %v1060
    %1161 = vmatpush1.bf16.msra.mxu0 %v1059
    %1162 = vmatprep.subr.bf16.mxu0 %v1064
    %1163 = vmatpush1.bf16.msra.mxu0 %v1063
    %1164 = vmatprep.subr.bf16.mxu0 %v1068
    %1165 = vmatpush1.bf16.msra.mxu0 %v1067
    %1166 = vmatprep.subr.bf16.mxu0 %v1072
    %1167 = vmatpush1.bf16.msra.mxu0 %v1071
    %1168 = vmatprep.subr.bf16.mxu0 %v1076
    %1169 = vmatpush1.bf16.msra.mxu0 %v1075
    %1170 = vmatprep.subr.bf16.mxu0 %v1080
    %1171 = vmatpush1.bf16.msra.mxu0 %v1079
    %1172 = vmatprep.subr.bf16.mxu0 %v1084
    %1173 = vmatpush1.bf16.msra.mxu0 %v1083
    %1174 = vmatprep.subr.bf16.mxu0 0
    %1175 = vmatpush1.bf16.msra.mxu0 0
    %1176 = vmatprep.subr.bf16.mxu0 0
    %1177 = vmatpush1.bf16.msra.mxu0 0
    %1178 = vmatprep.subr.bf16.mxu0 0
    %1179 = vmatpush1.bf16.msra.mxu0 0
    %1180 = vmatprep.subr.bf16.mxu0 0
    %1181 = vmatpush1.bf16.msra.mxu0 0
    %1182 = vmatprep.subr.bf16.mxu0 0
    %1183 = vmatpush1.bf16.msra.mxu0 0
    %1184 = vmatprep.subr.bf16.mxu0 0
    %1185 = vmatpush1.bf16.msra.mxu0 0
    %1186 = vmatprep.subr.bf16.mxu0 0
    %1187 = vmatpush1.bf16.msra.mxu0 0
    %1188 = vmatprep.subr.bf16.mxu0 0
    %1189 = vmatpush1.bf16.msra.mxu0 0
    %1190 = vmatprep.mubr.bf16.mxu0 0
    %1191 = vmatmul.mubr.bf16.gmra.mrb[0].mxu0 %v919
    %v1192 = vpop.f32.mrb[0].mxu0
    %v1193 = vadd.f32 0.0, %v1192
    %v1194 = vpop.f32.mrb[0].mxu0
    %v1195 = vadd.f32 0.0, %v1194
    %v1196 = vpop.f32.mrb[0].mxu0
    %v1197 = vpop.f32.mrb[0].mxu0
    %1198 = vdwg.mxu0
    %v1199 = vadd.f32 %v920, %v1152
    %v1200 = vadd.f32 %v921, %v1154
    %v1201 = vadd.f32 %v922, %v1193
    %v1202 = vadd.f32 %v923, %v1195
    %v1203 = vpack.c.bf16 %v1199, %v1199
    %v1204 = vpack.c.bf16 %v1200, %v1200
    %v1205 = vpack.c.bf16 %v1201, %v1201
    %v1206 = vpack.c.bf16 %v1202, %v1202
    %v1207 = vxor.u32 %v1203, 2147516416
    %v1209 = vmul.bf16 %v1207, 1069105081
    %v1210 = vpow.bf16.pop %v1209
    %v1211 = vadd.bf16 %v1210, 1065369472
    %v1212 = vrcp.bf16.pop %v1211
    %v1213 = vmul.bf16 1065369472, %v1212
    %v1214 = vxor.u32 %v1204, 2147516416
    %v1216 = vmul.bf16 %v1214, 1069105081
    %v1217 = vpow.bf16.pop %v1216
    %v1218 = vadd.bf16 %v1217, 1065369472
    %v1219 = vrcp.bf16.pop %v1218
    %v1220 = vmul.bf16 1065369472, %v1219
    %v1221 = vtanh.bf16.pop %v1205
    %v1222 = vxor.u32 %v1206, 2147516416
    %v1224 = vmul.bf16 %v1222, 1069105081
    %v1225 = vpow.bf16.pop %v1224
    %v1226 = vadd.bf16 %v1225, 1065369472
    %v1227 = vrcp.bf16.pop %v1226
    %v1228 = vmul.bf16 1065369472, %v1227
    %v1229 = vunpack.c.l.bf16 %v1220
    %v1230 = vmul.f32 %v1229, %v915
    %v1231 = vmul.bf16 %v1213, %v1221
    %v1232 = vunpack.c.l.bf16 %v1231
    %v1233 = vadd.f32 %v1230, %v1232
    %v1234 = vunpack.c.l.bf16 %v1228
    %v1235 = vtanh.pop %v1233
    %v1236 = vmul.f32 %v1234, %v1235
    %v1237 = vpack.c.bf16 %v1236, %v1236
    %v1238 = vunpack.c.l.bf16 %v881
    %v1239 = vunpack.c.l.bf16 %v882
    %v1240 = vunpack.c.l.bf16 %v883
    %v1241 = vunpack.c.l.bf16 %v884
    %s1242 = scalar_lea.vmem [#allocation7], 512
    %v1243 = vld [vmem:[%s1242] sm:$0xff]
    %v1244 = vld [vmem:[%s1242 + $0x8] sm:$0xff]
    %v1245 = vld [vmem:[%s1242 + $0x10] sm:$0xff]
    %v1246 = vld [vmem:[%s1242 + $0x18] sm:$0xff]
    %v1247 = vld [vmem:[%s1242 + $0x20] sm:$0xff]
    %v1248 = vld [vmem:[%s1242 + $0x28] sm:$0xff]
    %v1249 = vld [vmem:[%s1242 + $0x30] sm:$0xff]
    %v1250 = vld [vmem:[%s1242 + $0x38] sm:$0xff]
    %v1251 = vld [vmem:[%s1242 + $0x40] sm:$0xff]
    %v1252 = vld [vmem:[%s1242 + $0x48] sm:$0xff]
    %v1253 = vld [vmem:[%s1242 + $0x50] sm:$0xff]
    %v1254 = vld [vmem:[%s1242 + $0x58] sm:$0xff]
    %v1255 = vld [vmem:[%s1242 + $0x60] sm:$0xff]
    %v1256 = vld [vmem:[%s1242 + $0x68] sm:$0xff]
    %v1257 = vld [vmem:[%s1242 + $0x70] sm:$0xff]
    %v1258 = vld [vmem:[%s1242 + $0x78] sm:$0xff]
    %v1259 = vld [vmem:[%s1242 + $0x80] sm:$0xff]
    %v1260 = vld [vmem:[%s1242 + $0x88] sm:$0xff]
    %v1261 = vld [vmem:[%s1242 + $0x90] sm:$0xff]
    %v1262 = vld [vmem:[%s1242 + $0x98] sm:$0xff]
    %v1263 = vld [vmem:[%s1242 + $0xa0] sm:$0xff]
    %v1264 = vld [vmem:[%s1242 + $0xa8] sm:$0xff]
    %v1265 = vld [vmem:[%s1242 + $0xb0] sm:$0xff]
    %v1266 = vld [vmem:[%s1242 + $0xb8] sm:$0xff]
    %v1267 = vld [vmem:[%s1242 + $0xc0] sm:$0xff]
    %v1268 = vld [vmem:[%s1242 + $0xc8] sm:$0xff]
    %v1269 = vld [vmem:[%s1242 + $0xd0] sm:$0xff]
    %v1270 = vld [vmem:[%s1242 + $0xd8] sm:$0xff]
    %v1271 = vld [vmem:[%s1242 + $0xe0] sm:$0xff]
    %v1272 = vld [vmem:[%s1242 + $0xe8] sm:$0xff]
    %v1273 = vld [vmem:[%s1242 + $0xf0] sm:$0xff]
    %v1274 = vld [vmem:[%s1242 + $0xf8] sm:$0xff]
    %v1307 = vunpack.c.l.b16 %v1243
    %v1308 = vunpack.c.h.b16 %v1243
    %v1309 = vunpack.c.l.b16 %v1244
    %v1310 = vunpack.c.h.b16 %v1244
    %v1311 = vunpack.c.l.b16 %v1245
    %v1312 = vunpack.c.h.b16 %v1245
    %v1313 = vunpack.c.l.b16 %v1246
    %v1314 = vunpack.c.h.b16 %v1246
    %v1315 = vunpack.c.l.b16 %v1247
    %v1316 = vunpack.c.h.b16 %v1247
    %v1317 = vunpack.c.l.b16 %v1248
    %v1318 = vunpack.c.h.b16 %v1248
    %v1319 = vunpack.c.l.b16 %v1249
    %v1320 = vunpack.c.h.b16 %v1249
    %v1321 = vunpack.c.l.b16 %v1250
    %v1322 = vunpack.c.h.b16 %v1250
    %v1323 = vunpack.c.l.b16 %v1251
    %v1324 = vunpack.c.h.b16 %v1251
    %v1325 = vunpack.c.l.b16 %v1252
    %v1326 = vunpack.c.h.b16 %v1252
    %v1327 = vunpack.c.l.b16 %v1253
    %v1328 = vunpack.c.h.b16 %v1253
    %v1329 = vunpack.c.l.b16 %v1254
    %v1330 = vunpack.c.h.b16 %v1254
    %v1331 = vunpack.c.l.b16 %v1255
    %v1332 = vunpack.c.h.b16 %v1255
    %v1333 = vunpack.c.l.b16 %v1256
    %v1334 = vunpack.c.h.b16 %v1256
    %v1335 = vunpack.c.l.b16 %v1257
    %v1336 = vunpack.c.h.b16 %v1257
    %v1337 = vunpack.c.l.b16 %v1258
    %v1338 = vunpack.c.h.b16 %v1258
    %v1339 = vunpack.c.l.b16 %v1259
    %v1340 = vunpack.c.h.b16 %v1259
    %v1341 = vunpack.c.l.b16 %v1260
    %v1342 = vunpack.c.h.b16 %v1260
    %v1343 = vunpack.c.l.b16 %v1261
    %v1344 = vunpack.c.h.b16 %v1261
    %v1345 = vunpack.c.l.b16 %v1262
    %v1346 = vunpack.c.h.b16 %v1262
    %v1347 = vunpack.c.l.b16 %v1263
    %v1348 = vunpack.c.h.b16 %v1263
    %v1349 = vunpack.c.l.b16 %v1264
    %v1350 = vunpack.c.h.b16 %v1264
    %v1351 = vunpack.c.l.b16 %v1265
    %v1352 = vunpack.c.h.b16 %v1265
    %v1353 = vunpack.c.l.b16 %v1266
    %v1354 = vunpack.c.h.b16 %v1266
    %v1355 = vunpack.c.l.b16 %v1267
    %v1356 = vunpack.c.h.b16 %v1267
    %v1357 = vunpack.c.l.b16 %v1268
    %v1358 = vunpack.c.h.b16 %v1268
    %v1359 = vunpack.c.l.b16 %v1269
    %v1360 = vunpack.c.h.b16 %v1269
    %v1361 = vunpack.c.l.b16 %v1270
    %v1362 = vunpack.c.h.b16 %v1270
    %v1363 = vunpack.c.l.b16 %v1271
    %v1364 = vunpack.c.h.b16 %v1271
    %v1365 = vunpack.c.l.b16 %v1272
    %v1366 = vunpack.c.h.b16 %v1272
    %v1367 = vunpack.c.l.b16 %v1273
    %v1368 = vunpack.c.h.b16 %v1273
    %v1369 = vunpack.c.l.b16 %v1274
    %v1370 = vunpack.c.h.b16 %v1274
    %v1371 = vpack.c.b16 %v1311, %v1307
    %v1372 = vpack.c.b16 %v1312, %v1308
    %v1373 = vpack.c.b16 %v1313, %v1309
    %v1374 = vpack.c.b16 %v1314, %v1310
    %v1375 = vpack.c.b16 %v1319, %v1315
    %v1376 = vpack.c.b16 %v1320, %v1316
    %v1377 = vpack.c.b16 %v1321, %v1317
    %v1378 = vpack.c.b16 %v1322, %v1318
    %v1379 = vpack.c.b16 %v1327, %v1323
    %v1380 = vpack.c.b16 %v1328, %v1324
    %v1381 = vpack.c.b16 %v1329, %v1325
    %v1382 = vpack.c.b16 %v1330, %v1326
    %v1383 = vpack.c.b16 %v1335, %v1331
    %v1384 = vpack.c.b16 %v1336, %v1332
    %v1385 = vpack.c.b16 %v1337, %v1333
    %v1386 = vpack.c.b16 %v1338, %v1334
    %v1387 = vpack.c.b16 %v1343, %v1339
    %v1388 = vpack.c.b16 %v1344, %v1340
    %v1389 = vpack.c.b16 %v1345, %v1341
    %v1390 = vpack.c.b16 %v1346, %v1342
    %v1391 = vpack.c.b16 %v1351, %v1347
    %v1392 = vpack.c.b16 %v1352, %v1348
    %v1393 = vpack.c.b16 %v1353, %v1349
    %v1394 = vpack.c.b16 %v1354, %v1350
    %v1395 = vpack.c.b16 %v1359, %v1355
    %v1396 = vpack.c.b16 %v1360, %v1356
    %v1397 = vpack.c.b16 %v1361, %v1357
    %v1398 = vpack.c.b16 %v1362, %v1358
    %v1399 = vpack.c.b16 %v1367, %v1363
    %v1400 = vpack.c.b16 %v1368, %v1364
    %v1401 = vpack.c.b16 %v1369, %v1365
    %v1402 = vpack.c.b16 %v1370, %v1366
    %1435 = vmatprep.subr.bf16.mxu0 %v1372
    %1436 = vmatpush1.bf16.msra.mxu0 %v1371
    %1437 = vmatprep.subr.bf16.mxu0 %v1376
    %1438 = vmatpush1.bf16.msra.mxu0 %v1375
    %1439 = vmatprep.subr.bf16.mxu0 %v1380
    %1440 = vmatpush1.bf16.msra.mxu0 %v1379
    %1441 = vmatprep.subr.bf16.mxu0 %v1384
    %1442 = vmatpush1.bf16.msra.mxu0 %v1383
    %1443 = vmatprep.subr.bf16.mxu0 %v1388
    %1444 = vmatpush1.bf16.msra.mxu0 %v1387
    %1445 = vmatprep.subr.bf16.mxu0 %v1392
    %1446 = vmatpush1.bf16.msra.mxu0 %v1391
    %1447 = vmatprep.subr.bf16.mxu0 %v1396
    %1448 = vmatpush1.bf16.msra.mxu0 %v1395
    %1449 = vmatprep.subr.bf16.mxu0 %v1400
    %1450 = vmatpush1.bf16.msra.mxu0 %v1399
    %1451 = vmatprep.subr.bf16.mxu0 0
    %1452 = vmatpush1.bf16.msra.mxu0 0
    %1453 = vmatprep.subr.bf16.mxu0 0
    %1454 = vmatpush1.bf16.msra.mxu0 0
    %1455 = vmatprep.subr.bf16.mxu0 0
    %1456 = vmatpush1.bf16.msra.mxu0 0
    %1457 = vmatprep.subr.bf16.mxu0 0
    %1458 = vmatpush1.bf16.msra.mxu0 0
    %1459 = vmatprep.subr.bf16.mxu0 0
    %1460 = vmatpush1.bf16.msra.mxu0 0
    %1461 = vmatprep.subr.bf16.mxu0 0
    %1462 = vmatpush1.bf16.msra.mxu0 0
    %1463 = vmatprep.subr.bf16.mxu0 0
    %1464 = vmatpush1.bf16.msra.mxu0 0
    %1465 = vmatprep.subr.bf16.mxu0 0
    %1466 = vmatpush1.bf16.msra.mxu0 0
    %1467 = vmatprep.mubr.bf16.mxu0 0
    %1468 = vmatmul.mubr.bf16.gmra.mrb[0].mxu0 %v1237
    %v1469 = vpop.f32.mrb[0].mxu0
    %v1470 = vadd.f32 0.0, %v1469
    %v1471 = vpop.f32.mrb[0].mxu0
    %v1472 = vadd.f32 0.0, %v1471
    %v1473 = vpop.f32.mrb[0].mxu0
    %v1474 = vpop.f32.mrb[0].mxu0
    %1475 = vdwg.mxu0
    %1476 = vmatprep.subr.bf16.mxu0 %v1374
    %1477 = vmatpush1.bf16.msra.mxu0 %v1373
    %1478 = vmatprep.subr.bf16.mxu0 %v1378
    %1479 = vmatpush1.bf16.msra.mxu0 %v1377
    %1480 = vmatprep.subr.bf16.mxu0 %v1382
    %1481 = vmatpush1.bf16.msra.mxu0 %v1381
    %1482 = vmatprep.subr.bf16.mxu0 %v1386
    %1483 = vmatpush1.bf16.msra.mxu0 %v1385
    %1484 = vmatprep.subr.bf16.mxu0 %v1390
    %1485 = vmatpush1.bf16.msra.mxu0 %v1389
    %1486 = vmatprep.subr.bf16.mxu0 %v1394
    %1487 = vmatpush1.bf16.msra.mxu0 %v1393
    %1488 = vmatprep.subr.bf16.mxu0 %v1398
    %1489 = vmatpush1.bf16.msra.mxu0 %v1397
    %1490 = vmatprep.subr.bf16.mxu0 %v1402
    %1491 = vmatpush1.bf16.msra.mxu0 %v1401
    %1492 = vmatprep.subr.bf16.mxu0 0
    %1493 = vmatpush1.bf16.msra.mxu0 0
    %1494 = vmatprep.subr.bf16.mxu0 0
    %1495 = vmatpush1.bf16.msra.mxu0 0
    %1496 = vmatprep.subr.bf16.mxu0 0
    %1497 = vmatpush1.bf16.msra.mxu0 0
    %1498 = vmatprep.subr.bf16.mxu0 0
    %1499 = vmatpush1.bf16.msra.mxu0 0
    %1500 = vmatprep.subr.bf16.mxu0 0
    %1501 = vmatpush1.bf16.msra.mxu0 0
    %1502 = vmatprep.subr.bf16.mxu0 0
    %1503 = vmatpush1.bf16.msra.mxu0 0
    %1504 = vmatprep.subr.bf16.mxu0 0
    %1505 = vmatpush1.bf16.msra.mxu0 0
    %1506 = vmatprep.subr.bf16.mxu0 0
    %1507 = vmatpush1.bf16.msra.mxu0 0
    %1508 = vmatprep.mubr.bf16.mxu0 0
    %1509 = vmatmul.mubr.bf16.gmra.mrb[0].mxu0 %v1237
    %v1510 = vpop.f32.mrb[0].mxu0
    %v1511 = vadd.f32 0.0, %v1510
    %v1512 = vpop.f32.mrb[0].mxu0
    %v1513 = vadd.f32 0.0, %v1512
    %v1514 = vpop.f32.mrb[0].mxu0
    %v1515 = vpop.f32.mrb[0].mxu0
    %1516 = vdwg.mxu0
    %v1517 = vadd.f32 %v1238, %v1470
    %v1518 = vadd.f32 %v1239, %v1472
    %v1519 = vadd.f32 %v1240, %v1511
    %v1520 = vadd.f32 %v1241, %v1513
    %v1521 = vpack.c.bf16 %v1517, %v1517
    %v1522 = vpack.c.bf16 %v1518, %v1518
    %v1523 = vpack.c.bf16 %v1519, %v1519
    %v1524 = vpack.c.bf16 %v1520, %v1520
    %v1525 = vxor.u32 %v1521, 2147516416
    %v1527 = vmul.bf16 %v1525, 1069105081
    %v1528 = vpow.bf16.pop %v1527
    %v1529 = vadd.bf16 %v1528, 1065369472
    %v1530 = vrcp.bf16.pop %v1529
    %v1531 = vmul.bf16 1065369472, %v1530
    %v1532 = vxor.u32 %v1522, 2147516416
    %v1534 = vmul.bf16 %v1532, 1069105081
    %v1535 = vpow.bf16.pop %v1534
    %v1536 = vadd.bf16 %v1535, 1065369472
    %v1537 = vrcp.bf16.pop %v1536
    %v1538 = vmul.bf16 1065369472, %v1537
    %v1539 = vtanh.bf16.pop %v1523
    %v1540 = vxor.u32 %v1524, 2147516416
    %v1542 = vmul.bf16 %v1540, 1069105081
    %v1543 = vpow.bf16.pop %v1542
    %v1544 = vadd.bf16 %v1543, 1065369472
    %v1545 = vrcp.bf16.pop %v1544
    %v1546 = vmul.bf16 1065369472, %v1545
    %v1547 = vunpack.c.l.bf16 %v1538
    %v1548 = vmul.f32 %v1547, %v1233
    %v1549 = vmul.bf16 %v1531, %v1539
    %v1550 = vunpack.c.l.bf16 %v1549
    %v1551 = vadd.f32 %v1548, %v1550
    %v1552 = vunpack.c.l.bf16 %v1546
    %v1553 = vtanh.pop %v1551
    %v1554 = vmul.f32 %v1552, %v1553
    %v1555 = vpack.c.bf16 %v1554, %v1554
    %v1556 = vunpack.c.l.bf16 %v885
    %v1557 = vunpack.c.l.bf16 %v886
    %v1558 = vunpack.c.l.bf16 %v887
    %v1559 = vunpack.c.l.bf16 %v888
    %s1560 = scalar_lea.vmem [#allocation7], 768
    %v1561 = vld [vmem:[%s1560] sm:$0xff]
    %v1562 = vld [vmem:[%s1560 + $0x8] sm:$0xff]
    %v1563 = vld [vmem:[%s1560 + $0x10] sm:$0xff]
    %v1564 = vld [vmem:[%s1560 + $0x18] sm:$0xff]
    %v1565 = vld [vmem:[%s1560 + $0x20] sm:$0xff]
    %v1566 = vld [vmem:[%s1560 + $0x28] sm:$0xff]
    %v1567 = vld [vmem:[%s1560 + $0x30] sm:$0xff]
    %v1568 = vld [vmem:[%s1560 + $0x38] sm:$0xff]
    %v1569 = vld [vmem:[%s1560 + $0x40] sm:$0xff]
    %v1570 = vld [vmem:[%s1560 + $0x48] sm:$0xff]
    %v1571 = vld [vmem:[%s1560 + $0x50] sm:$0xff]
    %v1572 = vld [vmem:[%s1560 + $0x58] sm:$0xff]
    %v1573 = vld [vmem:[%s1560 + $0x60] sm:$0xff]
    %v1574 = vld [vmem:[%s1560 + $0x68] sm:$0xff]
    %v1575 = vld [vmem:[%s1560 + $0x70] sm:$0xff]
    %v1576 = vld [vmem:[%s1560 + $0x78] sm:$0xff]
    %v1577 = vld [vmem:[%s1560 + $0x80] sm:$0xff]
    %v1578 = vld [vmem:[%s1560 + $0x88] sm:$0xff]
    %v1579 = vld [vmem:[%s1560 + $0x90] sm:$0xff]
    %v1580 = vld [vmem:[%s1560 + $0x98] sm:$0xff]
    %v1581 = vld [vmem:[%s1560 + $0xa0] sm:$0xff]
    %v1582 = vld [vmem:[%s1560 + $0xa8] sm:$0xff]
    %v1583 = vld [vmem:[%s1560 + $0xb0] sm:$0xff]
    %v1584 = vld [vmem:[%s1560 + $0xb8] sm:$0xff]
    %v1585 = vld [vmem:[%s1560 + $0xc0] sm:$0xff]
    %v1586 = vld [vmem:[%s1560 + $0xc8] sm:$0xff]
    %v1587 = vld [vmem:[%s1560 + $0xd0] sm:$0xff]
    %v1588 = vld [vmem:[%s1560 + $0xd8] sm:$0xff]
    %v1589 = vld [vmem:[%s1560 + $0xe0] sm:$0xff]
    %v1590 = vld [vmem:[%s1560 + $0xe8] sm:$0xff]
    %v1591 = vld [vmem:[%s1560 + $0xf0] sm:$0xff]
    %v1592 = vld [vmem:[%s1560 + $0xf8] sm:$0xff]
    %v1625 = vunpack.c.l.b16 %v1561
    %v1626 = vunpack.c.h.b16 %v1561
    %v1627 = vunpack.c.l.b16 %v1562
    %v1628 = vunpack.c.h.b16 %v1562
    %v1629 = vunpack.c.l.b16 %v1563
    %v1630 = vunpack.c.h.b16 %v1563
    %v1631 = vunpack.c.l.b16 %v1564
    %v1632 = vunpack.c.h.b16 %v1564
    %v1633 = vunpack.c.l.b16 %v1565
    %v1634 = vunpack.c.h.b16 %v1565
    %v1635 = vunpack.c.l.b16 %v1566
    %v1636 = vunpack.c.h.b16 %v1566
    %v1637 = vunpack.c.l.b16 %v1567
    %v1638 = vunpack.c.h.b16 %v1567
    %v1639 = vunpack.c.l.b16 %v1568
    %v1640 = vunpack.c.h.b16 %v1568
    %v1641 = vunpack.c.l.b16 %v1569
    %v1642 = vunpack.c.h.b16 %v1569
    %v1643 = vunpack.c.l.b16 %v1570
    %v1644 = vunpack.c.h.b16 %v1570
    %v1645 = vunpack.c.l.b16 %v1571
    %v1646 = vunpack.c.h.b16 %v1571
    %v1647 = vunpack.c.l.b16 %v1572
    %v1648 = vunpack.c.h.b16 %v1572
    %v1649 = vunpack.c.l.b16 %v1573
    %v1650 = vunpack.c.h.b16 %v1573
    %v1651 = vunpack.c.l.b16 %v1574
    %v1652 = vunpack.c.h.b16 %v1574
    %v1653 = vunpack.c.l.b16 %v1575
    %v1654 = vunpack.c.h.b16 %v1575
    %v1655 = vunpack.c.l.b16 %v1576
    %v1656 = vunpack.c.h.b16 %v1576
    %v1657 = vunpack.c.l.b16 %v1577
    %v1658 = vunpack.c.h.b16 %v1577
    %v1659 = vunpack.c.l.b16 %v1578
    %v1660 = vunpack.c.h.b16 %v1578
    %v1661 = vunpack.c.l.b16 %v1579
    %v1662 = vunpack.c.h.b16 %v1579
    %v1663 = vunpack.c.l.b16 %v1580
    %v1664 = vunpack.c.h.b16 %v1580
    %v1665 = vunpack.c.l.b16 %v1581
    %v1666 = vunpack.c.h.b16 %v1581
    %v1667 = vunpack.c.l.b16 %v1582
    %v1668 = vunpack.c.h.b16 %v1582
    %v1669 = vunpack.c.l.b16 %v1583
    %v1670 = vunpack.c.h.b16 %v1583
    %v1671 = vunpack.c.l.b16 %v1584
    %v1672 = vunpack.c.h.b16 %v1584
    %v1673 = vunpack.c.l.b16 %v1585
    %v1674 = vunpack.c.h.b16 %v1585
    %v1675 = vunpack.c.l.b16 %v1586
    %v1676 = vunpack.c.h.b16 %v1586
    %v1677 = vunpack.c.l.b16 %v1587
    %v1678 = vunpack.c.h.b16 %v1587
    %v1679 = vunpack.c.l.b16 %v1588
    %v1680 = vunpack.c.h.b16 %v1588
    %v1681 = vunpack.c.l.b16 %v1589
    %v1682 = vunpack.c.h.b16 %v1589
    %v1683 = vunpack.c.l.b16 %v1590
    %v1684 = vunpack.c.h.b16 %v1590
    %v1685 = vunpack.c.l.b16 %v1591
    %v1686 = vunpack.c.h.b16 %v1591
    %v1687 = vunpack.c.l.b16 %v1592
    %v1688 = vunpack.c.h.b16 %v1592
    %v1689 = vpack.c.b16 %v1629, %v1625
    %v1690 = vpack.c.b16 %v1630, %v1626
    %v1691 = vpack.c.b16 %v1631, %v1627
    %v1692 = vpack.c.b16 %v1632, %v1628
    %v1693 = vpack.c.b16 %v1637, %v1633
    %v1694 = vpack.c.b16 %v1638, %v1634
    %v1695 = vpack.c.b16 %v1639, %v1635
    %v1696 = vpack.c.b16 %v1640, %v1636
    %v1697 = vpack.c.b16 %v1645, %v1641
    %v1698 = vpack.c.b16 %v1646, %v1642
    %v1699 = vpack.c.b16 %v1647, %v1643
    %v1700 = vpack.c.b16 %v1648, %v1644
    %v1701 = vpack.c.b16 %v1653, %v1649
    %v1702 = vpack.c.b16 %v1654, %v1650
    %v1703 = vpack.c.b16 %v1655, %v1651
    %v1704 = vpack.c.b16 %v1656, %v1652
    %v1705 = vpack.c.b16 %v1661, %v1657
    %v1706 = vpack.c.b16 %v1662, %v1658
    %v1707 = vpack.c.b16 %v1663, %v1659
    %v1708 = vpack.c.b16 %v1664, %v1660
    %v1709 = vpack.c.b16 %v1669, %v1665
    %v1710 = vpack.c.b16 %v1670, %v1666
    %v1711 = vpack.c.b16 %v1671, %v1667
    %v1712 = vpack.c.b16 %v1672, %v1668
    %v1713 = vpack.c.b16 %v1677, %v1673
    %v1714 = vpack.c.b16 %v1678, %v1674
    %v1715 = vpack.c.b16 %v1679, %v1675
    %v1716 = vpack.c.b16 %v1680, %v1676
    %v1717 = vpack.c.b16 %v1685, %v1681
    %v1718 = vpack.c.b16 %v1686, %v1682
    %v1719 = vpack.c.b16 %v1687, %v1683
    %v1720 = vpack.c.b16 %v1688, %v1684
    %1753 = vmatprep.subr.bf16.mxu0 %v1690
    %1754 = vmatpush1.bf16.msra.mxu0 %v1689
    %1755 = vmatprep.subr.bf16.mxu0 %v1694
    %1756 = vmatpush1.bf16.msra.mxu0 %v1693
    %1757 = vmatprep.subr.bf16.mxu0 %v1698
    %1758 = vmatpush1.bf16.msra.mxu0 %v1697
    %1759 = vmatprep.subr.bf16.mxu0 %v1702
    %1760 = vmatpush1.bf16.msra.mxu0 %v1701
    %1761 = vmatprep.subr.bf16.mxu0 %v1706
    %1762 = vmatpush1.bf16.msra.mxu0 %v1705
    %1763 = vmatprep.subr.bf16.mxu0 %v1710
    %1764 = vmatpush1.bf16.msra.mxu0 %v1709
    %1765 = vmatprep.subr.bf16.mxu0 %v1714
    %1766 = vmatpush1.bf16.msra.mxu0 %v1713
    %1767 = vmatprep.subr.bf16.mxu0 %v1718
    %1768 = vmatpush1.bf16.msra.mxu0 %v1717
    %1769 = vmatprep.subr.bf16.mxu0 0
    %1770 = vmatpush1.bf16.msra.mxu0 0
    %1771 = vmatprep.subr.bf16.mxu0 0
    %1772 = vmatpush1.bf16.msra.mxu0 0
    %1773 = vmatprep.subr.bf16.mxu0 0
    %1774 = vmatpush1.bf16.msra.mxu0 0
    %1775 = vmatprep.subr.bf16.mxu0 0
    %1776 = vmatpush1.bf16.msra.mxu0 0
    %1777 = vmatprep.subr.bf16.mxu0 0
    %1778 = vmatpush1.bf16.msra.mxu0 0
    %1779 = vmatprep.subr.bf16.mxu0 0
    %1780 = vmatpush1.bf16.msra.mxu0 0
    %1781 = vmatprep.subr.bf16.mxu0 0
    %1782 = vmatpush1.bf16.msra.mxu0 0
    %1783 = vmatprep.subr.bf16.mxu0 0
    %1784 = vmatpush1.bf16.msra.mxu0 0
    %1785 = vmatprep.mubr.bf16.mxu0 0
    %1786 = vmatmul.mubr.bf16.gmra.mrb[0].mxu0 %v1555
    %v1787 = vpop.f32.mrb[0].mxu0
    %v1788 = vadd.f32 0.0, %v1787
    %v1789 = vpop.f32.mrb[0].mxu0
    %v1790 = vadd.f32 0.0, %v1789
    %v1791 = vpop.f32.mrb[0].mxu0
    %v1792 = vpop.f32.mrb[0].mxu0
    %1793 = vdwg.mxu0
    %1794 = vmatprep.subr.bf16.mxu0 %v1692
    %1795 = vmatpush1.bf16.msra.mxu0 %v1691
    %1796 = vmatprep.subr.bf16.mxu0 %v1696
    %1797 = vmatpush1.bf16.msra.mxu0 %v1695
    %1798 = vmatprep.subr.bf16.mxu0 %v1700
    %1799 = vmatpush1.bf16.msra.mxu0 %v1699
    %1800 = vmatprep.subr.bf16.mxu0 %v1704
    %1801 = vmatpush1.bf16.msra.mxu0 %v1703
    %1802 = vmatprep.subr.bf16.mxu0 %v1708
    %1803 = vmatpush1.bf16.msra.mxu0 %v1707
    %1804 = vmatprep.subr.bf16.mxu0 %v1712
    %1805 = vmatpush1.bf16.msra.mxu0 %v1711
    %1806 = vmatprep.subr.bf16.mxu0 %v1716
    %1807 = vmatpush1.bf16.msra.mxu0 %v1715
    %1808 = vmatprep.subr.bf16.mxu0 %v1720
    %1809 = vmatpush1.bf16.msra.mxu0 %v1719
    %1810 = vmatprep.subr.bf16.mxu0 0
    %1811 = vmatpush1.bf16.msra.mxu0 0
    %1812 = vmatprep.subr.bf16.mxu0 0
    %1813 = vmatpush1.bf16.msra.mxu0 0
    %1814 = vmatprep.subr.bf16.mxu0 0
    %1815 = vmatpush1.bf16.msra.mxu0 0
    %1816 = vmatprep.subr.bf16.mxu0 0
    %1817 = vmatpush1.bf16.msra.mxu0 0
    %1818 = vmatprep.subr.bf16.mxu0 0
    %1819 = vmatpush1.bf16.msra.mxu0 0
    %1820 = vmatprep.subr.bf16.mxu0 0
    %1821 = vmatpush1.bf16.msra.mxu0 0
    %1822 = vmatprep.subr.bf16.mxu0 0
    %1823 = vmatpush1.bf16.msra.mxu0 0
    %1824 = vmatprep.subr.bf16.mxu0 0
    %1825 = vmatpush1.bf16.msra.mxu0 0
    %1826 = vmatprep.mubr.bf16.mxu0 0
    %1827 = vmatmul.mubr.bf16.gmra.mrb[0].mxu0 %v1555
    %v1828 = vpop.f32.mrb[0].mxu0
    %v1829 = vadd.f32 0.0, %v1828
    %v1830 = vpop.f32.mrb[0].mxu0
    %v1831 = vadd.f32 0.0, %v1830
    %v1832 = vpop.f32.mrb[0].mxu0
    %v1833 = vpop.f32.mrb[0].mxu0
    %1834 = vdwg.mxu0
    %v1835 = vadd.f32 %v1556, %v1788
    %v1836 = vadd.f32 %v1557, %v1790
    %v1837 = vadd.f32 %v1558, %v1829
    %v1838 = vadd.f32 %v1559, %v1831
    %v1839 = vpack.c.bf16 %v1835, %v1835
    %v1840 = vpack.c.bf16 %v1836, %v1836
    %v1841 = vpack.c.bf16 %v1837, %v1837
    %v1842 = vpack.c.bf16 %v1838, %v1838
    %v1843 = vxor.u32 %v1839, 2147516416
    %v1845 = vmul.bf16 %v1843, 1069105081
    %v1846 = vpow.bf16.pop %v1845
    %v1847 = vadd.bf16 %v1846, 1065369472
    %v1848 = vrcp.bf16.pop %v1847
    %v1849 = vmul.bf16 1065369472, %v1848
    %v1850 = vxor.u32 %v1840, 2147516416
    %v1852 = vmul.bf16 %v1850, 1069105081
    %v1853 = vpow.bf16.pop %v1852
    %v1854 = vadd.bf16 %v1853, 1065369472
    %v1855 = vrcp.bf16.pop %v1854
    %v1856 = vmul.bf16 1065369472, %v1855
    %v1857 = vtanh.bf16.pop %v1841
    %v1858 = vxor.u32 %v1842, 2147516416
    %v1860 = vmul.bf16 %v1858, 1069105081
    %v1861 = vpow.bf16.pop %v1860
    %v1862 = vadd.bf16 %v1861, 1065369472
    %v1863 = vrcp.bf16.pop %v1862
    %v1864 = vmul.bf16 1065369472, %v1863
    %v1865 = vunpack.c.l.bf16 %v1856
    %v1866 = vmul.f32 %v1865, %v1551
    %v1867 = vmul.bf16 %v1849, %v1857
    %v1868 = vunpack.c.l.bf16 %v1867
    %v1869 = vadd.f32 %v1866, %v1868
    %v1870 = vunpack.c.l.bf16 %v1864
    %v1871 = vtanh.pop %v1869
    %v1872 = vmul.f32 %v1870, %v1871
    %v1873 = vmax.f32 %v1872, 0.0
    %1874 = vst [vmem:[#allocation10] sm:$0xff] %v1873
    // Predicated region
    $region34: #{tpu_custom_call.1} parent=1 // pred_check
      _
    $region35: #{tpu_custom_call.1} parent=1 // pred_check_branch
      %1876 = sbr.rel (0) target = $region37
    $region36: #{tpu_custom_call.1} parent=1 // pred_region
      %s1878 = ssub.s32 128, 128
      %1879 = vsyncadd [#allocation4], %s1878
      %s1881 = sshll.u32 [#allocation10], 4
      %s1882 = int_to_ptr.vmem [resolvable:$true] %s1881
      %1884 = dma.vmem_to_hbm [thread:$0]  %s1882, 128, %s4, [#allocation4]
    $region37: #{tpu_custom_call.1} parent=1 // pred_fallthru
      _
    // Predicated region
    $region38: #{tpu_custom_call.1} parent=1 // pred_check
      _
    $region39: #{tpu_custom_call.1} parent=1 // pred_check_branch
      %1886 = sbr.rel (0) target = $region41
    $region40: #{tpu_custom_call.1} parent=1 // pred_region
      %1887 = dma.done [#allocation4], 128
    $region41: #{tpu_custom_call.1} parent=1 // pred_fallthru
      _
    %1888 = vsyncpa [#allocation3], 1
    %1889 = vsyncpa [#allocation6], 1
    %1890 = vsyncpa [#allocation9], 1
    %1891 = vsyncpa [#allocation4], 1

</llo_original>
